<compile_context>
chip_gen: v6e
topology: v6e:2x2x1
jax: 0.10.0
libtpu: 0.0.40
codegen_flags: <defaults>
</compile_context>

<pallas_src>
import math

import jax
import jax.numpy as jnp
from jax.experimental import pallas as pl
from jax.experimental.pallas import tpu as pltpu

# Raw PyTorch hidden sizes and their lane-aligned (multiple-of-128) padded sizes.
H1_RAW, H2_RAW, H3_RAW = 2000, 500, 500
H1, H2, H3 = 2048, 512, 512


def _round_up(n, m):
    return ((n + m - 1) // m) * m


def _decoder_kernel(x_ref,
                    w1_ref, b1_ref,
                    w2_ref, b2_ref,
                    w3_ref, b3_ref,
                    w4_ref, b4_ref,
                    o_ref):
    # x tile: (TM, F) f32. Weights: bf16, pre-transposed to (in, out). Biases: f32 (1, out).
    # Matmuls run on the MXU with bf16 operands and f32 accumulation; bias-add / ReLU stay f32.
    x = x_ref[...]

    h = jnp.dot(x.astype(jnp.bfloat16), w1_ref[...],
                preferred_element_type=jnp.float32)
    h = jnp.maximum(h + b1_ref[...], 0.0)

    h = jnp.dot(h.astype(jnp.bfloat16), w2_ref[...],
                preferred_element_type=jnp.float32)
    h = jnp.maximum(h + b2_ref[...], 0.0)

    h = jnp.dot(h.astype(jnp.bfloat16), w3_ref[...],
                preferred_element_type=jnp.float32)
    h = jnp.maximum(h + b3_ref[...], 0.0)

    out = jnp.dot(h.astype(jnp.bfloat16), w4_ref[...],
                  preferred_element_type=jnp.float32) + b4_ref[...]
    o_ref[...] = out.astype(o_ref.dtype)


def decoder_forward(x, params, *, block_m=128):
    """x: (B, feature_dim) float32. params: dict of bf16 weights / f32 biases."""
    B, F = x.shape
    out_dim = params["w4"].shape[1]

    # Batch tile: multiple of 8 sublanes, capped at block_m; pad batch to a tile multiple.
    TM = min(block_m, _round_up(B, 8))
    padded_B = _round_up(B, TM)
    if padded_B != B:
        x = jnp.pad(x, ((0, padded_B - B), (0, 0)))
    grid = (padded_B // TM,)

    def whole(arr):
        # Entire array as a single VMEM-resident block, same block for every batch tile
        # (constant index_map -> DMA'd once, no re-streaming across grid steps).
        return pl.BlockSpec(arr.shape, lambda i: (0, 0))

    flops = 2 * padded_B * (F * H1 + H1 * H2 + H2 * H3 + H3 * out_dim)
    weight_bytes = sum(int(params[k].size) * params[k].dtype.itemsize
                       for k in ("w1", "w2", "w3", "w4", "b1", "b2", "b3", "b4"))
    act_bytes = (padded_B * F + padded_B * out_dim) * 4
    cost = pl.CostEstimate(flops=flops, transcendentals=0,
                           bytes_accessed=weight_bytes + act_bytes)

    out = pl.pallas_call(
        _decoder_kernel,
        out_shape=jax.ShapeDtypeStruct((padded_B, out_dim), jnp.float32),
        grid=grid,
        in_specs=[
            pl.BlockSpec((TM, F), lambda i: (i, 0)),
            whole(params["w1"]), whole(params["b1"]),
            whole(params["w2"]), whole(params["b2"]),
            whole(params["w3"]), whole(params["b3"]),
            whole(params["w4"]), whole(params["b4"]),
        ],
        out_specs=pl.BlockSpec((TM, out_dim), lambda i: (i, 0)),
        compiler_params=pltpu.CompilerParams(
            dimension_semantics=("parallel",),
            vmem_limit_bytes=32 << 20,
        ),
        cost_estimate=cost,
    )(x,
      params["w1"], params["b1"],
      params["w2"], params["b2"],
      params["w3"], params["b3"],
      params["w4"], params["b4"])

    return out[:B]


def init_decoder_params(key, input_dim, feature_dim):
    """nn.Linear-style U(-1/sqrt(fan_in), 1/sqrt(fan_in)) init.

    Weights are stored as (in_features, out_features) == PyTorch W.T, zero-padded to
    lane-aligned hidden sizes (2048/512) and cast to bf16. Biases stay f32, zero-padded,
    shaped (1, out) so they broadcast over the batch tile inside the kernel.
    Zero padding keeps the padded network numerically identical to the raw one
    (padded lanes produce exactly 0 pre-activation -> ReLU -> 0 contribution downstream).
    """
    raw_dims = [(feature_dim, H1_RAW), (H1_RAW, H2_RAW), (H2_RAW, H3_RAW), (H3_RAW, input_dim)]
    pad_dims = [(feature_dim, H1), (H1, H2), (H2, H3), (H3, input_dim)]
    params = {}
    for i, ((fi, fo), (pfi, pfo)) in enumerate(zip(raw_dims, pad_dims), start=1):
        key, kw, kb = jax.random.split(key, 3)
        bound = 1.0 / math.sqrt(fi)
        w = jax.random.uniform(kw, (fi, fo), jnp.float32, minval=-bound, maxval=bound)
        b = jax.random.uniform(kb, (fo,), jnp.float32, minval=-bound, maxval=bound)
        w_pad = jnp.zeros((pfi, pfo), jnp.float32).at[:fi, :fo].set(w)
        b_pad = jnp.zeros((1, pfo), jnp.float32).at[0, :fo].set(b)
        params[f"w{i}"] = w_pad.astype(jnp.bfloat16)   # bf16 weights (halved HBM traffic)
        params[f"b{i}"] = b_pad                        # f32 biases
    return params


def decoder_reference(x, params):
    """Pure-JAX reference with the same bf16-operand / f32-accumulate arithmetic."""
    def layer(h, w, b, relu):
        y = jnp.dot(h.astype(jnp.bfloat16), w, preferred_element_type=jnp.float32) + b
        return jnp.maximum(y, 0.0) if relu else y

    h = layer(x, params["w1"], params["b1"], True)
    h = layer(h, params["w2"], params["b2"], True)
    h = layer(h, params["w3"], params["b3"], True)
    return layer(h, params["w4"], params["b4"], False)


if __name__ == "__main__":
    key = jax.random.PRNGKey(0)

    batch = 2
    feature_dim = 32   # decoder input (latent) size
    input_dim = 16     # decoder output (reconstruction) size

    key, kx, kp = jax.random.split(key, 3)
    x = jax.random.normal(kx, (batch, feature_dim), dtype=jnp.float32)
    params = init_decoder_params(kp, input_dim=input_dim, feature_dim=feature_dim)

    out = decoder_forward(x, params)
    out = jax.block_until_ready(out)

    ref = decoder_reference(x, params)
    assert out.shape == (batch, input_dim), out.shape
    # bf16 matmul operands -> looser tolerance than a pure-f32 check.
    assert jnp.allclose(out, ref, atol=2e-2, rtol=2e-2), \
        f"max abs err = {jnp.max(jnp.abs(out - ref))}"

    print("KERNEL_OK")
</pallas_src>

<mosaic_0001>
module attributes {stable_mosaic.version = 11 : i64} {
  func.func @_decoder_kernel(%arg0: i32, %arg1: memref<8x32xf32, #tpu.memory_space<vmem>>, %arg2: memref<32x2048xbf16, #tpu.memory_space<vmem>>, %arg3: memref<1x2048xf32, #tpu.memory_space<vmem>>, %arg4: memref<2048x512xbf16, #tpu.memory_space<vmem>>, %arg5: memref<1x512xf32, #tpu.memory_space<vmem>>, %arg6: memref<512x512xbf16, #tpu.memory_space<vmem>>, %arg7: memref<1x512xf32, #tpu.memory_space<vmem>>, %arg8: memref<512x16xbf16, #tpu.memory_space<vmem>>, %arg9: memref<1x16xf32, #tpu.memory_space<vmem>>, %arg10: memref<8x16xf32, #tpu.memory_space<vmem>>) attributes {dimension_semantics = [#tpu.dimension_semantics<parallel>], iteration_bounds = array<i64: 1>, scalar_prefetch = 0 : i64, scratch_operands = 0 : i64, tpu.core_type = #tpu.core_type<tc>, window_params = [{transform_indices = @transform_0, window_bounds = array<i64: 8, 32>}, {pipeline_mode = #tpu.pipeline_mode<synchronous>, transform_indices = @transform_1, window_bounds = array<i64: 32, 2048>}, {pipeline_mode = #tpu.pipeline_mode<synchronous>, transform_indices = @transform_2, window_bounds = array<i64: 1, 2048>}, {pipeline_mode = #tpu.pipeline_mode<synchronous>, transform_indices = @transform_3, window_bounds = array<i64: 2048, 512>}, {pipeline_mode = #tpu.pipeline_mode<synchronous>, transform_indices = @transform_4, window_bounds = array<i64: 1, 512>}, {pipeline_mode = #tpu.pipeline_mode<synchronous>, transform_indices = @transform_5, window_bounds = array<i64: 512, 512>}, {pipeline_mode = #tpu.pipeline_mode<synchronous>, transform_indices = @transform_6, window_bounds = array<i64: 1, 512>}, {pipeline_mode = #tpu.pipeline_mode<synchronous>, transform_indices = @transform_7, window_bounds = array<i64: 512, 16>}, {pipeline_mode = #tpu.pipeline_mode<synchronous>, transform_indices = @transform_8, window_bounds = array<i64: 1, 16>}, {transform_indices = @transform_9, window_bounds = array<i64: 8, 16>}]} {
    %c0 = arith.constant 0 : index
    %c0_0 = arith.constant 0 : index
    %0 = vector.load %arg1[%c0, %c0_0] : memref<8x32xf32, #tpu.memory_space<vmem>>, vector<8x32xf32>
    %1 = arith.truncf %0 : vector<8x32xf32> to vector<8x32xbf16>
    %c0_1 = arith.constant 0 : index
    %c0_2 = arith.constant 0 : index
    %2 = vector.load %arg2[%c0_1, %c0_2] : memref<32x2048xbf16, #tpu.memory_space<vmem>>, vector<32x2048xbf16>
    %cst = arith.constant dense<0.000000e+00> : vector<8x2048xf32>
    %3 = tpu.matmul %1, %2, %cst {dimension_numbers = #tpu.dot_dimension_numbers<[1], [0], [0], [1], [0, 0, 1, 1], [], []>} : vector<8x32xbf16>, vector<32x2048xbf16>, vector<8x2048xf32> -> vector<8x2048xf32>
    %c0_3 = arith.constant 0 : index
    %c0_4 = arith.constant 0 : index
    %4 = vector.load %arg3[%c0_3, %c0_4] : memref<1x2048xf32, #tpu.memory_space<vmem>>, vector<1x2048xf32>
    %5 = vector.broadcast %4 : vector<1x2048xf32> to vector<8x2048xf32>
    %6 = arith.addf %3, %5 : vector<8x2048xf32>
    %cst_5 = arith.constant 0.000000e+00 : f32
    %7 = vector.broadcast %cst_5 : f32 to vector<8x2048xf32>
    %8 = arith.maximumf %6, %7 : vector<8x2048xf32>
    %9 = arith.truncf %8 : vector<8x2048xf32> to vector<8x2048xbf16>
    %c0_6 = arith.constant 0 : index
    %c0_7 = arith.constant 0 : index
    %10 = vector.load %arg4[%c0_6, %c0_7] : memref<2048x512xbf16, #tpu.memory_space<vmem>>, vector<2048x512xbf16>
    %cst_8 = arith.constant dense<0.000000e+00> : vector<8x512xf32>
    %11 = tpu.matmul %9, %10, %cst_8 {dimension_numbers = #tpu.dot_dimension_numbers<[1], [0], [0], [1], [0, 0, 1, 1], [], []>} : vector<8x2048xbf16>, vector<2048x512xbf16>, vector<8x512xf32> -> vector<8x512xf32>
    %c0_9 = arith.constant 0 : index
    %c0_10 = arith.constant 0 : index
    %12 = vector.load %arg5[%c0_9, %c0_10] : memref<1x512xf32, #tpu.memory_space<vmem>>, vector<1x512xf32>
    %13 = vector.broadcast %12 : vector<1x512xf32> to vector<8x512xf32>
    %14 = arith.addf %11, %13 : vector<8x512xf32>
    %cst_11 = arith.constant 0.000000e+00 : f32
    %15 = vector.broadcast %cst_11 : f32 to vector<8x512xf32>
    %16 = arith.maximumf %14, %15 : vector<8x512xf32>
    %17 = arith.truncf %16 : vector<8x512xf32> to vector<8x512xbf16>
    %c0_12 = arith.constant 0 : index
    %c0_13 = arith.constant 0 : index
    %18 = vector.load %arg6[%c0_12, %c0_13] : memref<512x512xbf16, #tpu.memory_space<vmem>>, vector<512x512xbf16>
    %cst_14 = arith.constant dense<0.000000e+00> : vector<8x512xf32>
    %19 = tpu.matmul %17, %18, %cst_14 {dimension_numbers = #tpu.dot_dimension_numbers<[1], [0], [0], [1], [0, 0, 1, 1], [], []>} : vector<8x512xbf16>, vector<512x512xbf16>, vector<8x512xf32> -> vector<8x512xf32>
    %c0_15 = arith.constant 0 : index
    %c0_16 = arith.constant 0 : index
    %20 = vector.load %arg7[%c0_15, %c0_16] : memref<1x512xf32, #tpu.memory_space<vmem>>, vector<1x512xf32>
    %21 = vector.broadcast %20 : vector<1x512xf32> to vector<8x512xf32>
    %22 = arith.addf %19, %21 : vector<8x512xf32>
    %cst_17 = arith.constant 0.000000e+00 : f32
    %23 = vector.broadcast %cst_17 : f32 to vector<8x512xf32>
    %24 = arith.maximumf %22, %23 : vector<8x512xf32>
    %25 = arith.truncf %24 : vector<8x512xf32> to vector<8x512xbf16>
    %c0_18 = arith.constant 0 : index
    %c0_19 = arith.constant 0 : index
    %26 = vector.load %arg8[%c0_18, %c0_19] : memref<512x16xbf16, #tpu.memory_space<vmem>>, vector<512x16xbf16>
    %cst_20 = arith.constant dense<0.000000e+00> : vector<8x16xf32>
    %27 = tpu.matmul %25, %26, %cst_20 {dimension_numbers = #tpu.dot_dimension_numbers<[1], [0], [0], [1], [0, 0, 1, 1], [], []>} : vector<8x512xbf16>, vector<512x16xbf16>, vector<8x16xf32> -> vector<8x16xf32>
    %c0_21 = arith.constant 0 : index
    %c0_22 = arith.constant 0 : index
    %28 = vector.load %arg9[%c0_21, %c0_22] : memref<1x16xf32, #tpu.memory_space<vmem>>, vector<1x16xf32>
    %29 = vector.broadcast %28 : vector<1x16xf32> to vector<8x16xf32>
    %30 = arith.addf %27, %29 : vector<8x16xf32>
    %c0_23 = arith.constant 0 : index
    %c0_24 = arith.constant 0 : index
    %31 = vector.load %arg10[%c0_23, %c0_24] : memref<8x16xf32, #tpu.memory_space<vmem>>, vector<8x16xf32>
    tpu.vector_store %arg10[%c0_23, %c0_24], %30 {strides = array<i32>} : memref<8x16xf32, #tpu.memory_space<vmem>>, vector<8x16xf32>,
    return
  }
  func.func @transform_0(%arg0: i32) -> (i32, i32) {
    %c0_i32 = arith.constant 0 : i32
    %c0_i32_0 = arith.constant 0 : i32
    return %arg0, %c0_i32 : i32, i32
  }
  func.func @transform_1(%arg0: i32) -> (i32, i32) {
    %c0_i32 = arith.constant 0 : i32
    %c0_i32_0 = arith.constant 0 : i32
    %c0_i32_1 = arith.constant 0 : i32
    return %c0_i32, %c0_i32_0 : i32, i32
  }
  func.func @transform_2(%arg0: i32) -> (i32, i32) {
    %c0_i32 = arith.constant 0 : i32
    %c0_i32_0 = arith.constant 0 : i32
    %c0_i32_1 = arith.constant 0 : i32
    return %c0_i32, %c0_i32_0 : i32, i32
  }
  func.func @transform_3(%arg0: i32) -> (i32, i32) {
    %c0_i32 = arith.constant 0 : i32
    %c0_i32_0 = arith.constant 0 : i32
    %c0_i32_1 = arith.constant 0 : i32
    return %c0_i32, %c0_i32_0 : i32, i32
  }
  func.func @transform_4(%arg0: i32) -> (i32, i32) {
    %c0_i32 = arith.constant 0 : i32
    %c0_i32_0 = arith.constant 0 : i32
    %c0_i32_1 = arith.constant 0 : i32
    return %c0_i32, %c0_i32_0 : i32, i32
  }
  func.func @transform_5(%arg0: i32) -> (i32, i32) {
    %c0_i32 = arith.constant 0 : i32
    %c0_i32_0 = arith.constant 0 : i32
    %c0_i32_1 = arith.constant 0 : i32
    return %c0_i32, %c0_i32_0 : i32, i32
  }
  func.func @transform_6(%arg0: i32) -> (i32, i32) {
    %c0_i32 = arith.constant 0 : i32
    %c0_i32_0 = arith.constant 0 : i32
    %c0_i32_1 = arith.constant 0 : i32
    return %c0_i32, %c0_i32_0 : i32, i32
  }
  func.func @transform_7(%arg0: i32) -> (i32, i32) {
    %c0_i32 = arith.constant 0 : i32
    %c0_i32_0 = arith.constant 0 : i32
    %c0_i32_1 = arith.constant 0 : i32
    return %c0_i32, %c0_i32_0 : i32, i32
  }
  func.func @transform_8(%arg0: i32) -> (i32, i32) {
    %c0_i32 = arith.constant 0 : i32
    %c0_i32_0 = arith.constant 0 : i32
    %c0_i32_1 = arith.constant 0 : i32
    return %c0_i32, %c0_i32_0 : i32, i32
  }
  func.func @transform_9(%arg0: i32) -> (i32, i32) {
    %c0_i32 = arith.constant 0 : i32
    %c0_i32_0 = arith.constant 0 : i32
    return %arg0, %c0_i32 : i32, i32
  }
}

</mosaic_0001>

<llo_original>
// kernel: tpu_custom_call.1
$region0: #{tpu_custom_call.1}
  #allocation0 [shape = 'u32[]', space=smem, size = 0x4, offset = 0x4, fixed_abs, tag = 'smem constant byte address 0x4 - core index']
  #allocation1 [shape = 'u32[144,128]{1,0:T(1,128)}', space=vmem, size = 0x12000, scoped, tag = 'internal scratch']
  %s0 = inlined_call_operand.hbm [shape: f32[8,32], index: 0, kind: input, shape index: {}]
  %s1 = inlined_call_operand.hbm [shape: bf16[32,2048], index: 1, kind: input, shape index: {}]
  %s2 = inlined_call_operand.hbm [shape: f32[1,2048], index: 2, kind: input, shape index: {}]
  %s3 = inlined_call_operand.hbm [shape: bf16[2048,512], index: 3, kind: input, shape index: {}]
  %s4 = inlined_call_operand.hbm [shape: f32[1,512], index: 4, kind: input, shape index: {}]
  %s5 = inlined_call_operand.hbm [shape: bf16[512,512], index: 5, kind: input, shape index: {}]
  %s6 = inlined_call_operand.hbm [shape: f32[1,512], index: 6, kind: input, shape index: {}]
  %s7 = inlined_call_operand.vmem [shape: bf16[512,16], index: 7, kind: input, shape index: {}]
  %s8 = inlined_call_operand.hbm [shape: f32[1,16], index: 8, kind: input, shape index: {}]
  %s9 = inlined_call_operand.hbm [shape: f32[8,16], index: 9, kind: output, shape index: {}]
  %s10 = sld [smem:[#allocation0]]
  $region78: #{tpu_custom_call.1} parent=0
    _
  %s12 = ssub.s32 1, %s10
  %s13 = scalar_select 0, %s12, %s10
  $region1: #{tpu_custom_call.1} parent=0
    #allocation2 [shape = 'u8[4096]{0}', space=vmem, size = 0x1000, scoped, tag = 'input window, operand 0, single buffered']
    #allocation3 [shape = 's32[1]{0}', space=sflag, size = 0x4, scoped, tag = 'scoped memory for tpu_custom_call.1']
    #allocation4 [shape = 's32[1]{0}', space=sflag, size = 0x4, scoped, tag = 'scoped memory for tpu_custom_call.1']
    #allocation5 [shape = 'u8[131072]{0}', space=vmem, size = 0x20000, scoped, tag = 'input window, operand 1, single buffered']
    #allocation6 [shape = 's32[1]{0}', space=sflag, size = 0x4, scoped, tag = 'scoped memory for tpu_custom_call.1']
    #allocation7 [shape = 'u8[8192]{0}', space=vmem, size = 0x2000, scoped, tag = 'input window, operand 2, single buffered']
    #allocation8 [shape = 'u8[2097152]{0}', space=vmem, size = 0x200000, scoped, tag = 'input window, operand 3, single buffered']
    #allocation9 [shape = 's32[1]{0}', space=sflag, size = 0x4, scoped, tag = 'scoped memory for tpu_custom_call.1']
    #allocation10 [shape = 'u8[2048]{0}', space=vmem, size = 0x800, scoped, tag = 'input window, operand 4, single buffered']
    #allocation11 [shape = 'u8[524288]{0}', space=vmem, size = 0x80000, scoped, tag = 'input window, operand 5, single buffered']
    #allocation12 [shape = 's32[1]{0}', space=sflag, size = 0x4, scoped, tag = 'scoped memory for tpu_custom_call.1']
    #allocation13 [shape = 'u8[2048]{0}', space=vmem, size = 0x800, scoped, tag = 'input window, operand 6, single buffered']
    #allocation14 [shape = 'u8[512]{0}', space=vmem, size = 0x400, scoped, tag = 'input window, operand 8, single buffered']
    #allocation15 [shape = 's32[1]{0}', space=sflag, size = 0x4, scoped, tag = 'scoped memory for tpu_custom_call.1']
    #allocation16 [shape = 'u8[4096]{0}', space=vmem, size = 0x1000, scoped, tag = 'output window, operand 0, single buffered']
    %14 = vsyncpa [#allocation3], 0
    %15 = vsyncpa [#allocation6], 0
    %16 = vsyncpa [#allocation9], 0
    %17 = vsyncpa [#allocation12], 0
    %18 = vsyncpa [#allocation15], 0
    %19 = vsyncpa [#allocation4], 0
    // Predicated region
    $region2: #{tpu_custom_call.1} parent=1 // pred_check
      _
    $region3: #{tpu_custom_call.1} parent=1 // pred_check_branch
      %21 = sbr.rel (0) target = $region5
    $region4: #{tpu_custom_call.1} parent=1 // pred_region
      %s23 = ssub.s32 128, 128
      %24 = vsyncadd [#allocation3], %s23
      %s26 = sshll.u32 [#allocation2], 4
      %s27 = int_to_ptr.vmem [resolvable:$true] %s26
      %29 = dma.hbm_to_vmem [thread:$0]  %s0, 128, %s27, [#allocation3]
    $region5: #{tpu_custom_call.1} parent=1 // pred_fallthru
      _
    // Predicated region
    $region6: #{tpu_custom_call.1} parent=1 // pred_check
      _
    $region7: #{tpu_custom_call.1} parent=1 // pred_check_branch
      %31 = sbr.rel (0) target = $region9
    $region8: #{tpu_custom_call.1} parent=1 // pred_region
      %s33 = ssub.s32 4096, 4096
      %34 = vsyncadd [#allocation6], %s33
      %s35 = sshll.u32 [#allocation5], 4
      %s36 = int_to_ptr.vmem [resolvable:$true] %s35
      %41 = dma.hbm_to_vmem [thread:$0]  %s1, 4096, %s36, [#allocation6], 1024, 1024, 64
    $region9: #{tpu_custom_call.1} parent=1 // pred_fallthru
      _
    // Predicated region
    $region10: #{tpu_custom_call.1} parent=1 // pred_check
      _
    $region11: #{tpu_custom_call.1} parent=1 // pred_check_branch
      %43 = sbr.rel (0) target = $region13
    $region12: #{tpu_custom_call.1} parent=1 // pred_region
      %s45 = ssub.s32 256, 256
      %46 = vsyncadd [#allocation6], %s45
      %s48 = sshll.u32 [#allocation7], 4
      %s49 = int_to_ptr.vmem [resolvable:$true] %s48
      %51 = dma.hbm_to_vmem [thread:$0]  %s2, 256, %s49, [#allocation6]
    $region13: #{tpu_custom_call.1} parent=1 // pred_fallthru
      _
    // Predicated region
    $region14: #{tpu_custom_call.1} parent=1 // pred_check
      _
    $region15: #{tpu_custom_call.1} parent=1 // pred_check_branch
      %53 = sbr.rel (0) target = $region17
    $region16: #{tpu_custom_call.1} parent=1 // pred_region
      %s55 = ssub.s32 65536, 65536
      %56 = vsyncadd [#allocation9], %s55
      %s57 = sshll.u32 [#allocation8], 4
      %s58 = int_to_ptr.vmem [resolvable:$true] %s57
      %63 = dma.hbm_to_vmem [thread:$0]  %s3, 65536, %s58, [#allocation9], 256, 256, 16
    $region17: #{tpu_custom_call.1} parent=1 // pred_fallthru
      _
    // Predicated region
    $region18: #{tpu_custom_call.1} parent=1 // pred_check
      _
    $region19: #{tpu_custom_call.1} parent=1 // pred_check_branch
      %65 = sbr.rel (0) target = $region21
    $region20: #{tpu_custom_call.1} parent=1 // pred_region
      %s67 = ssub.s32 64, 64
      %68 = vsyncadd [#allocation9], %s67
      %s70 = sshll.u32 [#allocation10], 4
      %s71 = int_to_ptr.vmem [resolvable:$true] %s70
      %73 = dma.hbm_to_vmem [thread:$0]  %s4, 64, %s71, [#allocation9]
    $region21: #{tpu_custom_call.1} parent=1 // pred_fallthru
      _
    // Predicated region
    $region22: #{tpu_custom_call.1} parent=1 // pred_check
      _
    $region23: #{tpu_custom_call.1} parent=1 // pred_check_branch
      %75 = sbr.rel (0) target = $region25
    $region24: #{tpu_custom_call.1} parent=1 // pred_region
      %s77 = ssub.s32 16384, 16384
      %78 = vsyncadd [#allocation12], %s77
      %s79 = sshll.u32 [#allocation11], 4
      %s80 = int_to_ptr.vmem [resolvable:$true] %s79
      %85 = dma.hbm_to_vmem [thread:$0]  %s5, 16384, %s80, [#allocation12], 256, 256, 16
    $region25: #{tpu_custom_call.1} parent=1 // pred_fallthru
      _
    // Predicated region
    $region26: #{tpu_custom_call.1} parent=1 // pred_check
      _
    $region27: #{tpu_custom_call.1} parent=1 // pred_check_branch
      %87 = sbr.rel (0) target = $region29
    $region28: #{tpu_custom_call.1} parent=1 // pred_region
      %s89 = ssub.s32 64, 64
      %90 = vsyncadd [#allocation12], %s89
      %s92 = sshll.u32 [#allocation13], 4
      %s93 = int_to_ptr.vmem [resolvable:$true] %s92
      %95 = dma.hbm_to_vmem [thread:$0]  %s6, 64, %s93, [#allocation12]
    $region29: #{tpu_custom_call.1} parent=1 // pred_fallthru
      _
    // Predicated region
    $region30: #{tpu_custom_call.1} parent=1 // pred_check
      _
    $region31: #{tpu_custom_call.1} parent=1 // pred_check_branch
      %97 = sbr.rel (0) target = $region33
    $region32: #{tpu_custom_call.1} parent=1 // pred_region
      _
    $region33: #{tpu_custom_call.1} parent=1 // pred_fallthru
      _
    // Predicated region
    $region34: #{tpu_custom_call.1} parent=1 // pred_check
      _
    $region35: #{tpu_custom_call.1} parent=1 // pred_check_branch
      %99 = sbr.rel (0) target = $region37
    $region36: #{tpu_custom_call.1} parent=1 // pred_region
      %s101 = ssub.s32 16, 16
      %102 = vsyncadd [#allocation15], %s101
      %s104 = sshll.u32 [#allocation14], 4
      %s105 = int_to_ptr.vmem [resolvable:$true] %s104
      %107 = dma.hbm_to_vmem [thread:$0]  %s8, 16, %s105, [#allocation15]
    $region37: #{tpu_custom_call.1} parent=1 // pred_fallthru
      _
    // Predicated region
    $region38: #{tpu_custom_call.1} parent=1 // pred_check
      _
    $region39: #{tpu_custom_call.1} parent=1 // pred_check_branch
      %109 = sbr.rel (0) target = $region41
    $region40: #{tpu_custom_call.1} parent=1 // pred_region
      %110 = dma.done [#allocation3], 128
    $region41: #{tpu_custom_call.1} parent=1 // pred_fallthru
      _
    // Predicated region
    $region42: #{tpu_custom_call.1} parent=1 // pred_check
      _
    $region43: #{tpu_custom_call.1} parent=1 // pred_check_branch
      %112 = sbr.rel (0) target = $region45
    $region44: #{tpu_custom_call.1} parent=1 // pred_region
      %113 = dma.done [#allocation6], 4096
    $region45: #{tpu_custom_call.1} parent=1 // pred_fallthru
      _
    // Predicated region
    $region46: #{tpu_custom_call.1} parent=1 // pred_check
      _
    $region47: #{tpu_custom_call.1} parent=1 // pred_check_branch
      %115 = sbr.rel (0) target = $region49
    $region48: #{tpu_custom_call.1} parent=1 // pred_region
      %116 = dma.done [#allocation6], 256
    $region49: #{tpu_custom_call.1} parent=1 // pred_fallthru
      _
    // Predicated region
    $region50: #{tpu_custom_call.1} parent=1 // pred_check
      _
    $region51: #{tpu_custom_call.1} parent=1 // pred_check_branch
      %118 = sbr.rel (0) target = $region53
    $region52: #{tpu_custom_call.1} parent=1 // pred_region
      %119 = dma.done [#allocation9], 65536
    $region53: #{tpu_custom_call.1} parent=1 // pred_fallthru
      _
    // Predicated region
    $region54: #{tpu_custom_call.1} parent=1 // pred_check
      _
    $region55: #{tpu_custom_call.1} parent=1 // pred_check_branch
      %121 = sbr.rel (0) target = $region57
    $region56: #{tpu_custom_call.1} parent=1 // pred_region
      %122 = dma.done [#allocation9], 64
    $region57: #{tpu_custom_call.1} parent=1 // pred_fallthru
      _
    // Predicated region
    $region58: #{tpu_custom_call.1} parent=1 // pred_check
      _
    $region59: #{tpu_custom_call.1} parent=1 // pred_check_branch
      %124 = sbr.rel (0) target = $region61
    $region60: #{tpu_custom_call.1} parent=1 // pred_region
      %125 = dma.done [#allocation12], 16384
    $region61: #{tpu_custom_call.1} parent=1 // pred_fallthru
      _
    // Predicated region
    $region62: #{tpu_custom_call.1} parent=1 // pred_check
      _
    $region63: #{tpu_custom_call.1} parent=1 // pred_check_branch
      %127 = sbr.rel (0) target = $region65
    $region64: #{tpu_custom_call.1} parent=1 // pred_region
      %128 = dma.done [#allocation12], 64
    $region65: #{tpu_custom_call.1} parent=1 // pred_fallthru
      _
    // Predicated region
    $region66: #{tpu_custom_call.1} parent=1 // pred_check
      _
    $region67: #{tpu_custom_call.1} parent=1 // pred_check_branch
      %130 = sbr.rel (0) target = $region69
    $region68: #{tpu_custom_call.1} parent=1 // pred_region
      %131 = dma.done [#allocation15], 16
    $region69: #{tpu_custom_call.1} parent=1 // pred_fallthru
      _
    %v133 = vld [vmem:[#allocation2] sm:$0xff]
    %v134 = vpack.c.bf16 %v133, %v133
    %v135 = vld [vmem:[#allocation5] sm:$0xff]
    %v136 = vld [vmem:[#allocation5 + $0x8] sm:$0xff]
    %v137 = vld [vmem:[#allocation5 + $0x10] sm:$0xff]
    %v138 = vld [vmem:[#allocation5 + $0x18] sm:$0xff]
    %v139 = vld [vmem:[#allocation5 + $0x20] sm:$0xff]
    %v140 = vld [vmem:[#allocation5 + $0x28] sm:$0xff]
    %v141 = vld [vmem:[#allocation5 + $0x30] sm:$0xff]
    %v142 = vld [vmem:[#allocation5 + $0x38] sm:$0xff]
    %v143 = vld [vmem:[#allocation5 + $0x40] sm:$0xff]
    %v144 = vld [vmem:[#allocation5 + $0x48] sm:$0xff]
    %v145 = vld [vmem:[#allocation5 + $0x50] sm:$0xff]
    %v146 = vld [vmem:[#allocation5 + $0x58] sm:$0xff]
    %v147 = vld [vmem:[#allocation5 + $0x60] sm:$0xff]
    %v148 = vld [vmem:[#allocation5 + $0x68] sm:$0xff]
    %v149 = vld [vmem:[#allocation5 + $0x70] sm:$0xff]
    %v150 = vld [vmem:[#allocation5 + $0x78] sm:$0xff]
    %v151 = vld [vmem:[#allocation5 + $0x80] sm:$0xff]
    %v152 = vld [vmem:[#allocation5 + $0x88] sm:$0xff]
    %v153 = vld [vmem:[#allocation5 + $0x90] sm:$0xff]
    %v154 = vld [vmem:[#allocation5 + $0x98] sm:$0xff]
    %v155 = vld [vmem:[#allocation5 + $0xa0] sm:$0xff]
    %v156 = vld [vmem:[#allocation5 + $0xa8] sm:$0xff]
    %v157 = vld [vmem:[#allocation5 + $0xb0] sm:$0xff]
    %v158 = vld [vmem:[#allocation5 + $0xb8] sm:$0xff]
    %v159 = vld [vmem:[#allocation5 + $0xc0] sm:$0xff]
    %v160 = vld [vmem:[#allocation5 + $0xc8] sm:$0xff]
    %v161 = vld [vmem:[#allocation5 + $0xd0] sm:$0xff]
    %v162 = vld [vmem:[#allocation5 + $0xd8] sm:$0xff]
    %v163 = vld [vmem:[#allocation5 + $0xe0] sm:$0xff]
    %v164 = vld [vmem:[#allocation5 + $0xe8] sm:$0xff]
    %v165 = vld [vmem:[#allocation5 + $0xf0] sm:$0xff]
    %v166 = vld [vmem:[#allocation5 + $0xf8] sm:$0xff]
    %v167 = vld [vmem:[#allocation7] sm:$0xff]
    %v168 = vld [vmem:[#allocation7 + $0x8] sm:$0xff]
    %v171 = vlaneseq
    %v172 = vshrl.u32 %v171, 7
    %v173 = vsub.s32 0, %v172
    %v174 = vrot.slane %v167, %v173
    %v175 = vlaneseq
    %v176 = vshrl.u32 %v175, 7
    %v177 = vsub.s32 1, %v176
    %v178 = vrot.slane %v167, %v177
    %v179 = vlaneseq
    %v180 = vshrl.u32 %v179, 7
    %v181 = vsub.s32 2, %v180
    %v182 = vrot.slane %v167, %v181
    %v183 = vlaneseq
    %v184 = vshrl.u32 %v183, 7
    %v185 = vsub.s32 3, %v184
    %v186 = vrot.slane %v167, %v185
    %v187 = vlaneseq
    %v188 = vshrl.u32 %v187, 7
    %v189 = vsub.s32 4, %v188
    %v190 = vrot.slane %v167, %v189
    %v191 = vlaneseq
    %v192 = vshrl.u32 %v191, 7
    %v193 = vsub.s32 5, %v192
    %v194 = vrot.slane %v167, %v193
    %v195 = vlaneseq
    %v196 = vshrl.u32 %v195, 7
    %v197 = vsub.s32 6, %v196
    %v198 = vrot.slane %v167, %v197
    %v199 = vlaneseq
    %v200 = vshrl.u32 %v199, 7
    %v201 = vsub.s32 7, %v200
    %v202 = vrot.slane %v167, %v201
    %v203 = vlaneseq
    %v204 = vshrl.u32 %v203, 7
    %v205 = vsub.s32 0, %v204
    %v206 = vrot.slane %v168, %v205
    %v207 = vlaneseq
    %v208 = vshrl.u32 %v207, 7
    %v209 = vsub.s32 1, %v208
    %v210 = vrot.slane %v168, %v209
    %v211 = vlaneseq
    %v212 = vshrl.u32 %v211, 7
    %v213 = vsub.s32 2, %v212
    %v214 = vrot.slane %v168, %v213
    %v215 = vlaneseq
    %v216 = vshrl.u32 %v215, 7
    %v217 = vsub.s32 3, %v216
    %v218 = vrot.slane %v168, %v217
    %v219 = vlaneseq
    %v220 = vshrl.u32 %v219, 7
    %v221 = vsub.s32 4, %v220
    %v222 = vrot.slane %v168, %v221
    %v223 = vlaneseq
    %v224 = vshrl.u32 %v223, 7
    %v225 = vsub.s32 5, %v224
    %v226 = vrot.slane %v168, %v225
    %v227 = vlaneseq
    %v228 = vshrl.u32 %v227, 7
    %v229 = vsub.s32 6, %v228
    %v230 = vrot.slane %v168, %v229
    %v231 = vlaneseq
    %v232 = vshrl.u32 %v231, 7
    %v233 = vsub.s32 7, %v232
    %v234 = vrot.slane %v168, %v233
    %v283 = vunpack.c.l.b16 %v135
    %v284 = vunpack.c.h.b16 %v135
    %v285 = vunpack.c.l.b16 %v136
    %v286 = vunpack.c.h.b16 %v136
    %v287 = vunpack.c.l.b16 %v137
    %v288 = vunpack.c.h.b16 %v137
    %v289 = vunpack.c.l.b16 %v138
    %v290 = vunpack.c.h.b16 %v138
    %v291 = vunpack.c.l.b16 %v139
    %v292 = vunpack.c.h.b16 %v139
    %v293 = vunpack.c.l.b16 %v140
    %v294 = vunpack.c.h.b16 %v140
    %v295 = vunpack.c.l.b16 %v141
    %v296 = vunpack.c.h.b16 %v141
    %v297 = vunpack.c.l.b16 %v142
    %v298 = vunpack.c.h.b16 %v142
    %v299 = vunpack.c.l.b16 %v143
    %v300 = vunpack.c.h.b16 %v143
    %v301 = vunpack.c.l.b16 %v144
    %v302 = vunpack.c.h.b16 %v144
    %v303 = vunpack.c.l.b16 %v145
    %v304 = vunpack.c.h.b16 %v145
    %v305 = vunpack.c.l.b16 %v146
    %v306 = vunpack.c.h.b16 %v146
    %v307 = vunpack.c.l.b16 %v147
    %v308 = vunpack.c.h.b16 %v147
    %v309 = vunpack.c.l.b16 %v148
    %v310 = vunpack.c.h.b16 %v148
    %v311 = vunpack.c.l.b16 %v149
    %v312 = vunpack.c.h.b16 %v149
    %v313 = vunpack.c.l.b16 %v150
    %v314 = vunpack.c.h.b16 %v150
    %v315 = vunpack.c.l.b16 %v151
    %v316 = vunpack.c.h.b16 %v151
    %v317 = vunpack.c.l.b16 %v152
    %v318 = vunpack.c.h.b16 %v152
    %v319 = vunpack.c.l.b16 %v153
    %v320 = vunpack.c.h.b16 %v153
    %v321 = vunpack.c.l.b16 %v154
    %v322 = vunpack.c.h.b16 %v154
    %v323 = vunpack.c.l.b16 %v155
    %v324 = vunpack.c.h.b16 %v155
    %v325 = vunpack.c.l.b16 %v156
    %v326 = vunpack.c.h.b16 %v156
    %v327 = vunpack.c.l.b16 %v157
    %v328 = vunpack.c.h.b16 %v157
    %v329 = vunpack.c.l.b16 %v158
    %v330 = vunpack.c.h.b16 %v158
    %v331 = vunpack.c.l.b16 %v159
    %v332 = vunpack.c.h.b16 %v159
    %v333 = vunpack.c.l.b16 %v160
    %v334 = vunpack.c.h.b16 %v160
    %v335 = vunpack.c.l.b16 %v161
    %v336 = vunpack.c.h.b16 %v161
    %v337 = vunpack.c.l.b16 %v162
    %v338 = vunpack.c.h.b16 %v162
    %v339 = vunpack.c.l.b16 %v163
    %v340 = vunpack.c.h.b16 %v163
    %v341 = vunpack.c.l.b16 %v164
    %v342 = vunpack.c.h.b16 %v164
    %v343 = vunpack.c.l.b16 %v165
    %v344 = vunpack.c.h.b16 %v165
    %v345 = vunpack.c.l.b16 %v166
    %v346 = vunpack.c.h.b16 %v166
    %v347 = vpack.c.b16 %v299, %v283
    %v348 = vpack.c.b16 %v300, %v284
    %v349 = vpack.c.b16 %v301, %v285
    %v350 = vpack.c.b16 %v302, %v286
    %v351 = vpack.c.b16 %v303, %v287
    %v352 = vpack.c.b16 %v304, %v288
    %v353 = vpack.c.b16 %v305, %v289
    %v354 = vpack.c.b16 %v306, %v290
    %v355 = vpack.c.b16 %v307, %v291
    %v356 = vpack.c.b16 %v308, %v292
    %v357 = vpack.c.b16 %v309, %v293
    %v358 = vpack.c.b16 %v310, %v294
    %v359 = vpack.c.b16 %v311, %v295
    %v360 = vpack.c.b16 %v312, %v296
    %v361 = vpack.c.b16 %v313, %v297
    %v362 = vpack.c.b16 %v314, %v298
    %v363 = vpack.c.b16 %v331, %v315
    %v364 = vpack.c.b16 %v332, %v316
    %v365 = vpack.c.b16 %v333, %v317
    %v366 = vpack.c.b16 %v334, %v318
    %v367 = vpack.c.b16 %v335, %v319
    %v368 = vpack.c.b16 %v336, %v320
    %v369 = vpack.c.b16 %v337, %v321
    %v370 = vpack.c.b16 %v338, %v322
    %v371 = vpack.c.b16 %v339, %v323
    %v372 = vpack.c.b16 %v340, %v324
    %v373 = vpack.c.b16 %v341, %v325
    %v374 = vpack.c.b16 %v342, %v326
    %v375 = vpack.c.b16 %v343, %v327
    %v376 = vpack.c.b16 %v344, %v328
    %v377 = vpack.c.b16 %v345, %v329
    %v378 = vpack.c.b16 %v346, %v330
    %vm411 = vcmask 261120
    %v413 = vsel %vm411, %v134, 0
    %415 = vmatprep.subr.bf16.mxu0 0
    %416 = vmatpush1.bf16.msra.mxu0 0
    %417 = vmatprep.subr.bf16.mxu0 0
    %418 = vmatpush1.bf16.msra.mxu0 0
    %419 = vmatprep.subr.bf16.mxu0 0
    %420 = vmatpush1.bf16.msra.mxu0 0
    %421 = vmatprep.subr.bf16.mxu0 0
    %422 = vmatpush1.bf16.msra.mxu0 0
    %423 = vmatprep.subr.bf16.mxu0 0
    %424 = vmatpush1.bf16.msra.mxu0 0
    %425 = vmatprep.subr.bf16.mxu0 0
    %426 = vmatpush1.bf16.msra.mxu0 0
    %427 = vmatprep.subr.bf16.mxu0 %v364
    %428 = vmatpush1.bf16.msra.mxu0 %v363
    %429 = vmatprep.subr.bf16.mxu0 %v348
    %430 = vmatpush1.bf16.msra.mxu0 %v347
    %431 = vmatprep.subr.bf16.mxu0 0
    %432 = vmatpush2.bf16.msra.mxu0 0
    %433 = vmatprep.subr.bf16.mxu0 0
    %434 = vmatpush2.bf16.msra.mxu0 0
    %435 = vmatprep.subr.bf16.mxu0 0
    %436 = vmatpush2.bf16.msra.mxu0 0
    %437 = vmatprep.subr.bf16.mxu0 0
    %438 = vmatpush2.bf16.msra.mxu0 0
    %439 = vmatprep.subr.bf16.mxu0 0
    %440 = vmatpush2.bf16.msra.mxu0 0
    %441 = vmatprep.subr.bf16.mxu0 0
    %442 = vmatpush2.bf16.msra.mxu0 0
    %443 = vmatprep.subr.bf16.mxu0 0
    %444 = vmatpush2.bf16.msra.mxu0 0
    %445 = vmatprep.subr.bf16.mxu0 0
    %446 = vmatpush2.bf16.msra.mxu0 0
    %447 = vmatprep.mubr.bf16.mxu0 0
    %448 = vmatmul.mubr.bf16.gmra.mxu0 %v413
    %v449 = vpop.f32.mrf.mxu0
    %v450 = vadd.f32 %v174, %v449
    %v451 = vpop.f32.mrf.mxu0
    %v452 = vadd.f32 %v178, %v451
    %v453 = vpop.f32.mrf.mxu0
    %v454 = vpop.f32.mrf.mxu0
    %455 = vdwg.mxu0
    %456 = vmatprep.subr.bf16.mxu0 0
    %457 = vmatpush1.bf16.msra.mxu0 0
    %458 = vmatprep.subr.bf16.mxu0 0
    %459 = vmatpush1.bf16.msra.mxu0 0
    %460 = vmatprep.subr.bf16.mxu0 0
    %461 = vmatpush1.bf16.msra.mxu0 0
    %462 = vmatprep.subr.bf16.mxu0 0
    %463 = vmatpush1.bf16.msra.mxu0 0
    %464 = vmatprep.subr.bf16.mxu0 0
    %465 = vmatpush1.bf16.msra.mxu0 0
    %466 = vmatprep.subr.bf16.mxu0 0
    %467 = vmatpush1.bf16.msra.mxu0 0
    %468 = vmatprep.subr.bf16.mxu0 %v366
    %469 = vmatpush1.bf16.msra.mxu0 %v365
    %470 = vmatprep.subr.bf16.mxu0 %v350
    %471 = vmatpush1.bf16.msra.mxu0 %v349
    %472 = vmatprep.subr.bf16.mxu0 0
    %473 = vmatpush2.bf16.msra.mxu0 0
    %474 = vmatprep.subr.bf16.mxu0 0
    %475 = vmatpush2.bf16.msra.mxu0 0
    %476 = vmatprep.subr.bf16.mxu0 0
    %477 = vmatpush2.bf16.msra.mxu0 0
    %478 = vmatprep.subr.bf16.mxu0 0
    %479 = vmatpush2.bf16.msra.mxu0 0
    %480 = vmatprep.subr.bf16.mxu0 0
    %481 = vmatpush2.bf16.msra.mxu0 0
    %482 = vmatprep.subr.bf16.mxu0 0
    %483 = vmatpush2.bf16.msra.mxu0 0
    %484 = vmatprep.subr.bf16.mxu0 0
    %485 = vmatpush2.bf16.msra.mxu0 0
    %486 = vmatprep.subr.bf16.mxu0 0
    %487 = vmatpush2.bf16.msra.mxu0 0
    %488 = vmatprep.mubr.bf16.mxu0 0
    %489 = vmatmul.mubr.bf16.gmra.mxu0 %v413
    %v490 = vpop.f32.mrf.mxu0
    %v491 = vadd.f32 %v182, %v490
    %v492 = vpop.f32.mrf.mxu0
    %v493 = vadd.f32 %v186, %v492
    %v494 = vpop.f32.mrf.mxu0
    %v495 = vpop.f32.mrf.mxu0
    %496 = vdwg.mxu0
    %497 = vmatprep.subr.bf16.mxu0 0
    %498 = vmatpush1.bf16.msra.mxu0 0
    %499 = vmatprep.subr.bf16.mxu0 0
    %500 = vmatpush1.bf16.msra.mxu0 0
    %501 = vmatprep.subr.bf16.mxu0 0
    %502 = vmatpush1.bf16.msra.mxu0 0
    %503 = vmatprep.subr.bf16.mxu0 0
    %504 = vmatpush1.bf16.msra.mxu0 0
    %505 = vmatprep.subr.bf16.mxu0 0
    %506 = vmatpush1.bf16.msra.mxu0 0
    %507 = vmatprep.subr.bf16.mxu0 0
    %508 = vmatpush1.bf16.msra.mxu0 0
    %509 = vmatprep.subr.bf16.mxu0 %v368
    %510 = vmatpush1.bf16.msra.mxu0 %v367
    %511 = vmatprep.subr.bf16.mxu0 %v352
    %512 = vmatpush1.bf16.msra.mxu0 %v351
    %513 = vmatprep.subr.bf16.mxu0 0
    %514 = vmatpush2.bf16.msra.mxu0 0
    %515 = vmatprep.subr.bf16.mxu0 0
    %516 = vmatpush2.bf16.msra.mxu0 0
    %517 = vmatprep.subr.bf16.mxu0 0
    %518 = vmatpush2.bf16.msra.mxu0 0
    %519 = vmatprep.subr.bf16.mxu0 0
    %520 = vmatpush2.bf16.msra.mxu0 0
    %521 = vmatprep.subr.bf16.mxu0 0
    %522 = vmatpush2.bf16.msra.mxu0 0
    %523 = vmatprep.subr.bf16.mxu0 0
    %524 = vmatpush2.bf16.msra.mxu0 0
    %525 = vmatprep.subr.bf16.mxu0 0
    %526 = vmatpush2.bf16.msra.mxu0 0
    %527 = vmatprep.subr.bf16.mxu0 0
    %528 = vmatpush2.bf16.msra.mxu0 0
    %529 = vmatprep.mubr.bf16.mxu0 0
    %530 = vmatmul.mubr.bf16.gmra.mxu0 %v413
    %v531 = vpop.f32.mrf.mxu0
    %v532 = vadd.f32 %v190, %v531
    %v533 = vpop.f32.mrf.mxu0
    %v534 = vadd.f32 %v194, %v533
    %v535 = vpop.f32.mrf.mxu0
    %v536 = vpop.f32.mrf.mxu0
    %537 = vdwg.mxu0
    %538 = vmatprep.subr.bf16.mxu0 0
    %539 = vmatpush1.bf16.msra.mxu0 0
    %540 = vmatprep.subr.bf16.mxu0 0
    %541 = vmatpush1.bf16.msra.mxu0 0
    %542 = vmatprep.subr.bf16.mxu0 0
    %543 = vmatpush1.bf16.msra.mxu0 0
    %544 = vmatprep.subr.bf16.mxu0 0
    %545 = vmatpush1.bf16.msra.mxu0 0
    %546 = vmatprep.subr.bf16.mxu0 0
    %547 = vmatpush1.bf16.msra.mxu0 0
    %548 = vmatprep.subr.bf16.mxu0 0
    %549 = vmatpush1.bf16.msra.mxu0 0
    %550 = vmatprep.subr.bf16.mxu0 %v370
    %551 = vmatpush1.bf16.msra.mxu0 %v369
    %552 = vmatprep.subr.bf16.mxu0 %v354
    %553 = vmatpush1.bf16.msra.mxu0 %v353
    %554 = vmatprep.subr.bf16.mxu0 0
    %555 = vmatpush2.bf16.msra.mxu0 0
    %556 = vmatprep.subr.bf16.mxu0 0
    %557 = vmatpush2.bf16.msra.mxu0 0
    %558 = vmatprep.subr.bf16.mxu0 0
    %559 = vmatpush2.bf16.msra.mxu0 0
    %560 = vmatprep.subr.bf16.mxu0 0
    %561 = vmatpush2.bf16.msra.mxu0 0
    %562 = vmatprep.subr.bf16.mxu0 0
    %563 = vmatpush2.bf16.msra.mxu0 0
    %564 = vmatprep.subr.bf16.mxu0 0
    %565 = vmatpush2.bf16.msra.mxu0 0
    %566 = vmatprep.subr.bf16.mxu0 0
    %567 = vmatpush2.bf16.msra.mxu0 0
    %568 = vmatprep.subr.bf16.mxu0 0
    %569 = vmatpush2.bf16.msra.mxu0 0
    %570 = vmatprep.mubr.bf16.mxu0 0
    %571 = vmatmul.mubr.bf16.gmra.mxu0 %v413
    %v572 = vpop.f32.mrf.mxu0
    %v573 = vadd.f32 %v198, %v572
    %v574 = vpop.f32.mrf.mxu0
    %v575 = vadd.f32 %v202, %v574
    %v576 = vpop.f32.mrf.mxu0
    %v577 = vpop.f32.mrf.mxu0
    %578 = vdwg.mxu0
    %579 = vmatprep.subr.bf16.mxu0 0
    %580 = vmatpush1.bf16.msra.mxu0 0
    %581 = vmatprep.subr.bf16.mxu0 0
    %582 = vmatpush1.bf16.msra.mxu0 0
    %583 = vmatprep.subr.bf16.mxu0 0
    %584 = vmatpush1.bf16.msra.mxu0 0
    %585 = vmatprep.subr.bf16.mxu0 0
    %586 = vmatpush1.bf16.msra.mxu0 0
    %587 = vmatprep.subr.bf16.mxu0 0
    %588 = vmatpush1.bf16.msra.mxu0 0
    %589 = vmatprep.subr.bf16.mxu0 0
    %590 = vmatpush1.bf16.msra.mxu0 0
    %591 = vmatprep.subr.bf16.mxu0 %v372
    %592 = vmatpush1.bf16.msra.mxu0 %v371
    %593 = vmatprep.subr.bf16.mxu0 %v356
    %594 = vmatpush1.bf16.msra.mxu0 %v355
    %595 = vmatprep.subr.bf16.mxu0 0
    %596 = vmatpush2.bf16.msra.mxu0 0
    %597 = vmatprep.subr.bf16.mxu0 0
    %598 = vmatpush2.bf16.msra.mxu0 0
    %599 = vmatprep.subr.bf16.mxu0 0
    %600 = vmatpush2.bf16.msra.mxu0 0
    %601 = vmatprep.subr.bf16.mxu0 0
    %602 = vmatpush2.bf16.msra.mxu0 0
    %603 = vmatprep.subr.bf16.mxu0 0
    %604 = vmatpush2.bf16.msra.mxu0 0
    %605 = vmatprep.subr.bf16.mxu0 0
    %606 = vmatpush2.bf16.msra.mxu0 0
    %607 = vmatprep.subr.bf16.mxu0 0
    %608 = vmatpush2.bf16.msra.mxu0 0
    %609 = vmatprep.subr.bf16.mxu0 0
    %610 = vmatpush2.bf16.msra.mxu0 0
    %611 = vmatprep.mubr.bf16.mxu0 0
    %612 = vmatmul.mubr.bf16.gmra.mxu0 %v413
    %v613 = vpop.f32.mrf.mxu0
    %v614 = vadd.f32 %v206, %v613
    %v615 = vpop.f32.mrf.mxu0
    %v616 = vadd.f32 %v210, %v615
    %v617 = vpop.f32.mrf.mxu0
    %v618 = vpop.f32.mrf.mxu0
    %619 = vdwg.mxu0
    %620 = vmatprep.subr.bf16.mxu0 0
    %621 = vmatpush1.bf16.msra.mxu0 0
    %622 = vmatprep.subr.bf16.mxu0 0
    %623 = vmatpush1.bf16.msra.mxu0 0
    %624 = vmatprep.subr.bf16.mxu0 0
    %625 = vmatpush1.bf16.msra.mxu0 0
    %626 = vmatprep.subr.bf16.mxu0 0
    %627 = vmatpush1.bf16.msra.mxu0 0
    %628 = vmatprep.subr.bf16.mxu0 0
    %629 = vmatpush1.bf16.msra.mxu0 0
    %630 = vmatprep.subr.bf16.mxu0 0
    %631 = vmatpush1.bf16.msra.mxu0 0
    %632 = vmatprep.subr.bf16.mxu0 %v374
    %633 = vmatpush1.bf16.msra.mxu0 %v373
    %634 = vmatprep.subr.bf16.mxu0 %v358
    %635 = vmatpush1.bf16.msra.mxu0 %v357
    %636 = vmatprep.subr.bf16.mxu0 0
    %637 = vmatpush2.bf16.msra.mxu0 0
    %638 = vmatprep.subr.bf16.mxu0 0
    %639 = vmatpush2.bf16.msra.mxu0 0
    %640 = vmatprep.subr.bf16.mxu0 0
    %641 = vmatpush2.bf16.msra.mxu0 0
    %642 = vmatprep.subr.bf16.mxu0 0
    %643 = vmatpush2.bf16.msra.mxu0 0
    %644 = vmatprep.subr.bf16.mxu0 0
    %645 = vmatpush2.bf16.msra.mxu0 0
    %646 = vmatprep.subr.bf16.mxu0 0
    %647 = vmatpush2.bf16.msra.mxu0 0
    %648 = vmatprep.subr.bf16.mxu0 0
    %649 = vmatpush2.bf16.msra.mxu0 0
    %650 = vmatprep.subr.bf16.mxu0 0
    %651 = vmatpush2.bf16.msra.mxu0 0
    %652 = vmatprep.mubr.bf16.mxu0 0
    %653 = vmatmul.mubr.bf16.gmra.mxu0 %v413
    %v654 = vpop.f32.mrf.mxu0
    %v655 = vadd.f32 %v214, %v654
    %v656 = vpop.f32.mrf.mxu0
    %v657 = vadd.f32 %v218, %v656
    %v658 = vpop.f32.mrf.mxu0
    %v659 = vpop.f32.mrf.mxu0
    %660 = vdwg.mxu0
    %661 = vmatprep.subr.bf16.mxu0 0
    %662 = vmatpush1.bf16.msra.mxu0 0
    %663 = vmatprep.subr.bf16.mxu0 0
    %664 = vmatpush1.bf16.msra.mxu0 0
    %665 = vmatprep.subr.bf16.mxu0 0
    %666 = vmatpush1.bf16.msra.mxu0 0
    %667 = vmatprep.subr.bf16.mxu0 0
    %668 = vmatpush1.bf16.msra.mxu0 0
    %669 = vmatprep.subr.bf16.mxu0 0
    %670 = vmatpush1.bf16.msra.mxu0 0
    %671 = vmatprep.subr.bf16.mxu0 0
    %672 = vmatpush1.bf16.msra.mxu0 0
    %673 = vmatprep.subr.bf16.mxu0 %v376
    %674 = vmatpush1.bf16.msra.mxu0 %v375
    %675 = vmatprep.subr.bf16.mxu0 %v360
    %676 = vmatpush1.bf16.msra.mxu0 %v359
    %677 = vmatprep.subr.bf16.mxu0 0
    %678 = vmatpush2.bf16.msra.mxu0 0
    %679 = vmatprep.subr.bf16.mxu0 0
    %680 = vmatpush2.bf16.msra.mxu0 0
    %681 = vmatprep.subr.bf16.mxu0 0
    %682 = vmatpush2.bf16.msra.mxu0 0
    %683 = vmatprep.subr.bf16.mxu0 0
    %684 = vmatpush2.bf16.msra.mxu0 0
    %685 = vmatprep.subr.bf16.mxu0 0
    %686 = vmatpush2.bf16.msra.mxu0 0
    %687 = vmatprep.subr.bf16.mxu0 0
    %688 = vmatpush2.bf16.msra.mxu0 0
    %689 = vmatprep.subr.bf16.mxu0 0
    %690 = vmatpush2.bf16.msra.mxu0 0
    %691 = vmatprep.subr.bf16.mxu0 0
    %692 = vmatpush2.bf16.msra.mxu0 0
    %693 = vmatprep.mubr.bf16.mxu0 0
    %694 = vmatmul.mubr.bf16.gmra.mxu0 %v413
    %v695 = vpop.f32.mrf.mxu0
    %v696 = vadd.f32 %v222, %v695
    %v697 = vpop.f32.mrf.mxu0
    %v698 = vadd.f32 %v226, %v697
    %v699 = vpop.f32.mrf.mxu0
    %v700 = vpop.f32.mrf.mxu0
    %701 = vdwg.mxu0
    %702 = vmatprep.subr.bf16.mxu0 0
    %703 = vmatpush1.bf16.msra.mxu0 0
    %704 = vmatprep.subr.bf16.mxu0 0
    %705 = vmatpush1.bf16.msra.mxu0 0
    %706 = vmatprep.subr.bf16.mxu0 0
    %707 = vmatpush1.bf16.msra.mxu0 0
    %708 = vmatprep.subr.bf16.mxu0 0
    %709 = vmatpush1.bf16.msra.mxu0 0
    %710 = vmatprep.subr.bf16.mxu0 0
    %711 = vmatpush1.bf16.msra.mxu0 0
    %712 = vmatprep.subr.bf16.mxu0 0
    %713 = vmatpush1.bf16.msra.mxu0 0
    %714 = vmatprep.subr.bf16.mxu0 %v378
    %715 = vmatpush1.bf16.msra.mxu0 %v377
    %716 = vmatprep.subr.bf16.mxu0 %v362
    %717 = vmatpush1.bf16.msra.mxu0 %v361
    %718 = vmatprep.subr.bf16.mxu0 0
    %719 = vmatpush2.bf16.msra.mxu0 0
    %720 = vmatprep.subr.bf16.mxu0 0
    %721 = vmatpush2.bf16.msra.mxu0 0
    %722 = vmatprep.subr.bf16.mxu0 0
    %723 = vmatpush2.bf16.msra.mxu0 0
    %724 = vmatprep.subr.bf16.mxu0 0
    %725 = vmatpush2.bf16.msra.mxu0 0
    %726 = vmatprep.subr.bf16.mxu0 0
    %727 = vmatpush2.bf16.msra.mxu0 0
    %728 = vmatprep.subr.bf16.mxu0 0
    %729 = vmatpush2.bf16.msra.mxu0 0
    %730 = vmatprep.subr.bf16.mxu0 0
    %731 = vmatpush2.bf16.msra.mxu0 0
    %732 = vmatprep.subr.bf16.mxu0 0
    %733 = vmatpush2.bf16.msra.mxu0 0
    %734 = vmatprep.mubr.bf16.mxu0 0
    %735 = vmatmul.mubr.bf16.gmra.mxu0 %v413
    %v736 = vpop.f32.mrf.mxu0
    %v737 = vadd.f32 %v230, %v736
    %v738 = vpop.f32.mrf.mxu0
    %v739 = vadd.f32 %v234, %v738
    %v740 = vpop.f32.mrf.mxu0
    %v741 = vpop.f32.mrf.mxu0
    %742 = vdwg.mxu0
    %v743 = vmax.f32 %v450, 0.0
    %v744 = vmax.f32 %v452, 0.0
    %v745 = vmax.f32 %v491, 0.0
    %v746 = vmax.f32 %v493, 0.0
    %v747 = vmax.f32 %v532, 0.0
    %v748 = vmax.f32 %v534, 0.0
    %v749 = vmax.f32 %v573, 0.0
    %v750 = vmax.f32 %v575, 0.0
    %v751 = vmax.f32 %v614, 0.0
    %v752 = vmax.f32 %v616, 0.0
    %v753 = vmax.f32 %v655, 0.0
    %v754 = vmax.f32 %v657, 0.0
    %v755 = vmax.f32 %v696, 0.0
    %v756 = vmax.f32 %v698, 0.0
    %v757 = vmax.f32 %v737, 0.0
    %v758 = vmax.f32 %v739, 0.0
    %v759 = vpack.c.bf16 %v743, %v743
    %v760 = vpack.c.bf16 %v744, %v744
    %v761 = vpack.c.bf16 %v745, %v745
    %v762 = vpack.c.bf16 %v746, %v746
    %v763 = vpack.c.bf16 %v747, %v747
    %v764 = vpack.c.bf16 %v748, %v748
    %v765 = vpack.c.bf16 %v749, %v749
    %v766 = vpack.c.bf16 %v750, %v750
    %v767 = vpack.c.bf16 %v751, %v751
    %v768 = vpack.c.bf16 %v752, %v752
    %v769 = vpack.c.bf16 %v753, %v753
    %v770 = vpack.c.bf16 %v754, %v754
    %v771 = vpack.c.bf16 %v755, %v755
    %v772 = vpack.c.bf16 %v756, %v756
    %v773 = vpack.c.bf16 %v757, %v757
    %v774 = vpack.c.bf16 %v758, %v758
    %v775 = vld [vmem:[#allocation8] sm:$0xff]
    %v776 = vld [vmem:[#allocation8 + $0x8] sm:$0xff]
    %v777 = vld [vmem:[#allocation8 + $0x10] sm:$0xff]
    %v778 = vld [vmem:[#allocation8 + $0x18] sm:$0xff]
    %v779 = vld [vmem:[#allocation8 + $0x20] sm:$0xff]
    %v780 = vld [vmem:[#allocation8 + $0x28] sm:$0xff]
    %v781 = vld [vmem:[#allocation8 + $0x30] sm:$0xff]
    %v782 = vld [vmem:[#allocation8 + $0x38] sm:$0xff]
    %v783 = vld [vmem:[#allocation8 + $0x40] sm:$0xff]
    %v784 = vld [vmem:[#allocation8 + $0x48] sm:$0xff]
    %v785 = vld [vmem:[#allocation8 + $0x50] sm:$0xff]
    %v786 = vld [vmem:[#allocation8 + $0x58] sm:$0xff]
    %v787 = vld [vmem:[#allocation8 + $0x60] sm:$0xff]
    %v788 = vld [vmem:[#allocation8 + $0x68] sm:$0xff]
    %v789 = vld [vmem:[#allocation8 + $0x70] sm:$0xff]
    %v790 = vld [vmem:[#allocation8 + $0x78] sm:$0xff]
    %v791 = vld [vmem:[#allocation8 + $0x80] sm:$0xff]
    %v792 = vld [vmem:[#allocation8 + $0x88] sm:$0xff]
    %v793 = vld [vmem:[#allocation8 + $0x90] sm:$0xff]
    %v794 = vld [vmem:[#allocation8 + $0x98] sm:$0xff]
    %v795 = vld [vmem:[#allocation8 + $0xa0] sm:$0xff]
    %v796 = vld [vmem:[#allocation8 + $0xa8] sm:$0xff]
    %v797 = vld [vmem:[#allocation8 + $0xb0] sm:$0xff]
    %v798 = vld [vmem:[#allocation8 + $0xb8] sm:$0xff]
    %v799 = vld [vmem:[#allocation8 + $0xc0] sm:$0xff]
    %v800 = vld [vmem:[#allocation8 + $0xc8] sm:$0xff]
    %v801 = vld [vmem:[#allocation8 + $0xd0] sm:$0xff]
    %v802 = vld [vmem:[#allocation8 + $0xd8] sm:$0xff]
    %v803 = vld [vmem:[#allocation8 + $0xe0] sm:$0xff]
    %v804 = vld [vmem:[#allocation8 + $0xe8] sm:$0xff]
    %v805 = vld [vmem:[#allocation8 + $0xf0] sm:$0xff]
    %v806 = vld [vmem:[#allocation8 + $0xf8] sm:$0xff]
    %v807 = vld [vmem:[#allocation8 + $0x100] sm:$0xff]
    %v808 = vld [vmem:[#allocation8 + $0x108] sm:$0xff]
    %v809 = vld [vmem:[#allocation8 + $0x110] sm:$0xff]
    %v810 = vld [vmem:[#allocation8 + $0x118] sm:$0xff]
    %v811 = vld [vmem:[#allocation8 + $0x120] sm:$0xff]
    %v812 = vld [vmem:[#allocation8 + $0x128] sm:$0xff]
    %v813 = vld [vmem:[#allocation8 + $0x130] sm:$0xff]
    %v814 = vld [vmem:[#allocation8 + $0x138] sm:$0xff]
    %v815 = vld [vmem:[#allocation8 + $0x140] sm:$0xff]
    %v816 = vld [vmem:[#allocation8 + $0x148] sm:$0xff]
    %v817 = vld [vmem:[#allocation8 + $0x150] sm:$0xff]
    %v818 = vld [vmem:[#allocation8 + $0x158] sm:$0xff]
    %v819 = vld [vmem:[#allocation8 + $0x160] sm:$0xff]
    %v820 = vld [vmem:[#allocation8 + $0x168] sm:$0xff]
    %v821 = vld [vmem:[#allocation8 + $0x170] sm:$0xff]
    %v822 = vld [vmem:[#allocation8 + $0x178] sm:$0xff]
    %v823 = vld [vmem:[#allocation8 + $0x180] sm:$0xff]
    %v824 = vld [vmem:[#allocation8 + $0x188] sm:$0xff]
    %v825 = vld [vmem:[#allocation8 + $0x190] sm:$0xff]
    %v826 = vld [vmem:[#allocation8 + $0x198] sm:$0xff]
    %v827 = vld [vmem:[#allocation8 + $0x1a0] sm:$0xff]
    %v828 = vld [vmem:[#allocation8 + $0x1a8] sm:$0xff]
    %v829 = vld [vmem:[#allocation8 + $0x1b0] sm:$0xff]
    %v830 = vld [vmem:[#allocation8 + $0x1b8] sm:$0xff]
    %v831 = vld [vmem:[#allocation8 + $0x1c0] sm:$0xff]
    %v832 = vld [vmem:[#allocation8 + $0x1c8] sm:$0xff]
    %v833 = vld [vmem:[#allocation8 + $0x1d0] sm:$0xff]
    %v834 = vld [vmem:[#allocation8 + $0x1d8] sm:$0xff]
    %v835 = vld [vmem:[#allocation8 + $0x1e0] sm:$0xff]
    %v836 = vld [vmem:[#allocation8 + $0x1e8] sm:$0xff]
    %v837 = vld [vmem:[#allocation8 + $0x1f0] sm:$0xff]
    %v838 = vld [vmem:[#allocation8 + $0x1f8] sm:$0xff]
    %v839 = vld [vmem:[#allocation8 + $0x200] sm:$0xff]
    %v840 = vld [vmem:[#allocation8 + $0x208] sm:$0xff]
    %v841 = vld [vmem:[#allocation8 + $0x210] sm:$0xff]
    %v842 = vld [vmem:[#allocation8 + $0x218] sm:$0xff]
    %v843 = vld [vmem:[#allocation8 + $0x220] sm:$0xff]
    %v844 = vld [vmem:[#allocation8 + $0x228] sm:$0xff]
    %v845 = vld [vmem:[#allocation8 + $0x230] sm:$0xff]
    %v846 = vld [vmem:[#allocation8 + $0x238] sm:$0xff]
    %v847 = vld [vmem:[#allocation8 + $0x240] sm:$0xff]
    %v848 = vld [vmem:[#allocation8 + $0x248] sm:$0xff]
    %v849 = vld [vmem:[#allocation8 + $0x250] sm:$0xff]
    %v850 = vld [vmem:[#allocation8 + $0x258] sm:$0xff]
    %v851 = vld [vmem:[#allocation8 + $0x260] sm:$0xff]
    %v852 = vld [vmem:[#allocation8 + $0x268] sm:$0xff]
    %v853 = vld [vmem:[#allocation8 + $0x270] sm:$0xff]
    %v854 = vld [vmem:[#allocation8 + $0x278] sm:$0xff]
    %v855 = vld [vmem:[#allocation8 + $0x280] sm:$0xff]
    %v856 = vld [vmem:[#allocation8 + $0x288] sm:$0xff]
    %v857 = vld [vmem:[#allocation8 + $0x290] sm:$0xff]
    %v858 = vld [vmem:[#allocation8 + $0x298] sm:$0xff]
    %v859 = vld [vmem:[#allocation8 + $0x2a0] sm:$0xff]
    %v860 = vld [vmem:[#allocation8 + $0x2a8] sm:$0xff]
    %v861 = vld [vmem:[#allocation8 + $0x2b0] sm:$0xff]
    %v862 = vld [vmem:[#allocation8 + $0x2b8] sm:$0xff]
    %v863 = vld [vmem:[#allocation8 + $0x2c0] sm:$0xff]
    %v864 = vld [vmem:[#allocation8 + $0x2c8] sm:$0xff]
    %v865 = vld [vmem:[#allocation8 + $0x2d0] sm:$0xff]
    %v866 = vld [vmem:[#allocation8 + $0x2d8] sm:$0xff]
    %v867 = vld [vmem:[#allocation8 + $0x2e0] sm:$0xff]
    %v868 = vld [vmem:[#allocation8 + $0x2e8] sm:$0xff]
    %v869 = vld [vmem:[#allocation8 + $0x2f0] sm:$0xff]
    %v870 = vld [vmem:[#allocation8 + $0x2f8] sm:$0xff]
    %v871 = vld [vmem:[#allocation8 + $0x300] sm:$0xff]
    %v872 = vld [vmem:[#allocation8 + $0x308] sm:$0xff]
    %v873 = vld [vmem:[#allocation8 + $0x310] sm:$0xff]
    %v874 = vld [vmem:[#allocation8 + $0x318] sm:$0xff]
    %v875 = vld [vmem:[#allocation8 + $0x320] sm:$0xff]
    %v876 = vld [vmem:[#allocation8 + $0x328] sm:$0xff]
    %v877 = vld [vmem:[#allocation8 + $0x330] sm:$0xff]
    %v878 = vld [vmem:[#allocation8 + $0x338] sm:$0xff]
    %v879 = vld [vmem:[#allocation8 + $0x340] sm:$0xff]
    %v880 = vld [vmem:[#allocation8 + $0x348] sm:$0xff]
    %v881 = vld [vmem:[#allocation8 + $0x350] sm:$0xff]
    %v882 = vld [vmem:[#allocation8 + $0x358] sm:$0xff]
    %v883 = vld [vmem:[#allocation8 + $0x360] sm:$0xff]
    %v884 = vld [vmem:[#allocation8 + $0x368] sm:$0xff]
    %v885 = vld [vmem:[#allocation8 + $0x370] sm:$0xff]
    %v886 = vld [vmem:[#allocation8 + $0x378] sm:$0xff]
    %v887 = vld [vmem:[#allocation8 + $0x380] sm:$0xff]
    %v888 = vld [vmem:[#allocation8 + $0x388] sm:$0xff]
    %v889 = vld [vmem:[#allocation8 + $0x390] sm:$0xff]
    %v890 = vld [vmem:[#allocation8 + $0x398] sm:$0xff]
    %v891 = vld [vmem:[#allocation8 + $0x3a0] sm:$0xff]
    %v892 = vld [vmem:[#allocation8 + $0x3a8] sm:$0xff]
    %v893 = vld [vmem:[#allocation8 + $0x3b0] sm:$0xff]
    %v894 = vld [vmem:[#allocation8 + $0x3b8] sm:$0xff]
    %v895 = vld [vmem:[#allocation8 + $0x3c0] sm:$0xff]
    %v896 = vld [vmem:[#allocation8 + $0x3c8] sm:$0xff]
    %v897 = vld [vmem:[#allocation8 + $0x3d0] sm:$0xff]
    %v898 = vld [vmem:[#allocation8 + $0x3d8] sm:$0xff]
    %v899 = vld [vmem:[#allocation8 + $0x3e0] sm:$0xff]
    %v900 = vld [vmem:[#allocation8 + $0x3e8] sm:$0xff]
    %v901 = vld [vmem:[#allocation8 + $0x3f0] sm:$0xff]
    %v902 = vld [vmem:[#allocation8 + $0x3f8] sm:$0xff]
    %v903 = vld [vmem:[#allocation8 + $0x400] sm:$0xff]
    %v904 = vld [vmem:[#allocation8 + $0x408] sm:$0xff]
    %v905 = vld [vmem:[#allocation8 + $0x410] sm:$0xff]
    %v906 = vld [vmem:[#allocation8 + $0x418] sm:$0xff]
    %v907 = vld [vmem:[#allocation8 + $0x420] sm:$0xff]
    %v908 = vld [vmem:[#allocation8 + $0x428] sm:$0xff]
    %v909 = vld [vmem:[#allocation8 + $0x430] sm:$0xff]
    %v910 = vld [vmem:[#allocation8 + $0x438] sm:$0xff]
    %v911 = vld [vmem:[#allocation8 + $0x440] sm:$0xff]
    %v912 = vld [vmem:[#allocation8 + $0x448] sm:$0xff]
    %v913 = vld [vmem:[#allocation8 + $0x450] sm:$0xff]
    %v914 = vld [vmem:[#allocation8 + $0x458] sm:$0xff]
    %v915 = vld [vmem:[#allocation8 + $0x460] sm:$0xff]
    %v916 = vld [vmem:[#allocation8 + $0x468] sm:$0xff]
    %v917 = vld [vmem:[#allocation8 + $0x470] sm:$0xff]
    %v918 = vld [vmem:[#allocation8 + $0x478] sm:$0xff]
    %v919 = vld [vmem:[#allocation8 + $0x480] sm:$0xff]
    %v920 = vld [vmem:[#allocation8 + $0x488] sm:$0xff]
    %v921 = vld [vmem:[#allocation8 + $0x490] sm:$0xff]
    %v922 = vld [vmem:[#allocation8 + $0x498] sm:$0xff]
    %v923 = vld [vmem:[#allocation8 + $0x4a0] sm:$0xff]
    %v924 = vld [vmem:[#allocation8 + $0x4a8] sm:$0xff]
    %v925 = vld [vmem:[#allocation8 + $0x4b0] sm:$0xff]
    %v926 = vld [vmem:[#allocation8 + $0x4b8] sm:$0xff]
    %v927 = vld [vmem:[#allocation8 + $0x4c0] sm:$0xff]
    %v928 = vld [vmem:[#allocation8 + $0x4c8] sm:$0xff]
    %v929 = vld [vmem:[#allocation8 + $0x4d0] sm:$0xff]
    %v930 = vld [vmem:[#allocation8 + $0x4d8] sm:$0xff]
    %v931 = vld [vmem:[#allocation8 + $0x4e0] sm:$0xff]
    %v932 = vld [vmem:[#allocation8 + $0x4e8] sm:$0xff]
    %v933 = vld [vmem:[#allocation8 + $0x4f0] sm:$0xff]
    %v934 = vld [vmem:[#allocation8 + $0x4f8] sm:$0xff]
    %v935 = vld [vmem:[#allocation8 + $0x500] sm:$0xff]
    %v936 = vld [vmem:[#allocation8 + $0x508] sm:$0xff]
    %v937 = vld [vmem:[#allocation8 + $0x510] sm:$0xff]
    %v938 = vld [vmem:[#allocation8 + $0x518] sm:$0xff]
    %v939 = vld [vmem:[#allocation8 + $0x520] sm:$0xff]
    %v940 = vld [vmem:[#allocation8 + $0x528] sm:$0xff]
    %v941 = vld [vmem:[#allocation8 + $0x530] sm:$0xff]
    %v942 = vld [vmem:[#allocation8 + $0x538] sm:$0xff]
    %v943 = vld [vmem:[#allocation8 + $0x540] sm:$0xff]
    %v944 = vld [vmem:[#allocation8 + $0x548] sm:$0xff]
    %v945 = vld [vmem:[#allocation8 + $0x550] sm:$0xff]
    %v946 = vld [vmem:[#allocation8 + $0x558] sm:$0xff]
    %v947 = vld [vmem:[#allocation8 + $0x560] sm:$0xff]
    %v948 = vld [vmem:[#allocation8 + $0x568] sm:$0xff]
    %v949 = vld [vmem:[#allocation8 + $0x570] sm:$0xff]
    %v950 = vld [vmem:[#allocation8 + $0x578] sm:$0xff]
    %v951 = vld [vmem:[#allocation8 + $0x580] sm:$0xff]
    %v952 = vld [vmem:[#allocation8 + $0x588] sm:$0xff]
    %v953 = vld [vmem:[#allocation8 + $0x590] sm:$0xff]
    %v954 = vld [vmem:[#allocation8 + $0x598] sm:$0xff]
    %v955 = vld [vmem:[#allocation8 + $0x5a0] sm:$0xff]
    %v956 = vld [vmem:[#allocation8 + $0x5a8] sm:$0xff]
    %v957 = vld [vmem:[#allocation8 + $0x5b0] sm:$0xff]
    %v958 = vld [vmem:[#allocation8 + $0x5b8] sm:$0xff]
    %v959 = vld [vmem:[#allocation8 + $0x5c0] sm:$0xff]
    %v960 = vld [vmem:[#allocation8 + $0x5c8] sm:$0xff]
    %v961 = vld [vmem:[#allocation8 + $0x5d0] sm:$0xff]
    %v962 = vld [vmem:[#allocation8 + $0x5d8] sm:$0xff]
    %v963 = vld [vmem:[#allocation8 + $0x5e0] sm:$0xff]
    %v964 = vld [vmem:[#allocation8 + $0x5e8] sm:$0xff]
    %v965 = vld [vmem:[#allocation8 + $0x5f0] sm:$0xff]
    %v966 = vld [vmem:[#allocation8 + $0x5f8] sm:$0xff]
    %v967 = vld [vmem:[#allocation8 + $0x600] sm:$0xff]
    %v968 = vld [vmem:[#allocation8 + $0x608] sm:$0xff]
    %v969 = vld [vmem:[#allocation8 + $0x610] sm:$0xff]
    %v970 = vld [vmem:[#allocation8 + $0x618] sm:$0xff]
    %v971 = vld [vmem:[#allocation8 + $0x620] sm:$0xff]
    %v972 = vld [vmem:[#allocation8 + $0x628] sm:$0xff]
    %v973 = vld [vmem:[#allocation8 + $0x630] sm:$0xff]
    %v974 = vld [vmem:[#allocation8 + $0x638] sm:$0xff]
    %v975 = vld [vmem:[#allocation8 + $0x640] sm:$0xff]
    %v976 = vld [vmem:[#allocation8 + $0x648] sm:$0xff]
    %v977 = vld [vmem:[#allocation8 + $0x650] sm:$0xff]
    %v978 = vld [vmem:[#allocation8 + $0x658] sm:$0xff]
    %v979 = vld [vmem:[#allocation8 + $0x660] sm:$0xff]
    %v980 = vld [vmem:[#allocation8 + $0x668] sm:$0xff]
    %v981 = vld [vmem:[#allocation8 + $0x670] sm:$0xff]
    %v982 = vld [vmem:[#allocation8 + $0x678] sm:$0xff]
    %v983 = vld [vmem:[#allocation8 + $0x680] sm:$0xff]
    %v984 = vld [vmem:[#allocation8 + $0x688] sm:$0xff]
    %v985 = vld [vmem:[#allocation8 + $0x690] sm:$0xff]
    %v986 = vld [vmem:[#allocation8 + $0x698] sm:$0xff]
    %v987 = vld [vmem:[#allocation8 + $0x6a0] sm:$0xff]
    %v988 = vld [vmem:[#allocation8 + $0x6a8] sm:$0xff]
    %v989 = vld [vmem:[#allocation8 + $0x6b0] sm:$0xff]
    %v990 = vld [vmem:[#allocation8 + $0x6b8] sm:$0xff]
    %v991 = vld [vmem:[#allocation8 + $0x6c0] sm:$0xff]
    %v992 = vld [vmem:[#allocation8 + $0x6c8] sm:$0xff]
    %v993 = vld [vmem:[#allocation8 + $0x6d0] sm:$0xff]
    %v994 = vld [vmem:[#allocation8 + $0x6d8] sm:$0xff]
    %v995 = vld [vmem:[#allocation8 + $0x6e0] sm:$0xff]
    %v996 = vld [vmem:[#allocation8 + $0x6e8] sm:$0xff]
    %v997 = vld [vmem:[#allocation8 + $0x6f0] sm:$0xff]
    %v998 = vld [vmem:[#allocation8 + $0x6f8] sm:$0xff]
    %v999 = vld [vmem:[#allocation8 + $0x700] sm:$0xff]
    %v1000 = vld [vmem:[#allocation8 + $0x708] sm:$0xff]
    %v1001 = vld [vmem:[#allocation8 + $0x710] sm:$0xff]
    %v1002 = vld [vmem:[#allocation8 + $0x718] sm:$0xff]
    %v1003 = vld [vmem:[#allocation8 + $0x720] sm:$0xff]
    %v1004 = vld [vmem:[#allocation8 + $0x728] sm:$0xff]
    %v1005 = vld [vmem:[#allocation8 + $0x730] sm:$0xff]
    %v1006 = vld [vmem:[#allocation8 + $0x738] sm:$0xff]
    %v1007 = vld [vmem:[#allocation8 + $0x740] sm:$0xff]
    %v1008 = vld [vmem:[#allocation8 + $0x748] sm:$0xff]
    %v1009 = vld [vmem:[#allocation8 + $0x750] sm:$0xff]
    %v1010 = vld [vmem:[#allocation8 + $0x758] sm:$0xff]
    %v1011 = vld [vmem:[#allocation8 + $0x760] sm:$0xff]
    %v1012 = vld [vmem:[#allocation8 + $0x768] sm:$0xff]
    %v1013 = vld [vmem:[#allocation8 + $0x770] sm:$0xff]
    %v1014 = vld [vmem:[#allocation8 + $0x778] sm:$0xff]
    %v1015 = vld [vmem:[#allocation8 + $0x780] sm:$0xff]
    %v1016 = vld [vmem:[#allocation8 + $0x788] sm:$0xff]
    %v1017 = vld [vmem:[#allocation8 + $0x790] sm:$0xff]
    %v1018 = vld [vmem:[#allocation8 + $0x798] sm:$0xff]
    %v1019 = vld [vmem:[#allocation8 + $0x7a0] sm:$0xff]
    %v1020 = vld [vmem:[#allocation8 + $0x7a8] sm:$0xff]
    %v1021 = vld [vmem:[#allocation8 + $0x7b0] sm:$0xff]
    %v1022 = vld [vmem:[#allocation8 + $0x7b8] sm:$0xff]
    %v1023 = vld [vmem:[#allocation8 + $0x7c0] sm:$0xff]
    %v1024 = vld [vmem:[#allocation8 + $0x7c8] sm:$0xff]
    %v1025 = vld [vmem:[#allocation8 + $0x7d0] sm:$0xff]
    %v1026 = vld [vmem:[#allocation8 + $0x7d8] sm:$0xff]
    %v1027 = vld [vmem:[#allocation8 + $0x7e0] sm:$0xff]
    %v1028 = vld [vmem:[#allocation8 + $0x7e8] sm:$0xff]
    %v1029 = vld [vmem:[#allocation8 + $0x7f0] sm:$0xff]
    %v1030 = vld [vmem:[#allocation8 + $0x7f8] sm:$0xff]
    %v1031 = vld [vmem:[#allocation8 + $0x800] sm:$0xff]
    %v1032 = vld [vmem:[#allocation8 + $0x808] sm:$0xff]
    %v1033 = vld [vmem:[#allocation8 + $0x810] sm:$0xff]
    %v1034 = vld [vmem:[#allocation8 + $0x818] sm:$0xff]
    %v1035 = vld [vmem:[#allocation8 + $0x820] sm:$0xff]
    %v1036 = vld [vmem:[#allocation8 + $0x828] sm:$0xff]
    %v1037 = vld [vmem:[#allocation8 + $0x830] sm:$0xff]
    %v1038 = vld [vmem:[#allocation8 + $0x838] sm:$0xff]
    %v1039 = vld [vmem:[#allocation8 + $0x840] sm:$0xff]
    %v1040 = vld [vmem:[#allocation8 + $0x848] sm:$0xff]
    %v1041 = vld [vmem:[#allocation8 + $0x850] sm:$0xff]
    %v1042 = vld [vmem:[#allocation8 + $0x858] sm:$0xff]
    %v1043 = vld [vmem:[#allocation8 + $0x860] sm:$0xff]
    %v1044 = vld [vmem:[#allocation8 + $0x868] sm:$0xff]
    %v1045 = vld [vmem:[#allocation8 + $0x870] sm:$0xff]
    %v1046 = vld [vmem:[#allocation8 + $0x878] sm:$0xff]
    %v1047 = vld [vmem:[#allocation8 + $0x880] sm:$0xff]
    %v1048 = vld [vmem:[#allocation8 + $0x888] sm:$0xff]
    %v1049 = vld [vmem:[#allocation8 + $0x890] sm:$0xff]
    %v1050 = vld [vmem:[#allocation8 + $0x898] sm:$0xff]
    %v1051 = vld [vmem:[#allocation8 + $0x8a0] sm:$0xff]
    %v1052 = vld [vmem:[#allocation8 + $0x8a8] sm:$0xff]
    %v1053 = vld [vmem:[#allocation8 + $0x8b0] sm:$0xff]
    %v1054 = vld [vmem:[#allocation8 + $0x8b8] sm:$0xff]
    %v1055 = vld [vmem:[#allocation8 + $0x8c0] sm:$0xff]
    %v1056 = vld [vmem:[#allocation8 + $0x8c8] sm:$0xff]
    %v1057 = vld [vmem:[#allocation8 + $0x8d0] sm:$0xff]
    %v1058 = vld [vmem:[#allocation8 + $0x8d8] sm:$0xff]
    %v1059 = vld [vmem:[#allocation8 + $0x8e0] sm:$0xff]
    %v1060 = vld [vmem:[#allocation8 + $0x8e8] sm:$0xff]
    %v1061 = vld [vmem:[#allocation8 + $0x8f0] sm:$0xff]
    %v1062 = vld [vmem:[#allocation8 + $0x8f8] sm:$0xff]
    %v1063 = vld [vmem:[#allocation8 + $0x900] sm:$0xff]
    %v1064 = vld [vmem:[#allocation8 + $0x908] sm:$0xff]
    %v1065 = vld [vmem:[#allocation8 + $0x910] sm:$0xff]
    %v1066 = vld [vmem:[#allocation8 + $0x918] sm:$0xff]
    %v1067 = vld [vmem:[#allocation8 + $0x920] sm:$0xff]
    %v1068 = vld [vmem:[#allocation8 + $0x928] sm:$0xff]
    %v1069 = vld [vmem:[#allocation8 + $0x930] sm:$0xff]
    %v1070 = vld [vmem:[#allocation8 + $0x938] sm:$0xff]
    %v1071 = vld [vmem:[#allocation8 + $0x940] sm:$0xff]
    %v1072 = vld [vmem:[#allocation8 + $0x948] sm:$0xff]
    %v1073 = vld [vmem:[#allocation8 + $0x950] sm:$0xff]
    %v1074 = vld [vmem:[#allocation8 + $0x958] sm:$0xff]
    %v1075 = vld [vmem:[#allocation8 + $0x960] sm:$0xff]
    %v1076 = vld [vmem:[#allocation8 + $0x968] sm:$0xff]
    %v1077 = vld [vmem:[#allocation8 + $0x970] sm:$0xff]
    %v1078 = vld [vmem:[#allocation8 + $0x978] sm:$0xff]
    %v1079 = vld [vmem:[#allocation8 + $0x980] sm:$0xff]
    %v1080 = vld [vmem:[#allocation8 + $0x988] sm:$0xff]
    %v1081 = vld [vmem:[#allocation8 + $0x990] sm:$0xff]
    %v1082 = vld [vmem:[#allocation8 + $0x998] sm:$0xff]
    %v1083 = vld [vmem:[#allocation8 + $0x9a0] sm:$0xff]
    %v1084 = vld [vmem:[#allocation8 + $0x9a8] sm:$0xff]
    %v1085 = vld [vmem:[#allocation8 + $0x9b0] sm:$0xff]
    %v1086 = vld [vmem:[#allocation8 + $0x9b8] sm:$0xff]
    %v1087 = vld [vmem:[#allocation8 + $0x9c0] sm:$0xff]
    %v1088 = vld [vmem:[#allocation8 + $0x9c8] sm:$0xff]
    %v1089 = vld [vmem:[#allocation8 + $0x9d0] sm:$0xff]
    %v1090 = vld [vmem:[#allocation8 + $0x9d8] sm:$0xff]
    %v1091 = vld [vmem:[#allocation8 + $0x9e0] sm:$0xff]
    %v1092 = vld [vmem:[#allocation8 + $0x9e8] sm:$0xff]
    %v1093 = vld [vmem:[#allocation8 + $0x9f0] sm:$0xff]
    %v1094 = vld [vmem:[#allocation8 + $0x9f8] sm:$0xff]
    %v1095 = vld [vmem:[#allocation8 + $0xa00] sm:$0xff]
    %v1096 = vld [vmem:[#allocation8 + $0xa08] sm:$0xff]
    %v1097 = vld [vmem:[#allocation8 + $0xa10] sm:$0xff]
    %v1098 = vld [vmem:[#allocation8 + $0xa18] sm:$0xff]
    %v1099 = vld [vmem:[#allocation8 + $0xa20] sm:$0xff]
    %v1100 = vld [vmem:[#allocation8 + $0xa28] sm:$0xff]
    %v1101 = vld [vmem:[#allocation8 + $0xa30] sm:$0xff]
    %v1102 = vld [vmem:[#allocation8 + $0xa38] sm:$0xff]
    %v1103 = vld [vmem:[#allocation8 + $0xa40] sm:$0xff]
    %v1104 = vld [vmem:[#allocation8 + $0xa48] sm:$0xff]
    %v1105 = vld [vmem:[#allocation8 + $0xa50] sm:$0xff]
    %v1106 = vld [vmem:[#allocation8 + $0xa58] sm:$0xff]
    %v1107 = vld [vmem:[#allocation8 + $0xa60] sm:$0xff]
    %v1108 = vld [vmem:[#allocation8 + $0xa68] sm:$0xff]
    %v1109 = vld [vmem:[#allocation8 + $0xa70] sm:$0xff]
    %v1110 = vld [vmem:[#allocation8 + $0xa78] sm:$0xff]
    %v1111 = vld [vmem:[#allocation8 + $0xa80] sm:$0xff]
    %v1112 = vld [vmem:[#allocation8 + $0xa88] sm:$0xff]
    %v1113 = vld [vmem:[#allocation8 + $0xa90] sm:$0xff]
    %v1114 = vld [vmem:[#allocation8 + $0xa98] sm:$0xff]
    %v1115 = vld [vmem:[#allocation8 + $0xaa0] sm:$0xff]
    %v1116 = vld [vmem:[#allocation8 + $0xaa8] sm:$0xff]
    %v1117 = vld [vmem:[#allocation8 + $0xab0] sm:$0xff]
    %v1118 = vld [vmem:[#allocation8 + $0xab8] sm:$0xff]
    %v1119 = vld [vmem:[#allocation8 + $0xac0] sm:$0xff]
    %v1120 = vld [vmem:[#allocation8 + $0xac8] sm:$0xff]
    %v1121 = vld [vmem:[#allocation8 + $0xad0] sm:$0xff]
    %v1122 = vld [vmem:[#allocation8 + $0xad8] sm:$0xff]
    %v1123 = vld [vmem:[#allocation8 + $0xae0] sm:$0xff]
    %v1124 = vld [vmem:[#allocation8 + $0xae8] sm:$0xff]
    %v1125 = vld [vmem:[#allocation8 + $0xaf0] sm:$0xff]
    %v1126 = vld [vmem:[#allocation8 + $0xaf8] sm:$0xff]
    %v1127 = vld [vmem:[#allocation8 + $0xb00] sm:$0xff]
    %v1128 = vld [vmem:[#allocation8 + $0xb08] sm:$0xff]
    %v1129 = vld [vmem:[#allocation8 + $0xb10] sm:$0xff]
    %v1130 = vld [vmem:[#allocation8 + $0xb18] sm:$0xff]
    %v1131 = vld [vmem:[#allocation8 + $0xb20] sm:$0xff]
    %v1132 = vld [vmem:[#allocation8 + $0xb28] sm:$0xff]
    %v1133 = vld [vmem:[#allocation8 + $0xb30] sm:$0xff]
    %v1134 = vld [vmem:[#allocation8 + $0xb38] sm:$0xff]
    %v1135 = vld [vmem:[#allocation8 + $0xb40] sm:$0xff]
    %v1136 = vld [vmem:[#allocation8 + $0xb48] sm:$0xff]
    %v1137 = vld [vmem:[#allocation8 + $0xb50] sm:$0xff]
    %v1138 = vld [vmem:[#allocation8 + $0xb58] sm:$0xff]
    %v1139 = vld [vmem:[#allocation8 + $0xb60] sm:$0xff]
    %v1140 = vld [vmem:[#allocation8 + $0xb68] sm:$0xff]
    %v1141 = vld [vmem:[#allocation8 + $0xb70] sm:$0xff]
    %v1142 = vld [vmem:[#allocation8 + $0xb78] sm:$0xff]
    %v1143 = vld [vmem:[#allocation8 + $0xb80] sm:$0xff]
    %v1144 = vld [vmem:[#allocation8 + $0xb88] sm:$0xff]
    %v1145 = vld [vmem:[#allocation8 + $0xb90] sm:$0xff]
    %v1146 = vld [vmem:[#allocation8 + $0xb98] sm:$0xff]
    %v1147 = vld [vmem:[#allocation8 + $0xba0] sm:$0xff]
    %v1148 = vld [vmem:[#allocation8 + $0xba8] sm:$0xff]
    %v1149 = vld [vmem:[#allocation8 + $0xbb0] sm:$0xff]
    %v1150 = vld [vmem:[#allocation8 + $0xbb8] sm:$0xff]
    %v1151 = vld [vmem:[#allocation8 + $0xbc0] sm:$0xff]
    %v1152 = vld [vmem:[#allocation8 + $0xbc8] sm:$0xff]
    %v1153 = vld [vmem:[#allocation8 + $0xbd0] sm:$0xff]
    %v1154 = vld [vmem:[#allocation8 + $0xbd8] sm:$0xff]
    %v1155 = vld [vmem:[#allocation8 + $0xbe0] sm:$0xff]
    %v1156 = vld [vmem:[#allocation8 + $0xbe8] sm:$0xff]
    %v1157 = vld [vmem:[#allocation8 + $0xbf0] sm:$0xff]
    %v1158 = vld [vmem:[#allocation8 + $0xbf8] sm:$0xff]
    %v1159 = vld [vmem:[#allocation8 + $0xc00] sm:$0xff]
    %v1160 = vld [vmem:[#allocation8 + $0xc08] sm:$0xff]
    %v1161 = vld [vmem:[#allocation8 + $0xc10] sm:$0xff]
    %v1162 = vld [vmem:[#allocation8 + $0xc18] sm:$0xff]
    %v1163 = vld [vmem:[#allocation8 + $0xc20] sm:$0xff]
    %v1164 = vld [vmem:[#allocation8 + $0xc28] sm:$0xff]
    %v1165 = vld [vmem:[#allocation8 + $0xc30] sm:$0xff]
    %v1166 = vld [vmem:[#allocation8 + $0xc38] sm:$0xff]
    %v1167 = vld [vmem:[#allocation8 + $0xc40] sm:$0xff]
    %v1168 = vld [vmem:[#allocation8 + $0xc48] sm:$0xff]
    %v1169 = vld [vmem:[#allocation8 + $0xc50] sm:$0xff]
    %v1170 = vld [vmem:[#allocation8 + $0xc58] sm:$0xff]
    %v1171 = vld [vmem:[#allocation8 + $0xc60] sm:$0xff]
    %v1172 = vld [vmem:[#allocation8 + $0xc68] sm:$0xff]
    %v1173 = vld [vmem:[#allocation8 + $0xc70] sm:$0xff]
    %v1174 = vld [vmem:[#allocation8 + $0xc78] sm:$0xff]
    %v1175 = vld [vmem:[#allocation8 + $0xc80] sm:$0xff]
    %v1176 = vld [vmem:[#allocation8 + $0xc88] sm:$0xff]
    %v1177 = vld [vmem:[#allocation8 + $0xc90] sm:$0xff]
    %v1178 = vld [vmem:[#allocation8 + $0xc98] sm:$0xff]
    %v1179 = vld [vmem:[#allocation8 + $0xca0] sm:$0xff]
    %v1180 = vld [vmem:[#allocation8 + $0xca8] sm:$0xff]
    %v1181 = vld [vmem:[#allocation8 + $0xcb0] sm:$0xff]
    %v1182 = vld [vmem:[#allocation8 + $0xcb8] sm:$0xff]
    %v1183 = vld [vmem:[#allocation8 + $0xcc0] sm:$0xff]
    %v1184 = vld [vmem:[#allocation8 + $0xcc8] sm:$0xff]
    %v1185 = vld [vmem:[#allocation8 + $0xcd0] sm:$0xff]
    %v1186 = vld [vmem:[#allocation8 + $0xcd8] sm:$0xff]
    %v1187 = vld [vmem:[#allocation8 + $0xce0] sm:$0xff]
    %v1188 = vld [vmem:[#allocation8 + $0xce8] sm:$0xff]
    %v1189 = vld [vmem:[#allocation8 + $0xcf0] sm:$0xff]
    %v1190 = vld [vmem:[#allocation8 + $0xcf8] sm:$0xff]
    %v1191 = vld [vmem:[#allocation8 + $0xd00] sm:$0xff]
    %v1192 = vld [vmem:[#allocation8 + $0xd08] sm:$0xff]
    %v1193 = vld [vmem:[#allocation8 + $0xd10] sm:$0xff]
    %v1194 = vld [vmem:[#allocation8 + $0xd18] sm:$0xff]
    %v1195 = vld [vmem:[#allocation8 + $0xd20] sm:$0xff]
    %v1196 = vld [vmem:[#allocation8 + $0xd28] sm:$0xff]
    %v1197 = vld [vmem:[#allocation8 + $0xd30] sm:$0xff]
    %v1198 = vld [vmem:[#allocation8 + $0xd38] sm:$0xff]
    %v1199 = vld [vmem:[#allocation8 + $0xd40] sm:$0xff]
    %v1200 = vld [vmem:[#allocation8 + $0xd48] sm:$0xff]
    %v1201 = vld [vmem:[#allocation8 + $0xd50] sm:$0xff]
    %v1202 = vld [vmem:[#allocation8 + $0xd58] sm:$0xff]
    %v1203 = vld [vmem:[#allocation8 + $0xd60] sm:$0xff]
    %v1204 = vld [vmem:[#allocation8 + $0xd68] sm:$0xff]
    %v1205 = vld [vmem:[#allocation8 + $0xd70] sm:$0xff]
    %v1206 = vld [vmem:[#allocation8 + $0xd78] sm:$0xff]
    %v1207 = vld [vmem:[#allocation8 + $0xd80] sm:$0xff]
    %v1208 = vld [vmem:[#allocation8 + $0xd88] sm:$0xff]
    %v1209 = vld [vmem:[#allocation8 + $0xd90] sm:$0xff]
    %v1210 = vld [vmem:[#allocation8 + $0xd98] sm:$0xff]
    %v1211 = vld [vmem:[#allocation8 + $0xda0] sm:$0xff]
    %v1212 = vld [vmem:[#allocation8 + $0xda8] sm:$0xff]
    %v1213 = vld [vmem:[#allocation8 + $0xdb0] sm:$0xff]
    %v1214 = vld [vmem:[#allocation8 + $0xdb8] sm:$0xff]
    %v1215 = vld [vmem:[#allocation8 + $0xdc0] sm:$0xff]
    %v1216 = vld [vmem:[#allocation8 + $0xdc8] sm:$0xff]
    %v1217 = vld [vmem:[#allocation8 + $0xdd0] sm:$0xff]
    %v1218 = vld [vmem:[#allocation8 + $0xdd8] sm:$0xff]
    %v1219 = vld [vmem:[#allocation8 + $0xde0] sm:$0xff]
    %v1220 = vld [vmem:[#allocation8 + $0xde8] sm:$0xff]
    %v1221 = vld [vmem:[#allocation8 + $0xdf0] sm:$0xff]
    %v1222 = vld [vmem:[#allocation8 + $0xdf8] sm:$0xff]
    %v1223 = vld [vmem:[#allocation8 + $0xe00] sm:$0xff]
    %v1224 = vld [vmem:[#allocation8 + $0xe08] sm:$0xff]
    %v1225 = vld [vmem:[#allocation8 + $0xe10] sm:$0xff]
    %v1226 = vld [vmem:[#allocation8 + $0xe18] sm:$0xff]
    %v1227 = vld [vmem:[#allocation8 + $0xe20] sm:$0xff]
    %v1228 = vld [vmem:[#allocation8 + $0xe28] sm:$0xff]
    %v1229 = vld [vmem:[#allocation8 + $0xe30] sm:$0xff]
    %v1230 = vld [vmem:[#allocation8 + $0xe38] sm:$0xff]
    %v1231 = vld [vmem:[#allocation8 + $0xe40] sm:$0xff]
    %v1232 = vld [vmem:[#allocation8 + $0xe48] sm:$0xff]
    %v1233 = vld [vmem:[#allocation8 + $0xe50] sm:$0xff]
    %v1234 = vld [vmem:[#allocation8 + $0xe58] sm:$0xff]
    %v1235 = vld [vmem:[#allocation8 + $0xe60] sm:$0xff]
    %v1236 = vld [vmem:[#allocation8 + $0xe68] sm:$0xff]
    %v1237 = vld [vmem:[#allocation8 + $0xe70] sm:$0xff]
    %v1238 = vld [vmem:[#allocation8 + $0xe78] sm:$0xff]
    %v1239 = vld [vmem:[#allocation8 + $0xe80] sm:$0xff]
    %v1240 = vld [vmem:[#allocation8 + $0xe88] sm:$0xff]
    %v1241 = vld [vmem:[#allocation8 + $0xe90] sm:$0xff]
    %v1242 = vld [vmem:[#allocation8 + $0xe98] sm:$0xff]
    %v1243 = vld [vmem:[#allocation8 + $0xea0] sm:$0xff]
    %v1244 = vld [vmem:[#allocation8 + $0xea8] sm:$0xff]
    %v1245 = vld [vmem:[#allocation8 + $0xeb0] sm:$0xff]
    %v1246 = vld [vmem:[#allocation8 + $0xeb8] sm:$0xff]
    %v1247 = vld [vmem:[#allocation8 + $0xec0] sm:$0xff]
    %v1248 = vld [vmem:[#allocation8 + $0xec8] sm:$0xff]
    %v1249 = vld [vmem:[#allocation8 + $0xed0] sm:$0xff]
    %v1250 = vld [vmem:[#allocation8 + $0xed8] sm:$0xff]
    %v1251 = vld [vmem:[#allocation8 + $0xee0] sm:$0xff]
    %v1252 = vld [vmem:[#allocation8 + $0xee8] sm:$0xff]
    %v1253 = vld [vmem:[#allocation8 + $0xef0] sm:$0xff]
    %v1254 = vld [vmem:[#allocation8 + $0xef8] sm:$0xff]
    %v1255 = vld [vmem:[#allocation8 + $0xf00] sm:$0xff]
    %v1256 = vld [vmem:[#allocation8 + $0xf08] sm:$0xff]
    %v1257 = vld [vmem:[#allocation8 + $0xf10] sm:$0xff]
    %v1258 = vld [vmem:[#allocation8 + $0xf18] sm:$0xff]
    %v1259 = vld [vmem:[#allocation8 + $0xf20] sm:$0xff]
    %v1260 = vld [vmem:[#allocation8 + $0xf28] sm:$0xff]
    %v1261 = vld [vmem:[#allocation8 + $0xf30] sm:$0xff]
    %v1262 = vld [vmem:[#allocation8 + $0xf38] sm:$0xff]
    %v1263 = vld [vmem:[#allocation8 + $0xf40] sm:$0xff]
    %v1264 = vld [vmem:[#allocation8 + $0xf48] sm:$0xff]
    %v1265 = vld [vmem:[#allocation8 + $0xf50] sm:$0xff]
    %v1266 = vld [vmem:[#allocation8 + $0xf58] sm:$0xff]
    %v1267 = vld [vmem:[#allocation8 + $0xf60] sm:$0xff]
    %v1268 = vld [vmem:[#allocation8 + $0xf68] sm:$0xff]
    %v1269 = vld [vmem:[#allocation8 + $0xf70] sm:$0xff]
    %v1270 = vld [vmem:[#allocation8 + $0xf78] sm:$0xff]
    %v1271 = vld [vmem:[#allocation8 + $0xf80] sm:$0xff]
    %v1272 = vld [vmem:[#allocation8 + $0xf88] sm:$0xff]
    %v1273 = vld [vmem:[#allocation8 + $0xf90] sm:$0xff]
    %v1274 = vld [vmem:[#allocation8 + $0xf98] sm:$0xff]
    %v1275 = vld [vmem:[#allocation8 + $0xfa0] sm:$0xff]
    %v1276 = vld [vmem:[#allocation8 + $0xfa8] sm:$0xff]
    %v1277 = vld [vmem:[#allocation8 + $0xfb0] sm:$0xff]
    %v1278 = vld [vmem:[#allocation8 + $0xfb8] sm:$0xff]
    %v1279 = vld [vmem:[#allocation8 + $0xfc0] sm:$0xff]
    %v1280 = vld [vmem:[#allocation8 + $0xfc8] sm:$0xff]
    %v1281 = vld [vmem:[#allocation8 + $0xfd0] sm:$0xff]
    %v1282 = vld [vmem:[#allocation8 + $0xfd8] sm:$0xff]
    %v1283 = vld [vmem:[#allocation8 + $0xfe0] sm:$0xff]
    %v1284 = vld [vmem:[#allocation8 + $0xfe8] sm:$0xff]
    %v1285 = vld [vmem:[#allocation8 + $0xff0] sm:$0xff]
    %v1286 = vld [vmem:[#allocation8 + $0xff8] sm:$0xff]
    %v1287 = vld [vmem:[#allocation10] sm:$0xf]
    %v1289 = vlaneseq
    %v1290 = vshrl.u32 %v1289, 7
    %v1291 = vsub.s32 0, %v1290
    %v1292 = vrot.slane %v1287, %v1291
    %v1293 = vlaneseq
    %v1294 = vshrl.u32 %v1293, 7
    %v1295 = vsub.s32 1, %v1294
    %v1296 = vrot.slane %v1287, %v1295
    %v1297 = vlaneseq
    %v1298 = vshrl.u32 %v1297, 7
    %v1299 = vsub.s32 2, %v1298
    %v1300 = vrot.slane %v1287, %v1299
    %v1301 = vlaneseq
    %v1302 = vshrl.u32 %v1301, 7
    %v1303 = vsub.s32 3, %v1302
    %v1304 = vrot.slane %v1287, %v1303
    %v1821 = vunpack.c.l.b16 %v775
    %v1822 = vunpack.c.h.b16 %v775
    %v1823 = vunpack.c.l.b16 %v776
    %v1824 = vunpack.c.h.b16 %v776
    %v1825 = vunpack.c.l.b16 %v777
    %v1826 = vunpack.c.h.b16 %v777
    %v1827 = vunpack.c.l.b16 %v778
    %v1828 = vunpack.c.h.b16 %v778
    %v1829 = vunpack.c.l.b16 %v779
    %v1830 = vunpack.c.h.b16 %v779
    %v1831 = vunpack.c.l.b16 %v780
    %v1832 = vunpack.c.h.b16 %v780
    %v1833 = vunpack.c.l.b16 %v781
    %v1834 = vunpack.c.h.b16 %v781
    %v1835 = vunpack.c.l.b16 %v782
    %v1836 = vunpack.c.h.b16 %v782
    %v1837 = vunpack.c.l.b16 %v783
    %v1838 = vunpack.c.h.b16 %v783
    %v1839 = vunpack.c.l.b16 %v784
    %v1840 = vunpack.c.h.b16 %v784
    %v1841 = vunpack.c.l.b16 %v785
    %v1842 = vunpack.c.h.b16 %v785
    %v1843 = vunpack.c.l.b16 %v786
    %v1844 = vunpack.c.h.b16 %v786
    %v1845 = vunpack.c.l.b16 %v787
    %v1846 = vunpack.c.h.b16 %v787
    %v1847 = vunpack.c.l.b16 %v788
    %v1848 = vunpack.c.h.b16 %v788
    %v1849 = vunpack.c.l.b16 %v789
    %v1850 = vunpack.c.h.b16 %v789
    %v1851 = vunpack.c.l.b16 %v790
    %v1852 = vunpack.c.h.b16 %v790
    %v1853 = vunpack.c.l.b16 %v791
    %v1854 = vunpack.c.h.b16 %v791
    %v1855 = vunpack.c.l.b16 %v792
    %v1856 = vunpack.c.h.b16 %v792
    %v1857 = vunpack.c.l.b16 %v793
    %v1858 = vunpack.c.h.b16 %v793
    %v1859 = vunpack.c.l.b16 %v794
    %v1860 = vunpack.c.h.b16 %v794
    %v1861 = vunpack.c.l.b16 %v795
    %v1862 = vunpack.c.h.b16 %v795
    %v1863 = vunpack.c.l.b16 %v796
    %v1864 = vunpack.c.h.b16 %v796
    %v1865 = vunpack.c.l.b16 %v797
    %v1866 = vunpack.c.h.b16 %v797
    %v1867 = vunpack.c.l.b16 %v798
    %v1868 = vunpack.c.h.b16 %v798
    %v1869 = vunpack.c.l.b16 %v799
    %v1870 = vunpack.c.h.b16 %v799
    %v1871 = vunpack.c.l.b16 %v800
    %v1872 = vunpack.c.h.b16 %v800
    %v1873 = vunpack.c.l.b16 %v801
    %v1874 = vunpack.c.h.b16 %v801
    %v1875 = vunpack.c.l.b16 %v802
    %v1876 = vunpack.c.h.b16 %v802
    %v1877 = vunpack.c.l.b16 %v803
    %v1878 = vunpack.c.h.b16 %v803
    %v1879 = vunpack.c.l.b16 %v804
    %v1880 = vunpack.c.h.b16 %v804
    %v1881 = vunpack.c.l.b16 %v805
    %v1882 = vunpack.c.h.b16 %v805
    %v1883 = vunpack.c.l.b16 %v806
    %v1884 = vunpack.c.h.b16 %v806
    %v1885 = vunpack.c.l.b16 %v807
    %v1886 = vunpack.c.h.b16 %v807
    %v1887 = vunpack.c.l.b16 %v808
    %v1888 = vunpack.c.h.b16 %v808
    %v1889 = vunpack.c.l.b16 %v809
    %v1890 = vunpack.c.h.b16 %v809
    %v1891 = vunpack.c.l.b16 %v810
    %v1892 = vunpack.c.h.b16 %v810
    %v1893 = vunpack.c.l.b16 %v811
    %v1894 = vunpack.c.h.b16 %v811
    %v1895 = vunpack.c.l.b16 %v812
    %v1896 = vunpack.c.h.b16 %v812
    %v1897 = vunpack.c.l.b16 %v813
    %v1898 = vunpack.c.h.b16 %v813
    %v1899 = vunpack.c.l.b16 %v814
    %v1900 = vunpack.c.h.b16 %v814
    %v1901 = vunpack.c.l.b16 %v815
    %v1902 = vunpack.c.h.b16 %v815
    %v1903 = vunpack.c.l.b16 %v816
    %v1904 = vunpack.c.h.b16 %v816
    %v1905 = vunpack.c.l.b16 %v817
    %v1906 = vunpack.c.h.b16 %v817
    %v1907 = vunpack.c.l.b16 %v818
    %v1908 = vunpack.c.h.b16 %v818
    %v1909 = vunpack.c.l.b16 %v819
    %v1910 = vunpack.c.h.b16 %v819
    %v1911 = vunpack.c.l.b16 %v820
    %v1912 = vunpack.c.h.b16 %v820
    %v1913 = vunpack.c.l.b16 %v821
    %v1914 = vunpack.c.h.b16 %v821
    %v1915 = vunpack.c.l.b16 %v822
    %v1916 = vunpack.c.h.b16 %v822
    %v1917 = vunpack.c.l.b16 %v823
    %v1918 = vunpack.c.h.b16 %v823
    %v1919 = vunpack.c.l.b16 %v824
    %v1920 = vunpack.c.h.b16 %v824
    %v1921 = vunpack.c.l.b16 %v825
    %v1922 = vunpack.c.h.b16 %v825
    %v1923 = vunpack.c.l.b16 %v826
    %v1924 = vunpack.c.h.b16 %v826
    %v1925 = vunpack.c.l.b16 %v827
    %v1926 = vunpack.c.h.b16 %v827
    %v1927 = vunpack.c.l.b16 %v828
    %v1928 = vunpack.c.h.b16 %v828
    %v1929 = vunpack.c.l.b16 %v829
    %v1930 = vunpack.c.h.b16 %v829
    %v1931 = vunpack.c.l.b16 %v830
    %v1932 = vunpack.c.h.b16 %v830
    %v1933 = vunpack.c.l.b16 %v831
    %v1934 = vunpack.c.h.b16 %v831
    %v1935 = vunpack.c.l.b16 %v832
    %v1936 = vunpack.c.h.b16 %v832
    %v1937 = vunpack.c.l.b16 %v833
    %v1938 = vunpack.c.h.b16 %v833
    %v1939 = vunpack.c.l.b16 %v834
    %v1940 = vunpack.c.h.b16 %v834
    %v1941 = vunpack.c.l.b16 %v835
    %v1942 = vunpack.c.h.b16 %v835
    %v1943 = vunpack.c.l.b16 %v836
    %v1944 = vunpack.c.h.b16 %v836
    %v1945 = vunpack.c.l.b16 %v837
    %v1946 = vunpack.c.h.b16 %v837
    %v1947 = vunpack.c.l.b16 %v838
    %v1948 = vunpack.c.h.b16 %v838
    %v1949 = vunpack.c.l.b16 %v839
    %v1950 = vunpack.c.h.b16 %v839
    %v1951 = vunpack.c.l.b16 %v840
    %v1952 = vunpack.c.h.b16 %v840
    %v1953 = vunpack.c.l.b16 %v841
    %v1954 = vunpack.c.h.b16 %v841
    %v1955 = vunpack.c.l.b16 %v842
    %v1956 = vunpack.c.h.b16 %v842
    %v1957 = vunpack.c.l.b16 %v843
    %v1958 = vunpack.c.h.b16 %v843
    %v1959 = vunpack.c.l.b16 %v844
    %v1960 = vunpack.c.h.b16 %v844
    %v1961 = vunpack.c.l.b16 %v845
    %v1962 = vunpack.c.h.b16 %v845
    %v1963 = vunpack.c.l.b16 %v846
    %v1964 = vunpack.c.h.b16 %v846
    %v1965 = vunpack.c.l.b16 %v847
    %v1966 = vunpack.c.h.b16 %v847
    %v1967 = vunpack.c.l.b16 %v848
    %v1968 = vunpack.c.h.b16 %v848
    %v1969 = vunpack.c.l.b16 %v849
    %v1970 = vunpack.c.h.b16 %v849
    %v1971 = vunpack.c.l.b16 %v850
    %v1972 = vunpack.c.h.b16 %v850
    %v1973 = vunpack.c.l.b16 %v851
    %v1974 = vunpack.c.h.b16 %v851
    %v1975 = vunpack.c.l.b16 %v852
    %v1976 = vunpack.c.h.b16 %v852
    %v1977 = vunpack.c.l.b16 %v853
    %v1978 = vunpack.c.h.b16 %v853
    %v1979 = vunpack.c.l.b16 %v854
    %v1980 = vunpack.c.h.b16 %v854
    %v1981 = vunpack.c.l.b16 %v855
    %v1982 = vunpack.c.h.b16 %v855
    %v1983 = vunpack.c.l.b16 %v856
    %v1984 = vunpack.c.h.b16 %v856
    %v1985 = vunpack.c.l.b16 %v857
    %v1986 = vunpack.c.h.b16 %v857
    %v1987 = vunpack.c.l.b16 %v858
    %v1988 = vunpack.c.h.b16 %v858
    %v1989 = vunpack.c.l.b16 %v859
    %v1990 = vunpack.c.h.b16 %v859
    %v1991 = vunpack.c.l.b16 %v860
    %v1992 = vunpack.c.h.b16 %v860
    %v1993 = vunpack.c.l.b16 %v861
    %v1994 = vunpack.c.h.b16 %v861
    %v1995 = vunpack.c.l.b16 %v862
    %v1996 = vunpack.c.h.b16 %v862
    %v1997 = vunpack.c.l.b16 %v863
    %v1998 = vunpack.c.h.b16 %v863
    %v1999 = vunpack.c.l.b16 %v864
    %v2000 = vunpack.c.h.b16 %v864
    %v2001 = vunpack.c.l.b16 %v865
    %v2002 = vunpack.c.h.b16 %v865
    %v2003 = vunpack.c.l.b16 %v866
    %v2004 = vunpack.c.h.b16 %v866
    %v2005 = vunpack.c.l.b16 %v867
    %v2006 = vunpack.c.h.b16 %v867
    %v2007 = vunpack.c.l.b16 %v868
    %v2008 = vunpack.c.h.b16 %v868
    %v2009 = vunpack.c.l.b16 %v869
    %v2010 = vunpack.c.h.b16 %v869
    %v2011 = vunpack.c.l.b16 %v870
    %v2012 = vunpack.c.h.b16 %v870
    %v2013 = vunpack.c.l.b16 %v871
    %v2014 = vunpack.c.h.b16 %v871
    %v2015 = vunpack.c.l.b16 %v872
    %v2016 = vunpack.c.h.b16 %v872
    %v2017 = vunpack.c.l.b16 %v873
    %v2018 = vunpack.c.h.b16 %v873
    %v2019 = vunpack.c.l.b16 %v874
    %v2020 = vunpack.c.h.b16 %v874
    %v2021 = vunpack.c.l.b16 %v875
    %v2022 = vunpack.c.h.b16 %v875
    %v2023 = vunpack.c.l.b16 %v876
    %v2024 = vunpack.c.h.b16 %v876
    %v2025 = vunpack.c.l.b16 %v877
    %v2026 = vunpack.c.h.b16 %v877
    %v2027 = vunpack.c.l.b16 %v878
    %v2028 = vunpack.c.h.b16 %v878
    %v2029 = vunpack.c.l.b16 %v879
    %v2030 = vunpack.c.h.b16 %v879
    %v2031 = vunpack.c.l.b16 %v880
    %v2032 = vunpack.c.h.b16 %v880
    %v2033 = vunpack.c.l.b16 %v881
    %v2034 = vunpack.c.h.b16 %v881
    %v2035 = vunpack.c.l.b16 %v882
    %v2036 = vunpack.c.h.b16 %v882
    %v2037 = vunpack.c.l.b16 %v883
    %v2038 = vunpack.c.h.b16 %v883
    %v2039 = vunpack.c.l.b16 %v884
    %v2040 = vunpack.c.h.b16 %v884
    %v2041 = vunpack.c.l.b16 %v885
    %v2042 = vunpack.c.h.b16 %v885
    %v2043 = vunpack.c.l.b16 %v886
    %v2044 = vunpack.c.h.b16 %v886
    %v2045 = vunpack.c.l.b16 %v887
    %v2046 = vunpack.c.h.b16 %v887
    %v2047 = vunpack.c.l.b16 %v888
    %v2048 = vunpack.c.h.b16 %v888
    %v2049 = vunpack.c.l.b16 %v889
    %v2050 = vunpack.c.h.b16 %v889
    %v2051 = vunpack.c.l.b16 %v890
    %v2052 = vunpack.c.h.b16 %v890
    %v2053 = vunpack.c.l.b16 %v891
    %v2054 = vunpack.c.h.b16 %v891
    %v2055 = vunpack.c.l.b16 %v892
    %v2056 = vunpack.c.h.b16 %v892
    %v2057 = vunpack.c.l.b16 %v893
    %v2058 = vunpack.c.h.b16 %v893
    %v2059 = vunpack.c.l.b16 %v894
    %v2060 = vunpack.c.h.b16 %v894
    %v2061 = vunpack.c.l.b16 %v895
    %v2062 = vunpack.c.h.b16 %v895
    %v2063 = vunpack.c.l.b16 %v896
    %v2064 = vunpack.c.h.b16 %v896
    %v2065 = vunpack.c.l.b16 %v897
    %v2066 = vunpack.c.h.b16 %v897
    %v2067 = vunpack.c.l.b16 %v898
    %v2068 = vunpack.c.h.b16 %v898
    %v2069 = vunpack.c.l.b16 %v899
    %v2070 = vunpack.c.h.b16 %v899
    %v2071 = vunpack.c.l.b16 %v900
    %v2072 = vunpack.c.h.b16 %v900
    %v2073 = vunpack.c.l.b16 %v901
    %v2074 = vunpack.c.h.b16 %v901
    %v2075 = vunpack.c.l.b16 %v902
    %v2076 = vunpack.c.h.b16 %v902
    %v2077 = vunpack.c.l.b16 %v903
    %v2078 = vunpack.c.h.b16 %v903
    %v2079 = vunpack.c.l.b16 %v904
    %v2080 = vunpack.c.h.b16 %v904
    %v2081 = vunpack.c.l.b16 %v905
    %v2082 = vunpack.c.h.b16 %v905
    %v2083 = vunpack.c.l.b16 %v906
    %v2084 = vunpack.c.h.b16 %v906
    %v2085 = vunpack.c.l.b16 %v907
    %v2086 = vunpack.c.h.b16 %v907
    %v2087 = vunpack.c.l.b16 %v908
    %v2088 = vunpack.c.h.b16 %v908
    %v2089 = vunpack.c.l.b16 %v909
    %v2090 = vunpack.c.h.b16 %v909
    %v2091 = vunpack.c.l.b16 %v910
    %v2092 = vunpack.c.h.b16 %v910
    %v2093 = vunpack.c.l.b16 %v911
    %v2094 = vunpack.c.h.b16 %v911
    %v2095 = vunpack.c.l.b16 %v912
    %v2096 = vunpack.c.h.b16 %v912
    %v2097 = vunpack.c.l.b16 %v913
    %v2098 = vunpack.c.h.b16 %v913
    %v2099 = vunpack.c.l.b16 %v914
    %v2100 = vunpack.c.h.b16 %v914
    %v2101 = vunpack.c.l.b16 %v915
    %v2102 = vunpack.c.h.b16 %v915
    %v2103 = vunpack.c.l.b16 %v916
    %v2104 = vunpack.c.h.b16 %v916
    %v2105 = vunpack.c.l.b16 %v917
    %v2106 = vunpack.c.h.b16 %v917
    %v2107 = vunpack.c.l.b16 %v918
    %v2108 = vunpack.c.h.b16 %v918
    %v2109 = vunpack.c.l.b16 %v919
    %v2110 = vunpack.c.h.b16 %v919
    %v2111 = vunpack.c.l.b16 %v920
    %v2112 = vunpack.c.h.b16 %v920
    %v2113 = vunpack.c.l.b16 %v921
    %v2114 = vunpack.c.h.b16 %v921
    %v2115 = vunpack.c.l.b16 %v922
    %v2116 = vunpack.c.h.b16 %v922
    %v2117 = vunpack.c.l.b16 %v923
    %v2118 = vunpack.c.h.b16 %v923
    %v2119 = vunpack.c.l.b16 %v924
    %v2120 = vunpack.c.h.b16 %v924
    %v2121 = vunpack.c.l.b16 %v925
    %v2122 = vunpack.c.h.b16 %v925
    %v2123 = vunpack.c.l.b16 %v926
    %v2124 = vunpack.c.h.b16 %v926
    %v2125 = vunpack.c.l.b16 %v927
    %v2126 = vunpack.c.h.b16 %v927
    %v2127 = vunpack.c.l.b16 %v928
    %v2128 = vunpack.c.h.b16 %v928
    %v2129 = vunpack.c.l.b16 %v929
    %v2130 = vunpack.c.h.b16 %v929
    %v2131 = vunpack.c.l.b16 %v930
    %v2132 = vunpack.c.h.b16 %v930
    %v2133 = vunpack.c.l.b16 %v931
    %v2134 = vunpack.c.h.b16 %v931
    %v2135 = vunpack.c.l.b16 %v932
    %v2136 = vunpack.c.h.b16 %v932
    %v2137 = vunpack.c.l.b16 %v933
    %v2138 = vunpack.c.h.b16 %v933
    %v2139 = vunpack.c.l.b16 %v934
    %v2140 = vunpack.c.h.b16 %v934
    %v2141 = vunpack.c.l.b16 %v935
    %v2142 = vunpack.c.h.b16 %v935
    %v2143 = vunpack.c.l.b16 %v936
    %v2144 = vunpack.c.h.b16 %v936
    %v2145 = vunpack.c.l.b16 %v937
    %v2146 = vunpack.c.h.b16 %v937
    %v2147 = vunpack.c.l.b16 %v938
    %v2148 = vunpack.c.h.b16 %v938
    %v2149 = vunpack.c.l.b16 %v939
    %v2150 = vunpack.c.h.b16 %v939
    %v2151 = vunpack.c.l.b16 %v940
    %v2152 = vunpack.c.h.b16 %v940
    %v2153 = vunpack.c.l.b16 %v941
    %v2154 = vunpack.c.h.b16 %v941
    %v2155 = vunpack.c.l.b16 %v942
    %v2156 = vunpack.c.h.b16 %v942
    %v2157 = vunpack.c.l.b16 %v943
    %v2158 = vunpack.c.h.b16 %v943
    %v2159 = vunpack.c.l.b16 %v944
    %v2160 = vunpack.c.h.b16 %v944
    %v2161 = vunpack.c.l.b16 %v945
    %v2162 = vunpack.c.h.b16 %v945
    %v2163 = vunpack.c.l.b16 %v946
    %v2164 = vunpack.c.h.b16 %v946
    %v2165 = vunpack.c.l.b16 %v947
    %v2166 = vunpack.c.h.b16 %v947
    %v2167 = vunpack.c.l.b16 %v948
    %v2168 = vunpack.c.h.b16 %v948
    %v2169 = vunpack.c.l.b16 %v949
    %v2170 = vunpack.c.h.b16 %v949
    %v2171 = vunpack.c.l.b16 %v950
    %v2172 = vunpack.c.h.b16 %v950
    %v2173 = vunpack.c.l.b16 %v951
    %v2174 = vunpack.c.h.b16 %v951
    %v2175 = vunpack.c.l.b16 %v952
    %v2176 = vunpack.c.h.b16 %v952
    %v2177 = vunpack.c.l.b16 %v953
    %v2178 = vunpack.c.h.b16 %v953
    %v2179 = vunpack.c.l.b16 %v954
    %v2180 = vunpack.c.h.b16 %v954
    %v2181 = vunpack.c.l.b16 %v955
    %v2182 = vunpack.c.h.b16 %v955
    %v2183 = vunpack.c.l.b16 %v956
    %v2184 = vunpack.c.h.b16 %v956
    %v2185 = vunpack.c.l.b16 %v957
    %v2186 = vunpack.c.h.b16 %v957
    %v2187 = vunpack.c.l.b16 %v958
    %v2188 = vunpack.c.h.b16 %v958
    %v2189 = vunpack.c.l.b16 %v959
    %v2190 = vunpack.c.h.b16 %v959
    %v2191 = vunpack.c.l.b16 %v960
    %v2192 = vunpack.c.h.b16 %v960
    %v2193 = vunpack.c.l.b16 %v961
    %v2194 = vunpack.c.h.b16 %v961
    %v2195 = vunpack.c.l.b16 %v962
    %v2196 = vunpack.c.h.b16 %v962
    %v2197 = vunpack.c.l.b16 %v963
    %v2198 = vunpack.c.h.b16 %v963
    %v2199 = vunpack.c.l.b16 %v964
    %v2200 = vunpack.c.h.b16 %v964
    %v2201 = vunpack.c.l.b16 %v965
    %v2202 = vunpack.c.h.b16 %v965
    %v2203 = vunpack.c.l.b16 %v966
    %v2204 = vunpack.c.h.b16 %v966
    %v2205 = vunpack.c.l.b16 %v967
    %v2206 = vunpack.c.h.b16 %v967
    %v2207 = vunpack.c.l.b16 %v968
    %v2208 = vunpack.c.h.b16 %v968
    %v2209 = vunpack.c.l.b16 %v969
    %v2210 = vunpack.c.h.b16 %v969
    %v2211 = vunpack.c.l.b16 %v970
    %v2212 = vunpack.c.h.b16 %v970
    %v2213 = vunpack.c.l.b16 %v971
    %v2214 = vunpack.c.h.b16 %v971
    %v2215 = vunpack.c.l.b16 %v972
    %v2216 = vunpack.c.h.b16 %v972
    %v2217 = vunpack.c.l.b16 %v973
    %v2218 = vunpack.c.h.b16 %v973
    %v2219 = vunpack.c.l.b16 %v974
    %v2220 = vunpack.c.h.b16 %v974
    %v2221 = vunpack.c.l.b16 %v975
    %v2222 = vunpack.c.h.b16 %v975
    %v2223 = vunpack.c.l.b16 %v976
    %v2224 = vunpack.c.h.b16 %v976
    %v2225 = vunpack.c.l.b16 %v977
    %v2226 = vunpack.c.h.b16 %v977
    %v2227 = vunpack.c.l.b16 %v978
    %v2228 = vunpack.c.h.b16 %v978
    %v2229 = vunpack.c.l.b16 %v979
    %v2230 = vunpack.c.h.b16 %v979
    %v2231 = vunpack.c.l.b16 %v980
    %v2232 = vunpack.c.h.b16 %v980
    %v2233 = vunpack.c.l.b16 %v981
    %v2234 = vunpack.c.h.b16 %v981
    %v2235 = vunpack.c.l.b16 %v982
    %v2236 = vunpack.c.h.b16 %v982
    %v2237 = vunpack.c.l.b16 %v983
    %v2238 = vunpack.c.h.b16 %v983
    %v2239 = vunpack.c.l.b16 %v984
    %v2240 = vunpack.c.h.b16 %v984
    %v2241 = vunpack.c.l.b16 %v985
    %v2242 = vunpack.c.h.b16 %v985
    %v2243 = vunpack.c.l.b16 %v986
    %v2244 = vunpack.c.h.b16 %v986
    %v2245 = vunpack.c.l.b16 %v987
    %v2246 = vunpack.c.h.b16 %v987
    %v2247 = vunpack.c.l.b16 %v988
    %v2248 = vunpack.c.h.b16 %v988
    %v2249 = vunpack.c.l.b16 %v989
    %v2250 = vunpack.c.h.b16 %v989
    %v2251 = vunpack.c.l.b16 %v990
    %v2252 = vunpack.c.h.b16 %v990
    %v2253 = vunpack.c.l.b16 %v991
    %v2254 = vunpack.c.h.b16 %v991
    %v2255 = vunpack.c.l.b16 %v992
    %v2256 = vunpack.c.h.b16 %v992
    %v2257 = vunpack.c.l.b16 %v993
    %v2258 = vunpack.c.h.b16 %v993
    %v2259 = vunpack.c.l.b16 %v994
    %v2260 = vunpack.c.h.b16 %v994
    %v2261 = vunpack.c.l.b16 %v995
    %v2262 = vunpack.c.h.b16 %v995
    %v2263 = vunpack.c.l.b16 %v996
    %v2264 = vunpack.c.h.b16 %v996
    %v2265 = vunpack.c.l.b16 %v997
    %v2266 = vunpack.c.h.b16 %v997
    %v2267 = vunpack.c.l.b16 %v998
    %v2268 = vunpack.c.h.b16 %v998
    %v2269 = vunpack.c.l.b16 %v999
    %v2270 = vunpack.c.h.b16 %v999
    %v2271 = vunpack.c.l.b16 %v1000
    %v2272 = vunpack.c.h.b16 %v1000
    %v2273 = vunpack.c.l.b16 %v1001
    %v2274 = vunpack.c.h.b16 %v1001
    %v2275 = vunpack.c.l.b16 %v1002
    %v2276 = vunpack.c.h.b16 %v1002
    %v2277 = vunpack.c.l.b16 %v1003
    %v2278 = vunpack.c.h.b16 %v1003
    %v2279 = vunpack.c.l.b16 %v1004
    %v2280 = vunpack.c.h.b16 %v1004
    %v2281 = vunpack.c.l.b16 %v1005
    %v2282 = vunpack.c.h.b16 %v1005
    %v2283 = vunpack.c.l.b16 %v1006
    %v2284 = vunpack.c.h.b16 %v1006
    %v2285 = vunpack.c.l.b16 %v1007
    %v2286 = vunpack.c.h.b16 %v1007
    %v2287 = vunpack.c.l.b16 %v1008
    %v2288 = vunpack.c.h.b16 %v1008
    %v2289 = vunpack.c.l.b16 %v1009
    %v2290 = vunpack.c.h.b16 %v1009
    %v2291 = vunpack.c.l.b16 %v1010
    %v2292 = vunpack.c.h.b16 %v1010
    %v2293 = vunpack.c.l.b16 %v1011
    %v2294 = vunpack.c.h.b16 %v1011
    %v2295 = vunpack.c.l.b16 %v1012
    %v2296 = vunpack.c.h.b16 %v1012
    %v2297 = vunpack.c.l.b16 %v1013
    %v2298 = vunpack.c.h.b16 %v1013
    %v2299 = vunpack.c.l.b16 %v1014
    %v2300 = vunpack.c.h.b16 %v1014
    %v2301 = vunpack.c.l.b16 %v1015
    %v2302 = vunpack.c.h.b16 %v1015
    %v2303 = vunpack.c.l.b16 %v1016
    %v2304 = vunpack.c.h.b16 %v1016
    %v2305 = vunpack.c.l.b16 %v1017
    %v2306 = vunpack.c.h.b16 %v1017
    %v2307 = vunpack.c.l.b16 %v1018
    %v2308 = vunpack.c.h.b16 %v1018
    %v2309 = vunpack.c.l.b16 %v1019
    %v2310 = vunpack.c.h.b16 %v1019
    %v2311 = vunpack.c.l.b16 %v1020
    %v2312 = vunpack.c.h.b16 %v1020
    %v2313 = vunpack.c.l.b16 %v1021
    %v2314 = vunpack.c.h.b16 %v1021
    %v2315 = vunpack.c.l.b16 %v1022
    %v2316 = vunpack.c.h.b16 %v1022
    %v2317 = vunpack.c.l.b16 %v1023
    %v2318 = vunpack.c.h.b16 %v1023
    %v2319 = vunpack.c.l.b16 %v1024
    %v2320 = vunpack.c.h.b16 %v1024
    %v2321 = vunpack.c.l.b16 %v1025
    %v2322 = vunpack.c.h.b16 %v1025
    %v2323 = vunpack.c.l.b16 %v1026
    %v2324 = vunpack.c.h.b16 %v1026
    %v2325 = vunpack.c.l.b16 %v1027
    %v2326 = vunpack.c.h.b16 %v1027
    %v2327 = vunpack.c.l.b16 %v1028
    %v2328 = vunpack.c.h.b16 %v1028
    %v2329 = vunpack.c.l.b16 %v1029
    %v2330 = vunpack.c.h.b16 %v1029
    %v2331 = vunpack.c.l.b16 %v1030
    %v2332 = vunpack.c.h.b16 %v1030
    %v2333 = vunpack.c.l.b16 %v1031
    %v2334 = vunpack.c.h.b16 %v1031
    %v2335 = vunpack.c.l.b16 %v1032
    %v2336 = vunpack.c.h.b16 %v1032
    %v2337 = vunpack.c.l.b16 %v1033
    %v2338 = vunpack.c.h.b16 %v1033
    %v2339 = vunpack.c.l.b16 %v1034
    %v2340 = vunpack.c.h.b16 %v1034
    %v2341 = vunpack.c.l.b16 %v1035
    %v2342 = vunpack.c.h.b16 %v1035
    %v2343 = vunpack.c.l.b16 %v1036
    %v2344 = vunpack.c.h.b16 %v1036
    %v2345 = vunpack.c.l.b16 %v1037
    %v2346 = vunpack.c.h.b16 %v1037
    %v2347 = vunpack.c.l.b16 %v1038
    %v2348 = vunpack.c.h.b16 %v1038
    %v2349 = vunpack.c.l.b16 %v1039
    %v2350 = vunpack.c.h.b16 %v1039
    %v2351 = vunpack.c.l.b16 %v1040
    %v2352 = vunpack.c.h.b16 %v1040
    %v2353 = vunpack.c.l.b16 %v1041
    %v2354 = vunpack.c.h.b16 %v1041
    %v2355 = vunpack.c.l.b16 %v1042
    %v2356 = vunpack.c.h.b16 %v1042
    %v2357 = vunpack.c.l.b16 %v1043
    %v2358 = vunpack.c.h.b16 %v1043
    %v2359 = vunpack.c.l.b16 %v1044
    %v2360 = vunpack.c.h.b16 %v1044
    %v2361 = vunpack.c.l.b16 %v1045
    %v2362 = vunpack.c.h.b16 %v1045
    %v2363 = vunpack.c.l.b16 %v1046
    %v2364 = vunpack.c.h.b16 %v1046
    %v2365 = vunpack.c.l.b16 %v1047
    %v2366 = vunpack.c.h.b16 %v1047
    %v2367 = vunpack.c.l.b16 %v1048
    %v2368 = vunpack.c.h.b16 %v1048
    %v2369 = vunpack.c.l.b16 %v1049
    %v2370 = vunpack.c.h.b16 %v1049
    %v2371 = vunpack.c.l.b16 %v1050
    %v2372 = vunpack.c.h.b16 %v1050
    %v2373 = vunpack.c.l.b16 %v1051
    %v2374 = vunpack.c.h.b16 %v1051
    %v2375 = vunpack.c.l.b16 %v1052
    %v2376 = vunpack.c.h.b16 %v1052
    %v2377 = vunpack.c.l.b16 %v1053
    %v2378 = vunpack.c.h.b16 %v1053
    %v2379 = vunpack.c.l.b16 %v1054
    %v2380 = vunpack.c.h.b16 %v1054
    %v2381 = vunpack.c.l.b16 %v1055
    %v2382 = vunpack.c.h.b16 %v1055
    %v2383 = vunpack.c.l.b16 %v1056
    %v2384 = vunpack.c.h.b16 %v1056
    %v2385 = vunpack.c.l.b16 %v1057
    %v2386 = vunpack.c.h.b16 %v1057
    %v2387 = vunpack.c.l.b16 %v1058
    %v2388 = vunpack.c.h.b16 %v1058
    %v2389 = vunpack.c.l.b16 %v1059
    %v2390 = vunpack.c.h.b16 %v1059
    %v2391 = vunpack.c.l.b16 %v1060
    %v2392 = vunpack.c.h.b16 %v1060
    %v2393 = vunpack.c.l.b16 %v1061
    %v2394 = vunpack.c.h.b16 %v1061
    %v2395 = vunpack.c.l.b16 %v1062
    %v2396 = vunpack.c.h.b16 %v1062
    %v2397 = vunpack.c.l.b16 %v1063
    %v2398 = vunpack.c.h.b16 %v1063
    %v2399 = vunpack.c.l.b16 %v1064
    %v2400 = vunpack.c.h.b16 %v1064
    %v2401 = vunpack.c.l.b16 %v1065
    %v2402 = vunpack.c.h.b16 %v1065
    %v2403 = vunpack.c.l.b16 %v1066
    %v2404 = vunpack.c.h.b16 %v1066
    %v2405 = vunpack.c.l.b16 %v1067
    %v2406 = vunpack.c.h.b16 %v1067
    %v2407 = vunpack.c.l.b16 %v1068
    %v2408 = vunpack.c.h.b16 %v1068
    %v2409 = vunpack.c.l.b16 %v1069
    %v2410 = vunpack.c.h.b16 %v1069
    %v2411 = vunpack.c.l.b16 %v1070
    %v2412 = vunpack.c.h.b16 %v1070
    %v2413 = vunpack.c.l.b16 %v1071
    %v2414 = vunpack.c.h.b16 %v1071
    %v2415 = vunpack.c.l.b16 %v1072
    %v2416 = vunpack.c.h.b16 %v1072
    %v2417 = vunpack.c.l.b16 %v1073
    %v2418 = vunpack.c.h.b16 %v1073
    %v2419 = vunpack.c.l.b16 %v1074
    %v2420 = vunpack.c.h.b16 %v1074
    %v2421 = vunpack.c.l.b16 %v1075
    %v2422 = vunpack.c.h.b16 %v1075
    %v2423 = vunpack.c.l.b16 %v1076
    %v2424 = vunpack.c.h.b16 %v1076
    %v2425 = vunpack.c.l.b16 %v1077
    %v2426 = vunpack.c.h.b16 %v1077
    %v2427 = vunpack.c.l.b16 %v1078
    %v2428 = vunpack.c.h.b16 %v1078
    %v2429 = vunpack.c.l.b16 %v1079
    %v2430 = vunpack.c.h.b16 %v1079
    %v2431 = vunpack.c.l.b16 %v1080
    %v2432 = vunpack.c.h.b16 %v1080
    %v2433 = vunpack.c.l.b16 %v1081
    %v2434 = vunpack.c.h.b16 %v1081
    %v2435 = vunpack.c.l.b16 %v1082
    %v2436 = vunpack.c.h.b16 %v1082
    %v2437 = vunpack.c.l.b16 %v1083
    %v2438 = vunpack.c.h.b16 %v1083
    %v2439 = vunpack.c.l.b16 %v1084
    %v2440 = vunpack.c.h.b16 %v1084
    %v2441 = vunpack.c.l.b16 %v1085
    %v2442 = vunpack.c.h.b16 %v1085
    %v2443 = vunpack.c.l.b16 %v1086
    %v2444 = vunpack.c.h.b16 %v1086
    %v2445 = vunpack.c.l.b16 %v1087
    %v2446 = vunpack.c.h.b16 %v1087
    %v2447 = vunpack.c.l.b16 %v1088
    %v2448 = vunpack.c.h.b16 %v1088
    %v2449 = vunpack.c.l.b16 %v1089
    %v2450 = vunpack.c.h.b16 %v1089
    %v2451 = vunpack.c.l.b16 %v1090
    %v2452 = vunpack.c.h.b16 %v1090
    %v2453 = vunpack.c.l.b16 %v1091
    %v2454 = vunpack.c.h.b16 %v1091
    %v2455 = vunpack.c.l.b16 %v1092
    %v2456 = vunpack.c.h.b16 %v1092
    %v2457 = vunpack.c.l.b16 %v1093
    %v2458 = vunpack.c.h.b16 %v1093
    %v2459 = vunpack.c.l.b16 %v1094
    %v2460 = vunpack.c.h.b16 %v1094
    %v2461 = vunpack.c.l.b16 %v1095
    %v2462 = vunpack.c.h.b16 %v1095
    %v2463 = vunpack.c.l.b16 %v1096
    %v2464 = vunpack.c.h.b16 %v1096
    %v2465 = vunpack.c.l.b16 %v1097
    %v2466 = vunpack.c.h.b16 %v1097
    %v2467 = vunpack.c.l.b16 %v1098
    %v2468 = vunpack.c.h.b16 %v1098
    %v2469 = vunpack.c.l.b16 %v1099
    %v2470 = vunpack.c.h.b16 %v1099
    %v2471 = vunpack.c.l.b16 %v1100
    %v2472 = vunpack.c.h.b16 %v1100
    %v2473 = vunpack.c.l.b16 %v1101
    %v2474 = vunpack.c.h.b16 %v1101
    %v2475 = vunpack.c.l.b16 %v1102
    %v2476 = vunpack.c.h.b16 %v1102
    %v2477 = vunpack.c.l.b16 %v1103
    %v2478 = vunpack.c.h.b16 %v1103
    %v2479 = vunpack.c.l.b16 %v1104
    %v2480 = vunpack.c.h.b16 %v1104
    %v2481 = vunpack.c.l.b16 %v1105
    %v2482 = vunpack.c.h.b16 %v1105
    %v2483 = vunpack.c.l.b16 %v1106
    %v2484 = vunpack.c.h.b16 %v1106
    %v2485 = vunpack.c.l.b16 %v1107
    %v2486 = vunpack.c.h.b16 %v1107
    %v2487 = vunpack.c.l.b16 %v1108
    %v2488 = vunpack.c.h.b16 %v1108
    %v2489 = vunpack.c.l.b16 %v1109
    %v2490 = vunpack.c.h.b16 %v1109
    %v2491 = vunpack.c.l.b16 %v1110
    %v2492 = vunpack.c.h.b16 %v1110
    %v2493 = vunpack.c.l.b16 %v1111
    %v2494 = vunpack.c.h.b16 %v1111
    %v2495 = vunpack.c.l.b16 %v1112
    %v2496 = vunpack.c.h.b16 %v1112
    %v2497 = vunpack.c.l.b16 %v1113
    %v2498 = vunpack.c.h.b16 %v1113
    %v2499 = vunpack.c.l.b16 %v1114
    %v2500 = vunpack.c.h.b16 %v1114
    %v2501 = vunpack.c.l.b16 %v1115
    %v2502 = vunpack.c.h.b16 %v1115
    %v2503 = vunpack.c.l.b16 %v1116
    %v2504 = vunpack.c.h.b16 %v1116
    %v2505 = vunpack.c.l.b16 %v1117
    %v2506 = vunpack.c.h.b16 %v1117
    %v2507 = vunpack.c.l.b16 %v1118
    %v2508 = vunpack.c.h.b16 %v1118
    %v2509 = vunpack.c.l.b16 %v1119
    %v2510 = vunpack.c.h.b16 %v1119
    %v2511 = vunpack.c.l.b16 %v1120
    %v2512 = vunpack.c.h.b16 %v1120
    %v2513 = vunpack.c.l.b16 %v1121
    %v2514 = vunpack.c.h.b16 %v1121
    %v2515 = vunpack.c.l.b16 %v1122
    %v2516 = vunpack.c.h.b16 %v1122
    %v2517 = vunpack.c.l.b16 %v1123
    %v2518 = vunpack.c.h.b16 %v1123
    %v2519 = vunpack.c.l.b16 %v1124
    %v2520 = vunpack.c.h.b16 %v1124
    %v2521 = vunpack.c.l.b16 %v1125
    %v2522 = vunpack.c.h.b16 %v1125
    %v2523 = vunpack.c.l.b16 %v1126
    %v2524 = vunpack.c.h.b16 %v1126
    %v2525 = vunpack.c.l.b16 %v1127
    %v2526 = vunpack.c.h.b16 %v1127
    %v2527 = vunpack.c.l.b16 %v1128
    %v2528 = vunpack.c.h.b16 %v1128
    %v2529 = vunpack.c.l.b16 %v1129
    %v2530 = vunpack.c.h.b16 %v1129
    %v2531 = vunpack.c.l.b16 %v1130
    %v2532 = vunpack.c.h.b16 %v1130
    %v2533 = vunpack.c.l.b16 %v1131
    %v2534 = vunpack.c.h.b16 %v1131
    %v2535 = vunpack.c.l.b16 %v1132
    %v2536 = vunpack.c.h.b16 %v1132
    %v2537 = vunpack.c.l.b16 %v1133
    %v2538 = vunpack.c.h.b16 %v1133
    %v2539 = vunpack.c.l.b16 %v1134
    %v2540 = vunpack.c.h.b16 %v1134
    %v2541 = vunpack.c.l.b16 %v1135
    %v2542 = vunpack.c.h.b16 %v1135
    %v2543 = vunpack.c.l.b16 %v1136
    %v2544 = vunpack.c.h.b16 %v1136
    %v2545 = vunpack.c.l.b16 %v1137
    %v2546 = vunpack.c.h.b16 %v1137
    %v2547 = vunpack.c.l.b16 %v1138
    %v2548 = vunpack.c.h.b16 %v1138
    %v2549 = vunpack.c.l.b16 %v1139
    %v2550 = vunpack.c.h.b16 %v1139
    %v2551 = vunpack.c.l.b16 %v1140
    %v2552 = vunpack.c.h.b16 %v1140
    %v2553 = vunpack.c.l.b16 %v1141
    %v2554 = vunpack.c.h.b16 %v1141
    %v2555 = vunpack.c.l.b16 %v1142
    %v2556 = vunpack.c.h.b16 %v1142
    %v2557 = vunpack.c.l.b16 %v1143
    %v2558 = vunpack.c.h.b16 %v1143
    %v2559 = vunpack.c.l.b16 %v1144
    %v2560 = vunpack.c.h.b16 %v1144
    %v2561 = vunpack.c.l.b16 %v1145
    %v2562 = vunpack.c.h.b16 %v1145
    %v2563 = vunpack.c.l.b16 %v1146
    %v2564 = vunpack.c.h.b16 %v1146
    %v2565 = vunpack.c.l.b16 %v1147
    %v2566 = vunpack.c.h.b16 %v1147
    %v2567 = vunpack.c.l.b16 %v1148
    %v2568 = vunpack.c.h.b16 %v1148
    %v2569 = vunpack.c.l.b16 %v1149
    %v2570 = vunpack.c.h.b16 %v1149
    %v2571 = vunpack.c.l.b16 %v1150
    %v2572 = vunpack.c.h.b16 %v1150
    %v2573 = vunpack.c.l.b16 %v1151
    %v2574 = vunpack.c.h.b16 %v1151
    %v2575 = vunpack.c.l.b16 %v1152
    %v2576 = vunpack.c.h.b16 %v1152
    %v2577 = vunpack.c.l.b16 %v1153
    %v2578 = vunpack.c.h.b16 %v1153
    %v2579 = vunpack.c.l.b16 %v1154
    %v2580 = vunpack.c.h.b16 %v1154
    %v2581 = vunpack.c.l.b16 %v1155
    %v2582 = vunpack.c.h.b16 %v1155
    %v2583 = vunpack.c.l.b16 %v1156
    %v2584 = vunpack.c.h.b16 %v1156
    %v2585 = vunpack.c.l.b16 %v1157
    %v2586 = vunpack.c.h.b16 %v1157
    %v2587 = vunpack.c.l.b16 %v1158
    %v2588 = vunpack.c.h.b16 %v1158
    %v2589 = vunpack.c.l.b16 %v1159
    %v2590 = vunpack.c.h.b16 %v1159
    %v2591 = vunpack.c.l.b16 %v1160
    %v2592 = vunpack.c.h.b16 %v1160
    %v2593 = vunpack.c.l.b16 %v1161
    %v2594 = vunpack.c.h.b16 %v1161
    %v2595 = vunpack.c.l.b16 %v1162
    %v2596 = vunpack.c.h.b16 %v1162
    %v2597 = vunpack.c.l.b16 %v1163
    %v2598 = vunpack.c.h.b16 %v1163
    %v2599 = vunpack.c.l.b16 %v1164
    %v2600 = vunpack.c.h.b16 %v1164
    %v2601 = vunpack.c.l.b16 %v1165
    %v2602 = vunpack.c.h.b16 %v1165
    %v2603 = vunpack.c.l.b16 %v1166
    %v2604 = vunpack.c.h.b16 %v1166
    %v2605 = vunpack.c.l.b16 %v1167
    %v2606 = vunpack.c.h.b16 %v1167
    %v2607 = vunpack.c.l.b16 %v1168
    %v2608 = vunpack.c.h.b16 %v1168
    %v2609 = vunpack.c.l.b16 %v1169
    %v2610 = vunpack.c.h.b16 %v1169
    %v2611 = vunpack.c.l.b16 %v1170
    %v2612 = vunpack.c.h.b16 %v1170
    %v2613 = vunpack.c.l.b16 %v1171
    %v2614 = vunpack.c.h.b16 %v1171
    %v2615 = vunpack.c.l.b16 %v1172
    %v2616 = vunpack.c.h.b16 %v1172
    %v2617 = vunpack.c.l.b16 %v1173
    %v2618 = vunpack.c.h.b16 %v1173
    %v2619 = vunpack.c.l.b16 %v1174
    %v2620 = vunpack.c.h.b16 %v1174
    %v2621 = vunpack.c.l.b16 %v1175
    %v2622 = vunpack.c.h.b16 %v1175
    %v2623 = vunpack.c.l.b16 %v1176
    %v2624 = vunpack.c.h.b16 %v1176
    %v2625 = vunpack.c.l.b16 %v1177
    %v2626 = vunpack.c.h.b16 %v1177
    %v2627 = vunpack.c.l.b16 %v1178
    %v2628 = vunpack.c.h.b16 %v1178
    %v2629 = vunpack.c.l.b16 %v1179
    %v2630 = vunpack.c.h.b16 %v1179
    %v2631 = vunpack.c.l.b16 %v1180
    %v2632 = vunpack.c.h.b16 %v1180
    %v2633 = vunpack.c.l.b16 %v1181
    %v2634 = vunpack.c.h.b16 %v1181
    %v2635 = vunpack.c.l.b16 %v1182
    %v2636 = vunpack.c.h.b16 %v1182
    %v2637 = vunpack.c.l.b16 %v1183
    %v2638 = vunpack.c.h.b16 %v1183
    %v2639 = vunpack.c.l.b16 %v1184
    %v2640 = vunpack.c.h.b16 %v1184
    %v2641 = vunpack.c.l.b16 %v1185
    %v2642 = vunpack.c.h.b16 %v1185
    %v2643 = vunpack.c.l.b16 %v1186
    %v2644 = vunpack.c.h.b16 %v1186
    %v2645 = vunpack.c.l.b16 %v1187
    %v2646 = vunpack.c.h.b16 %v1187
    %v2647 = vunpack.c.l.b16 %v1188
    %v2648 = vunpack.c.h.b16 %v1188
    %v2649 = vunpack.c.l.b16 %v1189
    %v2650 = vunpack.c.h.b16 %v1189
    %v2651 = vunpack.c.l.b16 %v1190
    %v2652 = vunpack.c.h.b16 %v1190
    %v2653 = vunpack.c.l.b16 %v1191
    %v2654 = vunpack.c.h.b16 %v1191
    %v2655 = vunpack.c.l.b16 %v1192
    %v2656 = vunpack.c.h.b16 %v1192
    %v2657 = vunpack.c.l.b16 %v1193
    %v2658 = vunpack.c.h.b16 %v1193
    %v2659 = vunpack.c.l.b16 %v1194
    %v2660 = vunpack.c.h.b16 %v1194
    %v2661 = vunpack.c.l.b16 %v1195
    %v2662 = vunpack.c.h.b16 %v1195
    %v2663 = vunpack.c.l.b16 %v1196
    %v2664 = vunpack.c.h.b16 %v1196
    %v2665 = vunpack.c.l.b16 %v1197
    %v2666 = vunpack.c.h.b16 %v1197
    %v2667 = vunpack.c.l.b16 %v1198
    %v2668 = vunpack.c.h.b16 %v1198
    %v2669 = vunpack.c.l.b16 %v1199
    %v2670 = vunpack.c.h.b16 %v1199
    %v2671 = vunpack.c.l.b16 %v1200
    %v2672 = vunpack.c.h.b16 %v1200
    %v2673 = vunpack.c.l.b16 %v1201
    %v2674 = vunpack.c.h.b16 %v1201
    %v2675 = vunpack.c.l.b16 %v1202
    %v2676 = vunpack.c.h.b16 %v1202
    %v2677 = vunpack.c.l.b16 %v1203
    %v2678 = vunpack.c.h.b16 %v1203
    %v2679 = vunpack.c.l.b16 %v1204
    %v2680 = vunpack.c.h.b16 %v1204
    %v2681 = vunpack.c.l.b16 %v1205
    %v2682 = vunpack.c.h.b16 %v1205
    %v2683 = vunpack.c.l.b16 %v1206
    %v2684 = vunpack.c.h.b16 %v1206
    %v2685 = vunpack.c.l.b16 %v1207
    %v2686 = vunpack.c.h.b16 %v1207
    %v2687 = vunpack.c.l.b16 %v1208
    %v2688 = vunpack.c.h.b16 %v1208
    %v2689 = vunpack.c.l.b16 %v1209
    %v2690 = vunpack.c.h.b16 %v1209
    %v2691 = vunpack.c.l.b16 %v1210
    %v2692 = vunpack.c.h.b16 %v1210
    %v2693 = vunpack.c.l.b16 %v1211
    %v2694 = vunpack.c.h.b16 %v1211
    %v2695 = vunpack.c.l.b16 %v1212
    %v2696 = vunpack.c.h.b16 %v1212
    %v2697 = vunpack.c.l.b16 %v1213
    %v2698 = vunpack.c.h.b16 %v1213
    %v2699 = vunpack.c.l.b16 %v1214
    %v2700 = vunpack.c.h.b16 %v1214
    %v2701 = vunpack.c.l.b16 %v1215
    %v2702 = vunpack.c.h.b16 %v1215
    %v2703 = vunpack.c.l.b16 %v1216
    %v2704 = vunpack.c.h.b16 %v1216
    %v2705 = vunpack.c.l.b16 %v1217
    %v2706 = vunpack.c.h.b16 %v1217
    %v2707 = vunpack.c.l.b16 %v1218
    %v2708 = vunpack.c.h.b16 %v1218
    %v2709 = vunpack.c.l.b16 %v1219
    %v2710 = vunpack.c.h.b16 %v1219
    %v2711 = vunpack.c.l.b16 %v1220
    %v2712 = vunpack.c.h.b16 %v1220
    %v2713 = vunpack.c.l.b16 %v1221
    %v2714 = vunpack.c.h.b16 %v1221
    %v2715 = vunpack.c.l.b16 %v1222
    %v2716 = vunpack.c.h.b16 %v1222
    %v2717 = vunpack.c.l.b16 %v1223
    %v2718 = vunpack.c.h.b16 %v1223
    %v2719 = vunpack.c.l.b16 %v1224
    %v2720 = vunpack.c.h.b16 %v1224
    %v2721 = vunpack.c.l.b16 %v1225
    %v2722 = vunpack.c.h.b16 %v1225
    %v2723 = vunpack.c.l.b16 %v1226
    %v2724 = vunpack.c.h.b16 %v1226
    %v2725 = vunpack.c.l.b16 %v1227
    %v2726 = vunpack.c.h.b16 %v1227
    %v2727 = vunpack.c.l.b16 %v1228
    %v2728 = vunpack.c.h.b16 %v1228
    %v2729 = vunpack.c.l.b16 %v1229
    %v2730 = vunpack.c.h.b16 %v1229
    %v2731 = vunpack.c.l.b16 %v1230
    %v2732 = vunpack.c.h.b16 %v1230
    %v2733 = vunpack.c.l.b16 %v1231
    %v2734 = vunpack.c.h.b16 %v1231
    %v2735 = vunpack.c.l.b16 %v1232
    %v2736 = vunpack.c.h.b16 %v1232
    %v2737 = vunpack.c.l.b16 %v1233
    %v2738 = vunpack.c.h.b16 %v1233
    %v2739 = vunpack.c.l.b16 %v1234
    %v2740 = vunpack.c.h.b16 %v1234
    %v2741 = vunpack.c.l.b16 %v1235
    %v2742 = vunpack.c.h.b16 %v1235
    %v2743 = vunpack.c.l.b16 %v1236
    %v2744 = vunpack.c.h.b16 %v1236
    %v2745 = vunpack.c.l.b16 %v1237
    %v2746 = vunpack.c.h.b16 %v1237
    %v2747 = vunpack.c.l.b16 %v1238
    %v2748 = vunpack.c.h.b16 %v1238
    %v2749 = vunpack.c.l.b16 %v1239
    %v2750 = vunpack.c.h.b16 %v1239
    %v2751 = vunpack.c.l.b16 %v1240
    %v2752 = vunpack.c.h.b16 %v1240
    %v2753 = vunpack.c.l.b16 %v1241
    %v2754 = vunpack.c.h.b16 %v1241
    %v2755 = vunpack.c.l.b16 %v1242
    %v2756 = vunpack.c.h.b16 %v1242
    %v2757 = vunpack.c.l.b16 %v1243
    %v2758 = vunpack.c.h.b16 %v1243
    %v2759 = vunpack.c.l.b16 %v1244
    %v2760 = vunpack.c.h.b16 %v1244
    %v2761 = vunpack.c.l.b16 %v1245
    %v2762 = vunpack.c.h.b16 %v1245
    %v2763 = vunpack.c.l.b16 %v1246
    %v2764 = vunpack.c.h.b16 %v1246
    %v2765 = vunpack.c.l.b16 %v1247
    %v2766 = vunpack.c.h.b16 %v1247
    %v2767 = vunpack.c.l.b16 %v1248
    %v2768 = vunpack.c.h.b16 %v1248
    %v2769 = vunpack.c.l.b16 %v1249
    %v2770 = vunpack.c.h.b16 %v1249
    %v2771 = vunpack.c.l.b16 %v1250
    %v2772 = vunpack.c.h.b16 %v1250
    %v2773 = vunpack.c.l.b16 %v1251
    %v2774 = vunpack.c.h.b16 %v1251
    %v2775 = vunpack.c.l.b16 %v1252
    %v2776 = vunpack.c.h.b16 %v1252
    %v2777 = vunpack.c.l.b16 %v1253
    %v2778 = vunpack.c.h.b16 %v1253
    %v2779 = vunpack.c.l.b16 %v1254
    %v2780 = vunpack.c.h.b16 %v1254
    %v2781 = vunpack.c.l.b16 %v1255
    %v2782 = vunpack.c.h.b16 %v1255
    %v2783 = vunpack.c.l.b16 %v1256
    %v2784 = vunpack.c.h.b16 %v1256
    %v2785 = vunpack.c.l.b16 %v1257
    %v2786 = vunpack.c.h.b16 %v1257
    %v2787 = vunpack.c.l.b16 %v1258
    %v2788 = vunpack.c.h.b16 %v1258
    %v2789 = vunpack.c.l.b16 %v1259
    %v2790 = vunpack.c.h.b16 %v1259
    %v2791 = vunpack.c.l.b16 %v1260
    %v2792 = vunpack.c.h.b16 %v1260
    %v2793 = vunpack.c.l.b16 %v1261
    %v2794 = vunpack.c.h.b16 %v1261
    %v2795 = vunpack.c.l.b16 %v1262
    %v2796 = vunpack.c.h.b16 %v1262
    %v2797 = vunpack.c.l.b16 %v1263
    %v2798 = vunpack.c.h.b16 %v1263
    %v2799 = vunpack.c.l.b16 %v1264
    %v2800 = vunpack.c.h.b16 %v1264
    %v2801 = vunpack.c.l.b16 %v1265
    %v2802 = vunpack.c.h.b16 %v1265
    %v2803 = vunpack.c.l.b16 %v1266
    %v2804 = vunpack.c.h.b16 %v1266
    %v2805 = vunpack.c.l.b16 %v1267
    %v2806 = vunpack.c.h.b16 %v1267
    %v2807 = vunpack.c.l.b16 %v1268
    %v2808 = vunpack.c.h.b16 %v1268
    %v2809 = vunpack.c.l.b16 %v1269
    %v2810 = vunpack.c.h.b16 %v1269
    %v2811 = vunpack.c.l.b16 %v1270
    %v2812 = vunpack.c.h.b16 %v1270
    %v2813 = vunpack.c.l.b16 %v1271
    %v2814 = vunpack.c.h.b16 %v1271
    %v2815 = vunpack.c.l.b16 %v1272
    %v2816 = vunpack.c.h.b16 %v1272
    %v2817 = vunpack.c.l.b16 %v1273
    %v2818 = vunpack.c.h.b16 %v1273
    %v2819 = vunpack.c.l.b16 %v1274
    %v2820 = vunpack.c.h.b16 %v1274
    %v2821 = vunpack.c.l.b16 %v1275
    %v2822 = vunpack.c.h.b16 %v1275
    %v2823 = vunpack.c.l.b16 %v1276
    %v2824 = vunpack.c.h.b16 %v1276
    %v2825 = vunpack.c.l.b16 %v1277
    %v2826 = vunpack.c.h.b16 %v1277
    %v2827 = vunpack.c.l.b16 %v1278
    %v2828 = vunpack.c.h.b16 %v1278
    %v2829 = vunpack.c.l.b16 %v1279
    %v2830 = vunpack.c.h.b16 %v1279
    %v2831 = vunpack.c.l.b16 %v1280
    %v2832 = vunpack.c.h.b16 %v1280
    %v2833 = vunpack.c.l.b16 %v1281
    %v2834 = vunpack.c.h.b16 %v1281
    %v2835 = vunpack.c.l.b16 %v1282
    %v2836 = vunpack.c.h.b16 %v1282
    %v2837 = vunpack.c.l.b16 %v1283
    %v2838 = vunpack.c.h.b16 %v1283
    %v2839 = vunpack.c.l.b16 %v1284
    %v2840 = vunpack.c.h.b16 %v1284
    %v2841 = vunpack.c.l.b16 %v1285
    %v2842 = vunpack.c.h.b16 %v1285
    %v2843 = vunpack.c.l.b16 %v1286
    %v2844 = vunpack.c.h.b16 %v1286
    %v2845 = vpack.c.b16 %v1825, %v1821
    %v2846 = vpack.c.b16 %v1826, %v1822
    %v2847 = vpack.c.b16 %v1827, %v1823
    %v2848 = vpack.c.b16 %v1828, %v1824
    %v2849 = vpack.c.b16 %v1833, %v1829
    %v2850 = vpack.c.b16 %v1834, %v1830
    %v2851 = vpack.c.b16 %v1835, %v1831
    %v2852 = vpack.c.b16 %v1836, %v1832
    %v2853 = vpack.c.b16 %v1841, %v1837
    %v2854 = vpack.c.b16 %v1842, %v1838
    %v2855 = vpack.c.b16 %v1843, %v1839
    %v2856 = vpack.c.b16 %v1844, %v1840
    %v2857 = vpack.c.b16 %v1849, %v1845
    %v2858 = vpack.c.b16 %v1850, %v1846
    %v2859 = vpack.c.b16 %v1851, %v1847
    %v2860 = vpack.c.b16 %v1852, %v1848
    %v2861 = vpack.c.b16 %v1857, %v1853
    %v2862 = vpack.c.b16 %v1858, %v1854
    %v2863 = vpack.c.b16 %v1859, %v1855
    %v2864 = vpack.c.b16 %v1860, %v1856
    %v2865 = vpack.c.b16 %v1865, %v1861
    %v2866 = vpack.c.b16 %v1866, %v1862
    %v2867 = vpack.c.b16 %v1867, %v1863
    %v2868 = vpack.c.b16 %v1868, %v1864
    %v2869 = vpack.c.b16 %v1873, %v1869
    %v2870 = vpack.c.b16 %v1874, %v1870
    %v2871 = vpack.c.b16 %v1875, %v1871
    %v2872 = vpack.c.b16 %v1876, %v1872
    %v2873 = vpack.c.b16 %v1881, %v1877
    %v2874 = vpack.c.b16 %v1882, %v1878
    %v2875 = vpack.c.b16 %v1883, %v1879
    %v2876 = vpack.c.b16 %v1884, %v1880
    %v2877 = vpack.c.b16 %v1889, %v1885
    %v2878 = vpack.c.b16 %v1890, %v1886
    %v2879 = vpack.c.b16 %v1891, %v1887
    %v2880 = vpack.c.b16 %v1892, %v1888
    %v2881 = vpack.c.b16 %v1897, %v1893
    %v2882 = vpack.c.b16 %v1898, %v1894
    %v2883 = vpack.c.b16 %v1899, %v1895
    %v2884 = vpack.c.b16 %v1900, %v1896
    %v2885 = vpack.c.b16 %v1905, %v1901
    %v2886 = vpack.c.b16 %v1906, %v1902
    %v2887 = vpack.c.b16 %v1907, %v1903
    %v2888 = vpack.c.b16 %v1908, %v1904
    %v2889 = vpack.c.b16 %v1913, %v1909
    %v2890 = vpack.c.b16 %v1914, %v1910
    %v2891 = vpack.c.b16 %v1915, %v1911
    %v2892 = vpack.c.b16 %v1916, %v1912
    %v2893 = vpack.c.b16 %v1921, %v1917
    %v2894 = vpack.c.b16 %v1922, %v1918
    %v2895 = vpack.c.b16 %v1923, %v1919
    %v2896 = vpack.c.b16 %v1924, %v1920
    %v2897 = vpack.c.b16 %v1929, %v1925
    %v2898 = vpack.c.b16 %v1930, %v1926
    %v2899 = vpack.c.b16 %v1931, %v1927
    %v2900 = vpack.c.b16 %v1932, %v1928
    %v2901 = vpack.c.b16 %v1937, %v1933
    %v2902 = vpack.c.b16 %v1938, %v1934
    %v2903 = vpack.c.b16 %v1939, %v1935
    %v2904 = vpack.c.b16 %v1940, %v1936
    %v2905 = vpack.c.b16 %v1945, %v1941
    %v2906 = vpack.c.b16 %v1946, %v1942
    %v2907 = vpack.c.b16 %v1947, %v1943
    %v2908 = vpack.c.b16 %v1948, %v1944
    %v2909 = vpack.c.b16 %v1953, %v1949
    %v2910 = vpack.c.b16 %v1954, %v1950
    %v2911 = vpack.c.b16 %v1955, %v1951
    %v2912 = vpack.c.b16 %v1956, %v1952
    %v2913 = vpack.c.b16 %v1961, %v1957
    %v2914 = vpack.c.b16 %v1962, %v1958
    %v2915 = vpack.c.b16 %v1963, %v1959
    %v2916 = vpack.c.b16 %v1964, %v1960
    %v2917 = vpack.c.b16 %v1969, %v1965
    %v2918 = vpack.c.b16 %v1970, %v1966
    %v2919 = vpack.c.b16 %v1971, %v1967
    %v2920 = vpack.c.b16 %v1972, %v1968
    %v2921 = vpack.c.b16 %v1977, %v1973
    %v2922 = vpack.c.b16 %v1978, %v1974
    %v2923 = vpack.c.b16 %v1979, %v1975
    %v2924 = vpack.c.b16 %v1980, %v1976
    %v2925 = vpack.c.b16 %v1985, %v1981
    %v2926 = vpack.c.b16 %v1986, %v1982
    %v2927 = vpack.c.b16 %v1987, %v1983
    %v2928 = vpack.c.b16 %v1988, %v1984
    %v2929 = vpack.c.b16 %v1993, %v1989
    %v2930 = vpack.c.b16 %v1994, %v1990
    %v2931 = vpack.c.b16 %v1995, %v1991
    %v2932 = vpack.c.b16 %v1996, %v1992
    %v2933 = vpack.c.b16 %v2001, %v1997
    %v2934 = vpack.c.b16 %v2002, %v1998
    %v2935 = vpack.c.b16 %v2003, %v1999
    %v2936 = vpack.c.b16 %v2004, %v2000
    %v2937 = vpack.c.b16 %v2009, %v2005
    %v2938 = vpack.c.b16 %v2010, %v2006
    %v2939 = vpack.c.b16 %v2011, %v2007
    %v2940 = vpack.c.b16 %v2012, %v2008
    %v2941 = vpack.c.b16 %v2017, %v2013
    %v2942 = vpack.c.b16 %v2018, %v2014
    %v2943 = vpack.c.b16 %v2019, %v2015
    %v2944 = vpack.c.b16 %v2020, %v2016
    %v2945 = vpack.c.b16 %v2025, %v2021
    %v2946 = vpack.c.b16 %v2026, %v2022
    %v2947 = vpack.c.b16 %v2027, %v2023
    %v2948 = vpack.c.b16 %v2028, %v2024
    %v2949 = vpack.c.b16 %v2033, %v2029
    %v2950 = vpack.c.b16 %v2034, %v2030
    %v2951 = vpack.c.b16 %v2035, %v2031
    %v2952 = vpack.c.b16 %v2036, %v2032
    %v2953 = vpack.c.b16 %v2041, %v2037
    %v2954 = vpack.c.b16 %v2042, %v2038
    %v2955 = vpack.c.b16 %v2043, %v2039
    %v2956 = vpack.c.b16 %v2044, %v2040
    %v2957 = vpack.c.b16 %v2049, %v2045
    %v2958 = vpack.c.b16 %v2050, %v2046
    %v2959 = vpack.c.b16 %v2051, %v2047
    %v2960 = vpack.c.b16 %v2052, %v2048
    %v2961 = vpack.c.b16 %v2057, %v2053
    %v2962 = vpack.c.b16 %v2058, %v2054
    %v2963 = vpack.c.b16 %v2059, %v2055
    %v2964 = vpack.c.b16 %v2060, %v2056
    %v2965 = vpack.c.b16 %v2065, %v2061
    %v2966 = vpack.c.b16 %v2066, %v2062
    %v2967 = vpack.c.b16 %v2067, %v2063
    %v2968 = vpack.c.b16 %v2068, %v2064
    %v2969 = vpack.c.b16 %v2073, %v2069
    %v2970 = vpack.c.b16 %v2074, %v2070
    %v2971 = vpack.c.b16 %v2075, %v2071
    %v2972 = vpack.c.b16 %v2076, %v2072
    %v2973 = vpack.c.b16 %v2081, %v2077
    %v2974 = vpack.c.b16 %v2082, %v2078
    %v2975 = vpack.c.b16 %v2083, %v2079
    %v2976 = vpack.c.b16 %v2084, %v2080
    %v2977 = vpack.c.b16 %v2089, %v2085
    %v2978 = vpack.c.b16 %v2090, %v2086
    %v2979 = vpack.c.b16 %v2091, %v2087
    %v2980 = vpack.c.b16 %v2092, %v2088
    %v2981 = vpack.c.b16 %v2097, %v2093
    %v2982 = vpack.c.b16 %v2098, %v2094
    %v2983 = vpack.c.b16 %v2099, %v2095
    %v2984 = vpack.c.b16 %v2100, %v2096
    %v2985 = vpack.c.b16 %v2105, %v2101
    %v2986 = vpack.c.b16 %v2106, %v2102
    %v2987 = vpack.c.b16 %v2107, %v2103
    %v2988 = vpack.c.b16 %v2108, %v2104
    %v2989 = vpack.c.b16 %v2113, %v2109
    %v2990 = vpack.c.b16 %v2114, %v2110
    %v2991 = vpack.c.b16 %v2115, %v2111
    %v2992 = vpack.c.b16 %v2116, %v2112
    %v2993 = vpack.c.b16 %v2121, %v2117
    %v2994 = vpack.c.b16 %v2122, %v2118
    %v2995 = vpack.c.b16 %v2123, %v2119
    %v2996 = vpack.c.b16 %v2124, %v2120
    %v2997 = vpack.c.b16 %v2129, %v2125
    %v2998 = vpack.c.b16 %v2130, %v2126
    %v2999 = vpack.c.b16 %v2131, %v2127
    %v3000 = vpack.c.b16 %v2132, %v2128
    %v3001 = vpack.c.b16 %v2137, %v2133
    %v3002 = vpack.c.b16 %v2138, %v2134
    %v3003 = vpack.c.b16 %v2139, %v2135
    %v3004 = vpack.c.b16 %v2140, %v2136
    %v3005 = vpack.c.b16 %v2145, %v2141
    %v3006 = vpack.c.b16 %v2146, %v2142
    %v3007 = vpack.c.b16 %v2147, %v2143
    %v3008 = vpack.c.b16 %v2148, %v2144
    %v3009 = vpack.c.b16 %v2153, %v2149
    %v3010 = vpack.c.b16 %v2154, %v2150
    %v3011 = vpack.c.b16 %v2155, %v2151
    %v3012 = vpack.c.b16 %v2156, %v2152
    %v3013 = vpack.c.b16 %v2161, %v2157
    %v3014 = vpack.c.b16 %v2162, %v2158
    %v3015 = vpack.c.b16 %v2163, %v2159
    %v3016 = vpack.c.b16 %v2164, %v2160
    %v3017 = vpack.c.b16 %v2169, %v2165
    %v3018 = vpack.c.b16 %v2170, %v2166
    %v3019 = vpack.c.b16 %v2171, %v2167
    %v3020 = vpack.c.b16 %v2172, %v2168
    %v3021 = vpack.c.b16 %v2177, %v2173
    %v3022 = vpack.c.b16 %v2178, %v2174
    %v3023 = vpack.c.b16 %v2179, %v2175
    %v3024 = vpack.c.b16 %v2180, %v2176
    %v3025 = vpack.c.b16 %v2185, %v2181
    %v3026 = vpack.c.b16 %v2186, %v2182
    %v3027 = vpack.c.b16 %v2187, %v2183
    %v3028 = vpack.c.b16 %v2188, %v2184
    %v3029 = vpack.c.b16 %v2193, %v2189
    %v3030 = vpack.c.b16 %v2194, %v2190
    %v3031 = vpack.c.b16 %v2195, %v2191
    %v3032 = vpack.c.b16 %v2196, %v2192
    %v3033 = vpack.c.b16 %v2201, %v2197
    %v3034 = vpack.c.b16 %v2202, %v2198
    %v3035 = vpack.c.b16 %v2203, %v2199
    %v3036 = vpack.c.b16 %v2204, %v2200
    %v3037 = vpack.c.b16 %v2209, %v2205
    %v3038 = vpack.c.b16 %v2210, %v2206
    %v3039 = vpack.c.b16 %v2211, %v2207
    %v3040 = vpack.c.b16 %v2212, %v2208
    %v3041 = vpack.c.b16 %v2217, %v2213
    %v3042 = vpack.c.b16 %v2218, %v2214
    %v3043 = vpack.c.b16 %v2219, %v2215
    %v3044 = vpack.c.b16 %v2220, %v2216
    %v3045 = vpack.c.b16 %v2225, %v2221
    %v3046 = vpack.c.b16 %v2226, %v2222
    %v3047 = vpack.c.b16 %v2227, %v2223
    %v3048 = vpack.c.b16 %v2228, %v2224
    %v3049 = vpack.c.b16 %v2233, %v2229
    %v3050 = vpack.c.b16 %v2234, %v2230
    %v3051 = vpack.c.b16 %v2235, %v2231
    %v3052 = vpack.c.b16 %v2236, %v2232
    %v3053 = vpack.c.b16 %v2241, %v2237
    %v3054 = vpack.c.b16 %v2242, %v2238
    %v3055 = vpack.c.b16 %v2243, %v2239
    %v3056 = vpack.c.b16 %v2244, %v2240
    %v3057 = vpack.c.b16 %v2249, %v2245
    %v3058 = vpack.c.b16 %v2250, %v2246
    %v3059 = vpack.c.b16 %v2251, %v2247
    %v3060 = vpack.c.b16 %v2252, %v2248
    %v3061 = vpack.c.b16 %v2257, %v2253
    %v3062 = vpack.c.b16 %v2258, %v2254
    %v3063 = vpack.c.b16 %v2259, %v2255
    %v3064 = vpack.c.b16 %v2260, %v2256
    %v3065 = vpack.c.b16 %v2265, %v2261
    %v3066 = vpack.c.b16 %v2266, %v2262
    %v3067 = vpack.c.b16 %v2267, %v2263
    %v3068 = vpack.c.b16 %v2268, %v2264
    %v3069 = vpack.c.b16 %v2273, %v2269
    %v3070 = vpack.c.b16 %v2274, %v2270
    %v3071 = vpack.c.b16 %v2275, %v2271
    %v3072 = vpack.c.b16 %v2276, %v2272
    %v3073 = vpack.c.b16 %v2281, %v2277
    %v3074 = vpack.c.b16 %v2282, %v2278
    %v3075 = vpack.c.b16 %v2283, %v2279
    %v3076 = vpack.c.b16 %v2284, %v2280
    %v3077 = vpack.c.b16 %v2289, %v2285
    %v3078 = vpack.c.b16 %v2290, %v2286
    %v3079 = vpack.c.b16 %v2291, %v2287
    %v3080 = vpack.c.b16 %v2292, %v2288
    %v3081 = vpack.c.b16 %v2297, %v2293
    %v3082 = vpack.c.b16 %v2298, %v2294
    %v3083 = vpack.c.b16 %v2299, %v2295
    %v3084 = vpack.c.b16 %v2300, %v2296
    %v3085 = vpack.c.b16 %v2305, %v2301
    %v3086 = vpack.c.b16 %v2306, %v2302
    %v3087 = vpack.c.b16 %v2307, %v2303
    %v3088 = vpack.c.b16 %v2308, %v2304
    %v3089 = vpack.c.b16 %v2313, %v2309
    %v3090 = vpack.c.b16 %v2314, %v2310
    %v3091 = vpack.c.b16 %v2315, %v2311
    %v3092 = vpack.c.b16 %v2316, %v2312
    %v3093 = vpack.c.b16 %v2321, %v2317
    %v3094 = vpack.c.b16 %v2322, %v2318
    %v3095 = vpack.c.b16 %v2323, %v2319
    %v3096 = vpack.c.b16 %v2324, %v2320
    %v3097 = vpack.c.b16 %v2329, %v2325
    %v3098 = vpack.c.b16 %v2330, %v2326
    %v3099 = vpack.c.b16 %v2331, %v2327
    %v3100 = vpack.c.b16 %v2332, %v2328
    %v3101 = vpack.c.b16 %v2337, %v2333
    %v3102 = vpack.c.b16 %v2338, %v2334
    %v3103 = vpack.c.b16 %v2339, %v2335
    %v3104 = vpack.c.b16 %v2340, %v2336
    %v3105 = vpack.c.b16 %v2345, %v2341
    %v3106 = vpack.c.b16 %v2346, %v2342
    %v3107 = vpack.c.b16 %v2347, %v2343
    %v3108 = vpack.c.b16 %v2348, %v2344
    %v3109 = vpack.c.b16 %v2353, %v2349
    %v3110 = vpack.c.b16 %v2354, %v2350
    %v3111 = vpack.c.b16 %v2355, %v2351
    %v3112 = vpack.c.b16 %v2356, %v2352
    %v3113 = vpack.c.b16 %v2361, %v2357
    %v3114 = vpack.c.b16 %v2362, %v2358
    %v3115 = vpack.c.b16 %v2363, %v2359
    %v3116 = vpack.c.b16 %v2364, %v2360
    %v3117 = vpack.c.b16 %v2369, %v2365
    %v3118 = vpack.c.b16 %v2370, %v2366
    %v3119 = vpack.c.b16 %v2371, %v2367
    %v3120 = vpack.c.b16 %v2372, %v2368
    %v3121 = vpack.c.b16 %v2377, %v2373
    %v3122 = vpack.c.b16 %v2378, %v2374
    %v3123 = vpack.c.b16 %v2379, %v2375
    %v3124 = vpack.c.b16 %v2380, %v2376
    %v3125 = vpack.c.b16 %v2385, %v2381
    %v3126 = vpack.c.b16 %v2386, %v2382
    %v3127 = vpack.c.b16 %v2387, %v2383
    %v3128 = vpack.c.b16 %v2388, %v2384
    %v3129 = vpack.c.b16 %v2393, %v2389
    %v3130 = vpack.c.b16 %v2394, %v2390
    %v3131 = vpack.c.b16 %v2395, %v2391
    %v3132 = vpack.c.b16 %v2396, %v2392
    %v3133 = vpack.c.b16 %v2401, %v2397
    %v3134 = vpack.c.b16 %v2402, %v2398
    %v3135 = vpack.c.b16 %v2403, %v2399
    %v3136 = vpack.c.b16 %v2404, %v2400
    %v3137 = vpack.c.b16 %v2409, %v2405
    %v3138 = vpack.c.b16 %v2410, %v2406
    %v3139 = vpack.c.b16 %v2411, %v2407
    %v3140 = vpack.c.b16 %v2412, %v2408
    %v3141 = vpack.c.b16 %v2417, %v2413
    %v3142 = vpack.c.b16 %v2418, %v2414
    %v3143 = vpack.c.b16 %v2419, %v2415
    %v3144 = vpack.c.b16 %v2420, %v2416
    %v3145 = vpack.c.b16 %v2425, %v2421
    %v3146 = vpack.c.b16 %v2426, %v2422
    %v3147 = vpack.c.b16 %v2427, %v2423
    %v3148 = vpack.c.b16 %v2428, %v2424
    %v3149 = vpack.c.b16 %v2433, %v2429
    %v3150 = vpack.c.b16 %v2434, %v2430
    %v3151 = vpack.c.b16 %v2435, %v2431
    %v3152 = vpack.c.b16 %v2436, %v2432
    %v3153 = vpack.c.b16 %v2441, %v2437
    %v3154 = vpack.c.b16 %v2442, %v2438
    %v3155 = vpack.c.b16 %v2443, %v2439
    %v3156 = vpack.c.b16 %v2444, %v2440
    %v3157 = vpack.c.b16 %v2449, %v2445
    %v3158 = vpack.c.b16 %v2450, %v2446
    %v3159 = vpack.c.b16 %v2451, %v2447
    %v3160 = vpack.c.b16 %v2452, %v2448
    %v3161 = vpack.c.b16 %v2457, %v2453
    %v3162 = vpack.c.b16 %v2458, %v2454
    %v3163 = vpack.c.b16 %v2459, %v2455
    %v3164 = vpack.c.b16 %v2460, %v2456
    %v3165 = vpack.c.b16 %v2465, %v2461
    %v3166 = vpack.c.b16 %v2466, %v2462
    %v3167 = vpack.c.b16 %v2467, %v2463
    %v3168 = vpack.c.b16 %v2468, %v2464
    %v3169 = vpack.c.b16 %v2473, %v2469
    %v3170 = vpack.c.b16 %v2474, %v2470
    %v3171 = vpack.c.b16 %v2475, %v2471
    %v3172 = vpack.c.b16 %v2476, %v2472
    %v3173 = vpack.c.b16 %v2481, %v2477
    %v3174 = vpack.c.b16 %v2482, %v2478
    %v3175 = vpack.c.b16 %v2483, %v2479
    %v3176 = vpack.c.b16 %v2484, %v2480
    %v3177 = vpack.c.b16 %v2489, %v2485
    %v3178 = vpack.c.b16 %v2490, %v2486
    %v3179 = vpack.c.b16 %v2491, %v2487
    %v3180 = vpack.c.b16 %v2492, %v2488
    %v3181 = vpack.c.b16 %v2497, %v2493
    %v3182 = vpack.c.b16 %v2498, %v2494
    %v3183 = vpack.c.b16 %v2499, %v2495
    %v3184 = vpack.c.b16 %v2500, %v2496
    %v3185 = vpack.c.b16 %v2505, %v2501
    %v3186 = vpack.c.b16 %v2506, %v2502
    %v3187 = vpack.c.b16 %v2507, %v2503
    %v3188 = vpack.c.b16 %v2508, %v2504
    %v3189 = vpack.c.b16 %v2513, %v2509
    %v3190 = vpack.c.b16 %v2514, %v2510
    %v3191 = vpack.c.b16 %v2515, %v2511
    %v3192 = vpack.c.b16 %v2516, %v2512
    %v3193 = vpack.c.b16 %v2521, %v2517
    %v3194 = vpack.c.b16 %v2522, %v2518
    %v3195 = vpack.c.b16 %v2523, %v2519
    %v3196 = vpack.c.b16 %v2524, %v2520
    %v3197 = vpack.c.b16 %v2529, %v2525
    %v3198 = vpack.c.b16 %v2530, %v2526
    %v3199 = vpack.c.b16 %v2531, %v2527
    %v3200 = vpack.c.b16 %v2532, %v2528
    %v3201 = vpack.c.b16 %v2537, %v2533
    %v3202 = vpack.c.b16 %v2538, %v2534
    %v3203 = vpack.c.b16 %v2539, %v2535
    %v3204 = vpack.c.b16 %v2540, %v2536
    %v3205 = vpack.c.b16 %v2545, %v2541
    %v3206 = vpack.c.b16 %v2546, %v2542
    %v3207 = vpack.c.b16 %v2547, %v2543
    %v3208 = vpack.c.b16 %v2548, %v2544
    %v3209 = vpack.c.b16 %v2553, %v2549
    %v3210 = vpack.c.b16 %v2554, %v2550
    %v3211 = vpack.c.b16 %v2555, %v2551
    %v3212 = vpack.c.b16 %v2556, %v2552
    %v3213 = vpack.c.b16 %v2561, %v2557
    %v3214 = vpack.c.b16 %v2562, %v2558
    %v3215 = vpack.c.b16 %v2563, %v2559
    %v3216 = vpack.c.b16 %v2564, %v2560
    %v3217 = vpack.c.b16 %v2569, %v2565
    %v3218 = vpack.c.b16 %v2570, %v2566
    %v3219 = vpack.c.b16 %v2571, %v2567
    %v3220 = vpack.c.b16 %v2572, %v2568
    %v3221 = vpack.c.b16 %v2577, %v2573
    %v3222 = vpack.c.b16 %v2578, %v2574
    %v3223 = vpack.c.b16 %v2579, %v2575
    %v3224 = vpack.c.b16 %v2580, %v2576
    %v3225 = vpack.c.b16 %v2585, %v2581
    %v3226 = vpack.c.b16 %v2586, %v2582
    %v3227 = vpack.c.b16 %v2587, %v2583
    %v3228 = vpack.c.b16 %v2588, %v2584
    %v3229 = vpack.c.b16 %v2593, %v2589
    %v3230 = vpack.c.b16 %v2594, %v2590
    %v3231 = vpack.c.b16 %v2595, %v2591
    %v3232 = vpack.c.b16 %v2596, %v2592
    %v3233 = vpack.c.b16 %v2601, %v2597
    %v3234 = vpack.c.b16 %v2602, %v2598
    %v3235 = vpack.c.b16 %v2603, %v2599
    %v3236 = vpack.c.b16 %v2604, %v2600
    %v3237 = vpack.c.b16 %v2609, %v2605
    %v3238 = vpack.c.b16 %v2610, %v2606
    %v3239 = vpack.c.b16 %v2611, %v2607
    %v3240 = vpack.c.b16 %v2612, %v2608
    %v3241 = vpack.c.b16 %v2617, %v2613
    %v3242 = vpack.c.b16 %v2618, %v2614
    %v3243 = vpack.c.b16 %v2619, %v2615
    %v3244 = vpack.c.b16 %v2620, %v2616
    %v3245 = vpack.c.b16 %v2625, %v2621
    %v3246 = vpack.c.b16 %v2626, %v2622
    %v3247 = vpack.c.b16 %v2627, %v2623
    %v3248 = vpack.c.b16 %v2628, %v2624
    %v3249 = vpack.c.b16 %v2633, %v2629
    %v3250 = vpack.c.b16 %v2634, %v2630
    %v3251 = vpack.c.b16 %v2635, %v2631
    %v3252 = vpack.c.b16 %v2636, %v2632
    %v3253 = vpack.c.b16 %v2641, %v2637
    %v3254 = vpack.c.b16 %v2642, %v2638
    %v3255 = vpack.c.b16 %v2643, %v2639
    %v3256 = vpack.c.b16 %v2644, %v2640
    %v3257 = vpack.c.b16 %v2649, %v2645
    %v3258 = vpack.c.b16 %v2650, %v2646
    %v3259 = vpack.c.b16 %v2651, %v2647
    %v3260 = vpack.c.b16 %v2652, %v2648
    %v3261 = vpack.c.b16 %v2657, %v2653
    %v3262 = vpack.c.b16 %v2658, %v2654
    %v3263 = vpack.c.b16 %v2659, %v2655
    %v3264 = vpack.c.b16 %v2660, %v2656
    %v3265 = vpack.c.b16 %v2665, %v2661
    %v3266 = vpack.c.b16 %v2666, %v2662
    %v3267 = vpack.c.b16 %v2667, %v2663
    %v3268 = vpack.c.b16 %v2668, %v2664
    %v3269 = vpack.c.b16 %v2673, %v2669
    %v3270 = vpack.c.b16 %v2674, %v2670
    %v3271 = vpack.c.b16 %v2675, %v2671
    %v3272 = vpack.c.b16 %v2676, %v2672
    %v3273 = vpack.c.b16 %v2681, %v2677
    %v3274 = vpack.c.b16 %v2682, %v2678
    %v3275 = vpack.c.b16 %v2683, %v2679
    %v3276 = vpack.c.b16 %v2684, %v2680
    %v3277 = vpack.c.b16 %v2689, %v2685
    %v3278 = vpack.c.b16 %v2690, %v2686
    %v3279 = vpack.c.b16 %v2691, %v2687
    %v3280 = vpack.c.b16 %v2692, %v2688
    %v3281 = vpack.c.b16 %v2697, %v2693
    %v3282 = vpack.c.b16 %v2698, %v2694
    %v3283 = vpack.c.b16 %v2699, %v2695
    %v3284 = vpack.c.b16 %v2700, %v2696
    %v3285 = vpack.c.b16 %v2705, %v2701
    %v3286 = vpack.c.b16 %v2706, %v2702
    %v3287 = vpack.c.b16 %v2707, %v2703
    %v3288 = vpack.c.b16 %v2708, %v2704
    %v3289 = vpack.c.b16 %v2713, %v2709
    %v3290 = vpack.c.b16 %v2714, %v2710
    %v3291 = vpack.c.b16 %v2715, %v2711
    %v3292 = vpack.c.b16 %v2716, %v2712
    %v3293 = vpack.c.b16 %v2721, %v2717
    %v3294 = vpack.c.b16 %v2722, %v2718
    %v3295 = vpack.c.b16 %v2723, %v2719
    %v3296 = vpack.c.b16 %v2724, %v2720
    %v3297 = vpack.c.b16 %v2729, %v2725
    %v3298 = vpack.c.b16 %v2730, %v2726
    %v3299 = vpack.c.b16 %v2731, %v2727
    %v3300 = vpack.c.b16 %v2732, %v2728
    %v3301 = vpack.c.b16 %v2737, %v2733
    %v3302 = vpack.c.b16 %v2738, %v2734
    %v3303 = vpack.c.b16 %v2739, %v2735
    %v3304 = vpack.c.b16 %v2740, %v2736
    %v3305 = vpack.c.b16 %v2745, %v2741
    %v3306 = vpack.c.b16 %v2746, %v2742
    %v3307 = vpack.c.b16 %v2747, %v2743
    %v3308 = vpack.c.b16 %v2748, %v2744
    %v3309 = vpack.c.b16 %v2753, %v2749
    %v3310 = vpack.c.b16 %v2754, %v2750
    %v3311 = vpack.c.b16 %v2755, %v2751
    %v3312 = vpack.c.b16 %v2756, %v2752
    %v3313 = vpack.c.b16 %v2761, %v2757
    %v3314 = vpack.c.b16 %v2762, %v2758
    %v3315 = vpack.c.b16 %v2763, %v2759
    %v3316 = vpack.c.b16 %v2764, %v2760
    %v3317 = vpack.c.b16 %v2769, %v2765
    %v3318 = vpack.c.b16 %v2770, %v2766
    %v3319 = vpack.c.b16 %v2771, %v2767
    %v3320 = vpack.c.b16 %v2772, %v2768
    %v3321 = vpack.c.b16 %v2777, %v2773
    %v3322 = vpack.c.b16 %v2778, %v2774
    %v3323 = vpack.c.b16 %v2779, %v2775
    %v3324 = vpack.c.b16 %v2780, %v2776
    %v3325 = vpack.c.b16 %v2785, %v2781
    %v3326 = vpack.c.b16 %v2786, %v2782
    %v3327 = vpack.c.b16 %v2787, %v2783
    %v3328 = vpack.c.b16 %v2788, %v2784
    %v3329 = vpack.c.b16 %v2793, %v2789
    %v3330 = vpack.c.b16 %v2794, %v2790
    %v3331 = vpack.c.b16 %v2795, %v2791
    %v3332 = vpack.c.b16 %v2796, %v2792
    %v3333 = vpack.c.b16 %v2801, %v2797
    %v3334 = vpack.c.b16 %v2802, %v2798
    %v3335 = vpack.c.b16 %v2803, %v2799
    %v3336 = vpack.c.b16 %v2804, %v2800
    %v3337 = vpack.c.b16 %v2809, %v2805
    %v3338 = vpack.c.b16 %v2810, %v2806
    %v3339 = vpack.c.b16 %v2811, %v2807
    %v3340 = vpack.c.b16 %v2812, %v2808
    %v3341 = vpack.c.b16 %v2817, %v2813
    %v3342 = vpack.c.b16 %v2818, %v2814
    %v3343 = vpack.c.b16 %v2819, %v2815
    %v3344 = vpack.c.b16 %v2820, %v2816
    %v3345 = vpack.c.b16 %v2825, %v2821
    %v3346 = vpack.c.b16 %v2826, %v2822
    %v3347 = vpack.c.b16 %v2827, %v2823
    %v3348 = vpack.c.b16 %v2828, %v2824
    %v3349 = vpack.c.b16 %v2833, %v2829
    %v3350 = vpack.c.b16 %v2834, %v2830
    %v3351 = vpack.c.b16 %v2835, %v2831
    %v3352 = vpack.c.b16 %v2836, %v2832
    %v3353 = vpack.c.b16 %v2841, %v2837
    %v3354 = vpack.c.b16 %v2842, %v2838
    %v3355 = vpack.c.b16 %v2843, %v2839
    %v3356 = vpack.c.b16 %v2844, %v2840
    %3869 = vmatprep.subr.bf16.mxu0 %v2874
    %3870 = vmatpush1.bf16.msra.mxu0 %v2873
    %3871 = vmatprep.subr.bf16.mxu0 %v2870
    %3872 = vmatpush1.bf16.msra.mxu0 %v2869
    %3873 = vmatprep.subr.bf16.mxu0 %v2866
    %3874 = vmatpush1.bf16.msra.mxu0 %v2865
    %3875 = vmatprep.subr.bf16.mxu0 %v2862
    %3876 = vmatpush1.bf16.msra.mxu0 %v2861
    %3877 = vmatprep.subr.bf16.mxu0 %v2858
    %3878 = vmatpush1.bf16.msra.mxu0 %v2857
    %3879 = vmatprep.subr.bf16.mxu0 %v2854
    %3880 = vmatpush1.bf16.msra.mxu0 %v2853
    %3881 = vmatprep.subr.bf16.mxu0 %v2850
    %3882 = vmatpush1.bf16.msra.mxu0 %v2849
    %3883 = vmatprep.subr.bf16.mxu0 %v2846
    %3884 = vmatpush1.bf16.msra.mxu0 %v2845
    %3885 = vmatprep.subr.bf16.mxu0 %v2906
    %3886 = vmatpush2.bf16.msra.mxu0 %v2905
    %3887 = vmatprep.subr.bf16.mxu0 %v2902
    %3888 = vmatpush2.bf16.msra.mxu0 %v2901
    %3889 = vmatprep.subr.bf16.mxu0 %v2898
    %3890 = vmatpush2.bf16.msra.mxu0 %v2897
    %3891 = vmatprep.subr.bf16.mxu0 %v2894
    %3892 = vmatpush2.bf16.msra.mxu0 %v2893
    %3893 = vmatprep.subr.bf16.mxu0 %v2890
    %3894 = vmatpush2.bf16.msra.mxu0 %v2889
    %3895 = vmatprep.subr.bf16.mxu0 %v2886
    %3896 = vmatpush2.bf16.msra.mxu0 %v2885
    %3897 = vmatprep.subr.bf16.mxu0 %v2882
    %3898 = vmatpush2.bf16.msra.mxu0 %v2881
    %3899 = vmatprep.subr.bf16.mxu0 %v2878
    %3900 = vmatpush2.bf16.msra.mxu0 %v2877
    %3901 = vmatprep.mubr.bf16.mxu0 %v760
    %3902 = vmatmul.mubr.bf16.gmra.mxu0 %v759
    %v3903 = vpop.f32.mrf.mxu0
    %v3904 = vadd.f32 %v1292, %v3903
    %v3905 = vpop.f32.mrf.mxu0
    %v3906 = vadd.f32 %v1296, %v3905
    %v3907 = vpop.f32.mrf.mxu0
    %v3908 = vpop.f32.mrf.mxu0
    %3909 = vdwg.mxu0
    %3910 = vmatprep.subr.bf16.mxu0 %v2938
    %3911 = vmatpush1.bf16.msra.mxu0 %v2937
    %3912 = vmatprep.subr.bf16.mxu0 %v2934
    %3913 = vmatpush1.bf16.msra.mxu0 %v2933
    %3914 = vmatprep.subr.bf16.mxu0 %v2930
    %3915 = vmatpush1.bf16.msra.mxu0 %v2929
    %3916 = vmatprep.subr.bf16.mxu0 %v2926
    %3917 = vmatpush1.bf16.msra.mxu0 %v2925
    %3918 = vmatprep.subr.bf16.mxu0 %v2922
    %3919 = vmatpush1.bf16.msra.mxu0 %v2921
    %3920 = vmatprep.subr.bf16.mxu0 %v2918
    %3921 = vmatpush1.bf16.msra.mxu0 %v2917
    %3922 = vmatprep.subr.bf16.mxu0 %v2914
    %3923 = vmatpush1.bf16.msra.mxu0 %v2913
    %3924 = vmatprep.subr.bf16.mxu0 %v2910
    %3925 = vmatpush1.bf16.msra.mxu0 %v2909
    %3926 = vmatprep.subr.bf16.mxu0 %v2970
    %3927 = vmatpush2.bf16.msra.mxu0 %v2969
    %3928 = vmatprep.subr.bf16.mxu0 %v2966
    %3929 = vmatpush2.bf16.msra.mxu0 %v2965
    %3930 = vmatprep.subr.bf16.mxu0 %v2962
    %3931 = vmatpush2.bf16.msra.mxu0 %v2961
    %3932 = vmatprep.subr.bf16.mxu0 %v2958
    %3933 = vmatpush2.bf16.msra.mxu0 %v2957
    %3934 = vmatprep.subr.bf16.mxu0 %v2954
    %3935 = vmatpush2.bf16.msra.mxu0 %v2953
    %3936 = vmatprep.subr.bf16.mxu0 %v2950
    %3937 = vmatpush2.bf16.msra.mxu0 %v2949
    %3938 = vmatprep.subr.bf16.mxu0 %v2946
    %3939 = vmatpush2.bf16.msra.mxu0 %v2945
    %3940 = vmatprep.subr.bf16.mxu0 %v2942
    %3941 = vmatpush2.bf16.msra.mxu0 %v2941
    %3942 = vmatprep.mubr.bf16.mxu0 %v762
    %3943 = vmatmul.mubr.bf16.gmra.mxu0 %v761
    %v3944 = vpop.f32.mrf.mxu0
    %v3945 = vadd.f32 %v3904, %v3944
    %v3946 = vpop.f32.mrf.mxu0
    %v3947 = vadd.f32 %v3906, %v3946
    %v3948 = vpop.f32.mrf.mxu0
    %v3949 = vpop.f32.mrf.mxu0
    %3950 = vdwg.mxu0
    %3951 = vmatprep.subr.bf16.mxu0 %v3002
    %3952 = vmatpush1.bf16.msra.mxu0 %v3001
    %3953 = vmatprep.subr.bf16.mxu0 %v2998
    %3954 = vmatpush1.bf16.msra.mxu0 %v2997
    %3955 = vmatprep.subr.bf16.mxu0 %v2994
    %3956 = vmatpush1.bf16.msra.mxu0 %v2993
    %3957 = vmatprep.subr.bf16.mxu0 %v2990
    %3958 = vmatpush1.bf16.msra.mxu0 %v2989
    %3959 = vmatprep.subr.bf16.mxu0 %v2986
    %3960 = vmatpush1.bf16.msra.mxu0 %v2985
    %3961 = vmatprep.subr.bf16.mxu0 %v2982
    %3962 = vmatpush1.bf16.msra.mxu0 %v2981
    %3963 = vmatprep.subr.bf16.mxu0 %v2978
    %3964 = vmatpush1.bf16.msra.mxu0 %v2977
    %3965 = vmatprep.subr.bf16.mxu0 %v2974
    %3966 = vmatpush1.bf16.msra.mxu0 %v2973
    %3967 = vmatprep.subr.bf16.mxu0 %v3034
    %3968 = vmatpush2.bf16.msra.mxu0 %v3033
    %3969 = vmatprep.subr.bf16.mxu0 %v3030
    %3970 = vmatpush2.bf16.msra.mxu0 %v3029
    %3971 = vmatprep.subr.bf16.mxu0 %v3026
    %3972 = vmatpush2.bf16.msra.mxu0 %v3025
    %3973 = vmatprep.subr.bf16.mxu0 %v3022
    %3974 = vmatpush2.bf16.msra.mxu0 %v3021
    %3975 = vmatprep.subr.bf16.mxu0 %v3018
    %3976 = vmatpush2.bf16.msra.mxu0 %v3017
    %3977 = vmatprep.subr.bf16.mxu0 %v3014
    %3978 = vmatpush2.bf16.msra.mxu0 %v3013
    %3979 = vmatprep.subr.bf16.mxu0 %v3010
    %3980 = vmatpush2.bf16.msra.mxu0 %v3009
    %3981 = vmatprep.subr.bf16.mxu0 %v3006
    %3982 = vmatpush2.bf16.msra.mxu0 %v3005
    %3983 = vmatprep.mubr.bf16.mxu0 %v764
    %3984 = vmatmul.mubr.bf16.gmra.mxu0 %v763
    %v3985 = vpop.f32.mrf.mxu0
    %v3986 = vadd.f32 %v3945, %v3985
    %v3987 = vpop.f32.mrf.mxu0
    %v3988 = vadd.f32 %v3947, %v3987
    %v3989 = vpop.f32.mrf.mxu0
    %v3990 = vpop.f32.mrf.mxu0
    %3991 = vdwg.mxu0
    %3992 = vmatprep.subr.bf16.mxu0 %v3066
    %3993 = vmatpush1.bf16.msra.mxu0 %v3065
    %3994 = vmatprep.subr.bf16.mxu0 %v3062
    %3995 = vmatpush1.bf16.msra.mxu0 %v3061
    %3996 = vmatprep.subr.bf16.mxu0 %v3058
    %3997 = vmatpush1.bf16.msra.mxu0 %v3057
    %3998 = vmatprep.subr.bf16.mxu0 %v3054
    %3999 = vmatpush1.bf16.msra.mxu0 %v3053
    %4000 = vmatprep.subr.bf16.mxu0 %v3050
    %4001 = vmatpush1.bf16.msra.mxu0 %v3049
    %4002 = vmatprep.subr.bf16.mxu0 %v3046
    %4003 = vmatpush1.bf16.msra.mxu0 %v3045
    %4004 = vmatprep.subr.bf16.mxu0 %v3042
    %4005 = vmatpush1.bf16.msra.mxu0 %v3041
    %4006 = vmatprep.subr.bf16.mxu0 %v3038
    %4007 = vmatpush1.bf16.msra.mxu0 %v3037
    %4008 = vmatprep.subr.bf16.mxu0 %v3098
    %4009 = vmatpush2.bf16.msra.mxu0 %v3097
    %4010 = vmatprep.subr.bf16.mxu0 %v3094
    %4011 = vmatpush2.bf16.msra.mxu0 %v3093
    %4012 = vmatprep.subr.bf16.mxu0 %v3090
    %4013 = vmatpush2.bf16.msra.mxu0 %v3089
    %4014 = vmatprep.subr.bf16.mxu0 %v3086
    %4015 = vmatpush2.bf16.msra.mxu0 %v3085
    %4016 = vmatprep.subr.bf16.mxu0 %v3082
    %4017 = vmatpush2.bf16.msra.mxu0 %v3081
    %4018 = vmatprep.subr.bf16.mxu0 %v3078
    %4019 = vmatpush2.bf16.msra.mxu0 %v3077
    %4020 = vmatprep.subr.bf16.mxu0 %v3074
    %4021 = vmatpush2.bf16.msra.mxu0 %v3073
    %4022 = vmatprep.subr.bf16.mxu0 %v3070
    %4023 = vmatpush2.bf16.msra.mxu0 %v3069
    %4024 = vmatprep.mubr.bf16.mxu0 %v766
    %4025 = vmatmul.mubr.bf16.gmra.mxu0 %v765
    %v4026 = vpop.f32.mrf.mxu0
    %v4027 = vadd.f32 %v3986, %v4026
    %v4028 = vpop.f32.mrf.mxu0
    %v4029 = vadd.f32 %v3988, %v4028
    %v4030 = vpop.f32.mrf.mxu0
    %v4031 = vpop.f32.mrf.mxu0
    %4032 = vdwg.mxu0
    %4033 = vmatprep.subr.bf16.mxu0 %v3130
    %4034 = vmatpush1.bf16.msra.mxu0 %v3129
    %4035 = vmatprep.subr.bf16.mxu0 %v3126
    %4036 = vmatpush1.bf16.msra.mxu0 %v3125
    %4037 = vmatprep.subr.bf16.mxu0 %v3122
    %4038 = vmatpush1.bf16.msra.mxu0 %v3121
    %4039 = vmatprep.subr.bf16.mxu0 %v3118
    %4040 = vmatpush1.bf16.msra.mxu0 %v3117
    %4041 = vmatprep.subr.bf16.mxu0 %v3114
    %4042 = vmatpush1.bf16.msra.mxu0 %v3113
    %4043 = vmatprep.subr.bf16.mxu0 %v3110
    %4044 = vmatpush1.bf16.msra.mxu0 %v3109
    %4045 = vmatprep.subr.bf16.mxu0 %v3106
    %4046 = vmatpush1.bf16.msra.mxu0 %v3105
    %4047 = vmatprep.subr.bf16.mxu0 %v3102
    %4048 = vmatpush1.bf16.msra.mxu0 %v3101
    %4049 = vmatprep.subr.bf16.mxu0 %v3162
    %4050 = vmatpush2.bf16.msra.mxu0 %v3161
    %4051 = vmatprep.subr.bf16.mxu0 %v3158
    %4052 = vmatpush2.bf16.msra.mxu0 %v3157
    %4053 = vmatprep.subr.bf16.mxu0 %v3154
    %4054 = vmatpush2.bf16.msra.mxu0 %v3153
    %4055 = vmatprep.subr.bf16.mxu0 %v3150
    %4056 = vmatpush2.bf16.msra.mxu0 %v3149
    %4057 = vmatprep.subr.bf16.mxu0 %v3146
    %4058 = vmatpush2.bf16.msra.mxu0 %v3145
    %4059 = vmatprep.subr.bf16.mxu0 %v3142
    %4060 = vmatpush2.bf16.msra.mxu0 %v3141
    %4061 = vmatprep.subr.bf16.mxu0 %v3138
    %4062 = vmatpush2.bf16.msra.mxu0 %v3137
    %4063 = vmatprep.subr.bf16.mxu0 %v3134
    %4064 = vmatpush2.bf16.msra.mxu0 %v3133
    %4065 = vmatprep.mubr.bf16.mxu0 %v768
    %4066 = vmatmul.mubr.bf16.gmra.mxu0 %v767
    %v4067 = vpop.f32.mrf.mxu0
    %v4068 = vadd.f32 %v4027, %v4067
    %v4069 = vpop.f32.mrf.mxu0
    %v4070 = vadd.f32 %v4029, %v4069
    %v4071 = vpop.f32.mrf.mxu0
    %v4072 = vpop.f32.mrf.mxu0
    %4073 = vdwg.mxu0
    %4074 = vmatprep.subr.bf16.mxu0 %v3194
    %4075 = vmatpush1.bf16.msra.mxu0 %v3193
    %4076 = vmatprep.subr.bf16.mxu0 %v3190
    %4077 = vmatpush1.bf16.msra.mxu0 %v3189
    %4078 = vmatprep.subr.bf16.mxu0 %v3186
    %4079 = vmatpush1.bf16.msra.mxu0 %v3185
    %4080 = vmatprep.subr.bf16.mxu0 %v3182
    %4081 = vmatpush1.bf16.msra.mxu0 %v3181
    %4082 = vmatprep.subr.bf16.mxu0 %v3178
    %4083 = vmatpush1.bf16.msra.mxu0 %v3177
    %4084 = vmatprep.subr.bf16.mxu0 %v3174
    %4085 = vmatpush1.bf16.msra.mxu0 %v3173
    %4086 = vmatprep.subr.bf16.mxu0 %v3170
    %4087 = vmatpush1.bf16.msra.mxu0 %v3169
    %4088 = vmatprep.subr.bf16.mxu0 %v3166
    %4089 = vmatpush1.bf16.msra.mxu0 %v3165
    %4090 = vmatprep.subr.bf16.mxu0 %v3226
    %4091 = vmatpush2.bf16.msra.mxu0 %v3225
    %4092 = vmatprep.subr.bf16.mxu0 %v3222
    %4093 = vmatpush2.bf16.msra.mxu0 %v3221
    %4094 = vmatprep.subr.bf16.mxu0 %v3218
    %4095 = vmatpush2.bf16.msra.mxu0 %v3217
    %4096 = vmatprep.subr.bf16.mxu0 %v3214
    %4097 = vmatpush2.bf16.msra.mxu0 %v3213
    %4098 = vmatprep.subr.bf16.mxu0 %v3210
    %4099 = vmatpush2.bf16.msra.mxu0 %v3209
    %4100 = vmatprep.subr.bf16.mxu0 %v3206
    %4101 = vmatpush2.bf16.msra.mxu0 %v3205
    %4102 = vmatprep.subr.bf16.mxu0 %v3202
    %4103 = vmatpush2.bf16.msra.mxu0 %v3201
    %4104 = vmatprep.subr.bf16.mxu0 %v3198
    %4105 = vmatpush2.bf16.msra.mxu0 %v3197
    %4106 = vmatprep.mubr.bf16.mxu0 %v770
    %4107 = vmatmul.mubr.bf16.gmra.mxu0 %v769
    %v4108 = vpop.f32.mrf.mxu0
    %v4109 = vadd.f32 %v4068, %v4108
    %v4110 = vpop.f32.mrf.mxu0
    %v4111 = vadd.f32 %v4070, %v4110
    %v4112 = vpop.f32.mrf.mxu0
    %v4113 = vpop.f32.mrf.mxu0
    %4114 = vdwg.mxu0
    %4115 = vmatprep.subr.bf16.mxu0 %v3258
    %4116 = vmatpush1.bf16.msra.mxu0 %v3257
    %4117 = vmatprep.subr.bf16.mxu0 %v3254
    %4118 = vmatpush1.bf16.msra.mxu0 %v3253
    %4119 = vmatprep.subr.bf16.mxu0 %v3250
    %4120 = vmatpush1.bf16.msra.mxu0 %v3249
    %4121 = vmatprep.subr.bf16.mxu0 %v3246
    %4122 = vmatpush1.bf16.msra.mxu0 %v3245
    %4123 = vmatprep.subr.bf16.mxu0 %v3242
    %4124 = vmatpush1.bf16.msra.mxu0 %v3241
    %4125 = vmatprep.subr.bf16.mxu0 %v3238
    %4126 = vmatpush1.bf16.msra.mxu0 %v3237
    %4127 = vmatprep.subr.bf16.mxu0 %v3234
    %4128 = vmatpush1.bf16.msra.mxu0 %v3233
    %4129 = vmatprep.subr.bf16.mxu0 %v3230
    %4130 = vmatpush1.bf16.msra.mxu0 %v3229
    %4131 = vmatprep.subr.bf16.mxu0 %v3290
    %4132 = vmatpush2.bf16.msra.mxu0 %v3289
    %4133 = vmatprep.subr.bf16.mxu0 %v3286
    %4134 = vmatpush2.bf16.msra.mxu0 %v3285
    %4135 = vmatprep.subr.bf16.mxu0 %v3282
    %4136 = vmatpush2.bf16.msra.mxu0 %v3281
    %4137 = vmatprep.subr.bf16.mxu0 %v3278
    %4138 = vmatpush2.bf16.msra.mxu0 %v3277
    %4139 = vmatprep.subr.bf16.mxu0 %v3274
    %4140 = vmatpush2.bf16.msra.mxu0 %v3273
    %4141 = vmatprep.subr.bf16.mxu0 %v3270
    %4142 = vmatpush2.bf16.msra.mxu0 %v3269
    %4143 = vmatprep.subr.bf16.mxu0 %v3266
    %4144 = vmatpush2.bf16.msra.mxu0 %v3265
    %4145 = vmatprep.subr.bf16.mxu0 %v3262
    %4146 = vmatpush2.bf16.msra.mxu0 %v3261
    %4147 = vmatprep.mubr.bf16.mxu0 %v772
    %4148 = vmatmul.mubr.bf16.gmra.mxu0 %v771
    %v4149 = vpop.f32.mrf.mxu0
    %v4150 = vadd.f32 %v4109, %v4149
    %v4151 = vpop.f32.mrf.mxu0
    %v4152 = vadd.f32 %v4111, %v4151
    %v4153 = vpop.f32.mrf.mxu0
    %v4154 = vpop.f32.mrf.mxu0
    %4155 = vdwg.mxu0
    %4156 = vmatprep.subr.bf16.mxu0 %v3322
    %4157 = vmatpush1.bf16.msra.mxu0 %v3321
    %4158 = vmatprep.subr.bf16.mxu0 %v3318
    %4159 = vmatpush1.bf16.msra.mxu0 %v3317
    %4160 = vmatprep.subr.bf16.mxu0 %v3314
    %4161 = vmatpush1.bf16.msra.mxu0 %v3313
    %4162 = vmatprep.subr.bf16.mxu0 %v3310
    %4163 = vmatpush1.bf16.msra.mxu0 %v3309
    %4164 = vmatprep.subr.bf16.mxu0 %v3306
    %4165 = vmatpush1.bf16.msra.mxu0 %v3305
    %4166 = vmatprep.subr.bf16.mxu0 %v3302
    %4167 = vmatpush1.bf16.msra.mxu0 %v3301
    %4168 = vmatprep.subr.bf16.mxu0 %v3298
    %4169 = vmatpush1.bf16.msra.mxu0 %v3297
    %4170 = vmatprep.subr.bf16.mxu0 %v3294
    %4171 = vmatpush1.bf16.msra.mxu0 %v3293
    %4172 = vmatprep.subr.bf16.mxu0 %v3354
    %4173 = vmatpush2.bf16.msra.mxu0 %v3353
    %4174 = vmatprep.subr.bf16.mxu0 %v3350
    %4175 = vmatpush2.bf16.msra.mxu0 %v3349
    %4176 = vmatprep.subr.bf16.mxu0 %v3346
    %4177 = vmatpush2.bf16.msra.mxu0 %v3345
    %4178 = vmatprep.subr.bf16.mxu0 %v3342
    %4179 = vmatpush2.bf16.msra.mxu0 %v3341
    %4180 = vmatprep.subr.bf16.mxu0 %v3338
    %4181 = vmatpush2.bf16.msra.mxu0 %v3337
    %4182 = vmatprep.subr.bf16.mxu0 %v3334
    %4183 = vmatpush2.bf16.msra.mxu0 %v3333
    %4184 = vmatprep.subr.bf16.mxu0 %v3330
    %4185 = vmatpush2.bf16.msra.mxu0 %v3329
    %4186 = vmatprep.subr.bf16.mxu0 %v3326
    %4187 = vmatpush2.bf16.msra.mxu0 %v3325
    %4188 = vmatprep.mubr.bf16.mxu0 %v774
    %4189 = vmatmul.mubr.bf16.gmra.mxu0 %v773
    %v4190 = vpop.f32.mrf.mxu0
    %v4191 = vadd.f32 %v4150, %v4190
    %v4192 = vpop.f32.mrf.mxu0
    %v4193 = vadd.f32 %v4152, %v4192
    %v4194 = vpop.f32.mrf.mxu0
    %v4195 = vpop.f32.mrf.mxu0
    %4196 = vdwg.mxu0
    %4197 = vmatprep.subr.bf16.mxu0 %v2876
    %4198 = vmatpush1.bf16.msra.mxu0 %v2875
    %4199 = vmatprep.subr.bf16.mxu0 %v2872
    %4200 = vmatpush1.bf16.msra.mxu0 %v2871
    %4201 = vmatprep.subr.bf16.mxu0 %v2868
    %4202 = vmatpush1.bf16.msra.mxu0 %v2867
    %4203 = vmatprep.subr.bf16.mxu0 %v2864
    %4204 = vmatpush1.bf16.msra.mxu0 %v2863
    %4205 = vmatprep.subr.bf16.mxu0 %v2860
    %4206 = vmatpush1.bf16.msra.mxu0 %v2859
    %4207 = vmatprep.subr.bf16.mxu0 %v2856
    %4208 = vmatpush1.bf16.msra.mxu0 %v2855
    %4209 = vmatprep.subr.bf16.mxu0 %v2852
    %4210 = vmatpush1.bf16.msra.mxu0 %v2851
    %4211 = vmatprep.subr.bf16.mxu0 %v2848
    %4212 = vmatpush1.bf16.msra.mxu0 %v2847
    %4213 = vmatprep.subr.bf16.mxu0 %v2908
    %4214 = vmatpush2.bf16.msra.mxu0 %v2907
    %4215 = vmatprep.subr.bf16.mxu0 %v2904
    %4216 = vmatpush2.bf16.msra.mxu0 %v2903
    %4217 = vmatprep.subr.bf16.mxu0 %v2900
    %4218 = vmatpush2.bf16.msra.mxu0 %v2899
    %4219 = vmatprep.subr.bf16.mxu0 %v2896
    %4220 = vmatpush2.bf16.msra.mxu0 %v2895
    %4221 = vmatprep.subr.bf16.mxu0 %v2892
    %4222 = vmatpush2.bf16.msra.mxu0 %v2891
    %4223 = vmatprep.subr.bf16.mxu0 %v2888
    %4224 = vmatpush2.bf16.msra.mxu0 %v2887
    %4225 = vmatprep.subr.bf16.mxu0 %v2884
    %4226 = vmatpush2.bf16.msra.mxu0 %v2883
    %4227 = vmatprep.subr.bf16.mxu0 %v2880
    %4228 = vmatpush2.bf16.msra.mxu0 %v2879
    %4229 = vmatprep.mubr.bf16.mxu0 %v760
    %4230 = vmatmul.mubr.bf16.gmra.mxu0 %v759
    %v4231 = vpop.f32.mrf.mxu0
    %v4232 = vadd.f32 %v1300, %v4231
    %v4233 = vpop.f32.mrf.mxu0
    %v4234 = vadd.f32 %v1304, %v4233
    %v4235 = vpop.f32.mrf.mxu0
    %v4236 = vpop.f32.mrf.mxu0
    %4237 = vdwg.mxu0
    %4238 = vmatprep.subr.bf16.mxu0 %v2940
    %4239 = vmatpush1.bf16.msra.mxu0 %v2939
    %4240 = vmatprep.subr.bf16.mxu0 %v2936
    %4241 = vmatpush1.bf16.msra.mxu0 %v2935
    %4242 = vmatprep.subr.bf16.mxu0 %v2932
    %4243 = vmatpush1.bf16.msra.mxu0 %v2931
    %4244 = vmatprep.subr.bf16.mxu0 %v2928
    %4245 = vmatpush1.bf16.msra.mxu0 %v2927
    %4246 = vmatprep.subr.bf16.mxu0 %v2924
    %4247 = vmatpush1.bf16.msra.mxu0 %v2923
    %4248 = vmatprep.subr.bf16.mxu0 %v2920
    %4249 = vmatpush1.bf16.msra.mxu0 %v2919
    %4250 = vmatprep.subr.bf16.mxu0 %v2916
    %4251 = vmatpush1.bf16.msra.mxu0 %v2915
    %4252 = vmatprep.subr.bf16.mxu0 %v2912
    %4253 = vmatpush1.bf16.msra.mxu0 %v2911
    %4254 = vmatprep.subr.bf16.mxu0 %v2972
    %4255 = vmatpush2.bf16.msra.mxu0 %v2971
    %4256 = vmatprep.subr.bf16.mxu0 %v2968
    %4257 = vmatpush2.bf16.msra.mxu0 %v2967
    %4258 = vmatprep.subr.bf16.mxu0 %v2964
    %4259 = vmatpush2.bf16.msra.mxu0 %v2963
    %4260 = vmatprep.subr.bf16.mxu0 %v2960
    %4261 = vmatpush2.bf16.msra.mxu0 %v2959
    %4262 = vmatprep.subr.bf16.mxu0 %v2956
    %4263 = vmatpush2.bf16.msra.mxu0 %v2955
    %4264 = vmatprep.subr.bf16.mxu0 %v2952
    %4265 = vmatpush2.bf16.msra.mxu0 %v2951
    %4266 = vmatprep.subr.bf16.mxu0 %v2948
    %4267 = vmatpush2.bf16.msra.mxu0 %v2947
    %4268 = vmatprep.subr.bf16.mxu0 %v2944
    %4269 = vmatpush2.bf16.msra.mxu0 %v2943
    %4270 = vmatprep.mubr.bf16.mxu0 %v762
    %4271 = vmatmul.mubr.bf16.gmra.mxu0 %v761
    %v4272 = vpop.f32.mrf.mxu0
    %v4273 = vadd.f32 %v4232, %v4272
    %v4274 = vpop.f32.mrf.mxu0
    %v4275 = vadd.f32 %v4234, %v4274
    %v4276 = vpop.f32.mrf.mxu0
    %v4277 = vpop.f32.mrf.mxu0
    %4278 = vdwg.mxu0
    %4279 = vmatprep.subr.bf16.mxu0 %v3004
    %4280 = vmatpush1.bf16.msra.mxu0 %v3003
    %4281 = vmatprep.subr.bf16.mxu0 %v3000
    %4282 = vmatpush1.bf16.msra.mxu0 %v2999
    %4283 = vmatprep.subr.bf16.mxu0 %v2996
    %4284 = vmatpush1.bf16.msra.mxu0 %v2995
    %4285 = vmatprep.subr.bf16.mxu0 %v2992
    %4286 = vmatpush1.bf16.msra.mxu0 %v2991
    %4287 = vmatprep.subr.bf16.mxu0 %v2988
    %4288 = vmatpush1.bf16.msra.mxu0 %v2987
    %4289 = vmatprep.subr.bf16.mxu0 %v2984
    %4290 = vmatpush1.bf16.msra.mxu0 %v2983
    %4291 = vmatprep.subr.bf16.mxu0 %v2980
    %4292 = vmatpush1.bf16.msra.mxu0 %v2979
    %4293 = vmatprep.subr.bf16.mxu0 %v2976
    %4294 = vmatpush1.bf16.msra.mxu0 %v2975
    %4295 = vmatprep.subr.bf16.mxu0 %v3036
    %4296 = vmatpush2.bf16.msra.mxu0 %v3035
    %4297 = vmatprep.subr.bf16.mxu0 %v3032
    %4298 = vmatpush2.bf16.msra.mxu0 %v3031
    %4299 = vmatprep.subr.bf16.mxu0 %v3028
    %4300 = vmatpush2.bf16.msra.mxu0 %v3027
    %4301 = vmatprep.subr.bf16.mxu0 %v3024
    %4302 = vmatpush2.bf16.msra.mxu0 %v3023
    %4303 = vmatprep.subr.bf16.mxu0 %v3020
    %4304 = vmatpush2.bf16.msra.mxu0 %v3019
    %4305 = vmatprep.subr.bf16.mxu0 %v3016
    %4306 = vmatpush2.bf16.msra.mxu0 %v3015
    %4307 = vmatprep.subr.bf16.mxu0 %v3012
    %4308 = vmatpush2.bf16.msra.mxu0 %v3011
    %4309 = vmatprep.subr.bf16.mxu0 %v3008
    %4310 = vmatpush2.bf16.msra.mxu0 %v3007
    %4311 = vmatprep.mubr.bf16.mxu0 %v764
    %4312 = vmatmul.mubr.bf16.gmra.mxu0 %v763
    %v4313 = vpop.f32.mrf.mxu0
    %v4314 = vadd.f32 %v4273, %v4313
    %v4315 = vpop.f32.mrf.mxu0
    %v4316 = vadd.f32 %v4275, %v4315
    %v4317 = vpop.f32.mrf.mxu0
    %v4318 = vpop.f32.mrf.mxu0
    %4319 = vdwg.mxu0
    %4320 = vmatprep.subr.bf16.mxu0 %v3068
    %4321 = vmatpush1.bf16.msra.mxu0 %v3067
    %4322 = vmatprep.subr.bf16.mxu0 %v3064
    %4323 = vmatpush1.bf16.msra.mxu0 %v3063
    %4324 = vmatprep.subr.bf16.mxu0 %v3060
    %4325 = vmatpush1.bf16.msra.mxu0 %v3059
    %4326 = vmatprep.subr.bf16.mxu0 %v3056
    %4327 = vmatpush1.bf16.msra.mxu0 %v3055
    %4328 = vmatprep.subr.bf16.mxu0 %v3052
    %4329 = vmatpush1.bf16.msra.mxu0 %v3051
    %4330 = vmatprep.subr.bf16.mxu0 %v3048
    %4331 = vmatpush1.bf16.msra.mxu0 %v3047
    %4332 = vmatprep.subr.bf16.mxu0 %v3044
    %4333 = vmatpush1.bf16.msra.mxu0 %v3043
    %4334 = vmatprep.subr.bf16.mxu0 %v3040
    %4335 = vmatpush1.bf16.msra.mxu0 %v3039
    %4336 = vmatprep.subr.bf16.mxu0 %v3100
    %4337 = vmatpush2.bf16.msra.mxu0 %v3099
    %4338 = vmatprep.subr.bf16.mxu0 %v3096
    %4339 = vmatpush2.bf16.msra.mxu0 %v3095
    %4340 = vmatprep.subr.bf16.mxu0 %v3092
    %4341 = vmatpush2.bf16.msra.mxu0 %v3091
    %4342 = vmatprep.subr.bf16.mxu0 %v3088
    %4343 = vmatpush2.bf16.msra.mxu0 %v3087
    %4344 = vmatprep.subr.bf16.mxu0 %v3084
    %4345 = vmatpush2.bf16.msra.mxu0 %v3083
    %4346 = vmatprep.subr.bf16.mxu0 %v3080
    %4347 = vmatpush2.bf16.msra.mxu0 %v3079
    %4348 = vmatprep.subr.bf16.mxu0 %v3076
    %4349 = vmatpush2.bf16.msra.mxu0 %v3075
    %4350 = vmatprep.subr.bf16.mxu0 %v3072
    %4351 = vmatpush2.bf16.msra.mxu0 %v3071
    %4352 = vmatprep.mubr.bf16.mxu0 %v766
    %4353 = vmatmul.mubr.bf16.gmra.mxu0 %v765
    %v4354 = vpop.f32.mrf.mxu0
    %v4355 = vadd.f32 %v4314, %v4354
    %v4356 = vpop.f32.mrf.mxu0
    %v4357 = vadd.f32 %v4316, %v4356
    %v4358 = vpop.f32.mrf.mxu0
    %v4359 = vpop.f32.mrf.mxu0
    %4360 = vdwg.mxu0
    %4361 = vmatprep.subr.bf16.mxu0 %v3132
    %4362 = vmatpush1.bf16.msra.mxu0 %v3131
    %4363 = vmatprep.subr.bf16.mxu0 %v3128
    %4364 = vmatpush1.bf16.msra.mxu0 %v3127
    %4365 = vmatprep.subr.bf16.mxu0 %v3124
    %4366 = vmatpush1.bf16.msra.mxu0 %v3123
    %4367 = vmatprep.subr.bf16.mxu0 %v3120
    %4368 = vmatpush1.bf16.msra.mxu0 %v3119
    %4369 = vmatprep.subr.bf16.mxu0 %v3116
    %4370 = vmatpush1.bf16.msra.mxu0 %v3115
    %4371 = vmatprep.subr.bf16.mxu0 %v3112
    %4372 = vmatpush1.bf16.msra.mxu0 %v3111
    %4373 = vmatprep.subr.bf16.mxu0 %v3108
    %4374 = vmatpush1.bf16.msra.mxu0 %v3107
    %4375 = vmatprep.subr.bf16.mxu0 %v3104
    %4376 = vmatpush1.bf16.msra.mxu0 %v3103
    %4377 = vmatprep.subr.bf16.mxu0 %v3164
    %4378 = vmatpush2.bf16.msra.mxu0 %v3163
    %4379 = vmatprep.subr.bf16.mxu0 %v3160
    %4380 = vmatpush2.bf16.msra.mxu0 %v3159
    %4381 = vmatprep.subr.bf16.mxu0 %v3156
    %4382 = vmatpush2.bf16.msra.mxu0 %v3155
    %4383 = vmatprep.subr.bf16.mxu0 %v3152
    %4384 = vmatpush2.bf16.msra.mxu0 %v3151
    %4385 = vmatprep.subr.bf16.mxu0 %v3148
    %4386 = vmatpush2.bf16.msra.mxu0 %v3147
    %4387 = vmatprep.subr.bf16.mxu0 %v3144
    %4388 = vmatpush2.bf16.msra.mxu0 %v3143
    %4389 = vmatprep.subr.bf16.mxu0 %v3140
    %4390 = vmatpush2.bf16.msra.mxu0 %v3139
    %4391 = vmatprep.subr.bf16.mxu0 %v3136
    %4392 = vmatpush2.bf16.msra.mxu0 %v3135
    %4393 = vmatprep.mubr.bf16.mxu0 %v768
    %4394 = vmatmul.mubr.bf16.gmra.mxu0 %v767
    %v4395 = vpop.f32.mrf.mxu0
    %v4396 = vadd.f32 %v4355, %v4395
    %v4397 = vpop.f32.mrf.mxu0
    %v4398 = vadd.f32 %v4357, %v4397
    %v4399 = vpop.f32.mrf.mxu0
    %v4400 = vpop.f32.mrf.mxu0
    %4401 = vdwg.mxu0
    %4402 = vmatprep.subr.bf16.mxu0 %v3196
    %4403 = vmatpush1.bf16.msra.mxu0 %v3195
    %4404 = vmatprep.subr.bf16.mxu0 %v3192
    %4405 = vmatpush1.bf16.msra.mxu0 %v3191
    %4406 = vmatprep.subr.bf16.mxu0 %v3188
    %4407 = vmatpush1.bf16.msra.mxu0 %v3187
    %4408 = vmatprep.subr.bf16.mxu0 %v3184
    %4409 = vmatpush1.bf16.msra.mxu0 %v3183
    %4410 = vmatprep.subr.bf16.mxu0 %v3180
    %4411 = vmatpush1.bf16.msra.mxu0 %v3179
    %4412 = vmatprep.subr.bf16.mxu0 %v3176
    %4413 = vmatpush1.bf16.msra.mxu0 %v3175
    %4414 = vmatprep.subr.bf16.mxu0 %v3172
    %4415 = vmatpush1.bf16.msra.mxu0 %v3171
    %4416 = vmatprep.subr.bf16.mxu0 %v3168
    %4417 = vmatpush1.bf16.msra.mxu0 %v3167
    %4418 = vmatprep.subr.bf16.mxu0 %v3228
    %4419 = vmatpush2.bf16.msra.mxu0 %v3227
    %4420 = vmatprep.subr.bf16.mxu0 %v3224
    %4421 = vmatpush2.bf16.msra.mxu0 %v3223
    %4422 = vmatprep.subr.bf16.mxu0 %v3220
    %4423 = vmatpush2.bf16.msra.mxu0 %v3219
    %4424 = vmatprep.subr.bf16.mxu0 %v3216
    %4425 = vmatpush2.bf16.msra.mxu0 %v3215
    %4426 = vmatprep.subr.bf16.mxu0 %v3212
    %4427 = vmatpush2.bf16.msra.mxu0 %v3211
    %4428 = vmatprep.subr.bf16.mxu0 %v3208
    %4429 = vmatpush2.bf16.msra.mxu0 %v3207
    %4430 = vmatprep.subr.bf16.mxu0 %v3204
    %4431 = vmatpush2.bf16.msra.mxu0 %v3203
    %4432 = vmatprep.subr.bf16.mxu0 %v3200
    %4433 = vmatpush2.bf16.msra.mxu0 %v3199
    %4434 = vmatprep.mubr.bf16.mxu0 %v770
    %4435 = vmatmul.mubr.bf16.gmra.mxu0 %v769
    %v4436 = vpop.f32.mrf.mxu0
    %v4437 = vadd.f32 %v4396, %v4436
    %v4438 = vpop.f32.mrf.mxu0
    %v4439 = vadd.f32 %v4398, %v4438
    %v4440 = vpop.f32.mrf.mxu0
    %v4441 = vpop.f32.mrf.mxu0
    %4442 = vdwg.mxu0
    %4443 = vmatprep.subr.bf16.mxu0 %v3260
    %4444 = vmatpush1.bf16.msra.mxu0 %v3259
    %4445 = vmatprep.subr.bf16.mxu0 %v3256
    %4446 = vmatpush1.bf16.msra.mxu0 %v3255
    %4447 = vmatprep.subr.bf16.mxu0 %v3252
    %4448 = vmatpush1.bf16.msra.mxu0 %v3251
    %4449 = vmatprep.subr.bf16.mxu0 %v3248
    %4450 = vmatpush1.bf16.msra.mxu0 %v3247
    %4451 = vmatprep.subr.bf16.mxu0 %v3244
    %4452 = vmatpush1.bf16.msra.mxu0 %v3243
    %4453 = vmatprep.subr.bf16.mxu0 %v3240
    %4454 = vmatpush1.bf16.msra.mxu0 %v3239
    %4455 = vmatprep.subr.bf16.mxu0 %v3236
    %4456 = vmatpush1.bf16.msra.mxu0 %v3235
    %4457 = vmatprep.subr.bf16.mxu0 %v3232
    %4458 = vmatpush1.bf16.msra.mxu0 %v3231
    %4459 = vmatprep.subr.bf16.mxu0 %v3292
    %4460 = vmatpush2.bf16.msra.mxu0 %v3291
    %4461 = vmatprep.subr.bf16.mxu0 %v3288
    %4462 = vmatpush2.bf16.msra.mxu0 %v3287
    %4463 = vmatprep.subr.bf16.mxu0 %v3284
    %4464 = vmatpush2.bf16.msra.mxu0 %v3283
    %4465 = vmatprep.subr.bf16.mxu0 %v3280
    %4466 = vmatpush2.bf16.msra.mxu0 %v3279
    %4467 = vmatprep.subr.bf16.mxu0 %v3276
    %4468 = vmatpush2.bf16.msra.mxu0 %v3275
    %4469 = vmatprep.subr.bf16.mxu0 %v3272
    %4470 = vmatpush2.bf16.msra.mxu0 %v3271
    %4471 = vmatprep.subr.bf16.mxu0 %v3268
    %4472 = vmatpush2.bf16.msra.mxu0 %v3267
    %4473 = vmatprep.subr.bf16.mxu0 %v3264
    %4474 = vmatpush2.bf16.msra.mxu0 %v3263
    %4475 = vmatprep.mubr.bf16.mxu0 %v772
    %4476 = vmatmul.mubr.bf16.gmra.mxu0 %v771
    %v4477 = vpop.f32.mrf.mxu0
    %v4478 = vadd.f32 %v4437, %v4477
    %v4479 = vpop.f32.mrf.mxu0
    %v4480 = vadd.f32 %v4439, %v4479
    %v4481 = vpop.f32.mrf.mxu0
    %v4482 = vpop.f32.mrf.mxu0
    %4483 = vdwg.mxu0
    %4484 = vmatprep.subr.bf16.mxu0 %v3324
    %4485 = vmatpush1.bf16.msra.mxu0 %v3323
    %4486 = vmatprep.subr.bf16.mxu0 %v3320
    %4487 = vmatpush1.bf16.msra.mxu0 %v3319
    %4488 = vmatprep.subr.bf16.mxu0 %v3316
    %4489 = vmatpush1.bf16.msra.mxu0 %v3315
    %4490 = vmatprep.subr.bf16.mxu0 %v3312
    %4491 = vmatpush1.bf16.msra.mxu0 %v3311
    %4492 = vmatprep.subr.bf16.mxu0 %v3308
    %4493 = vmatpush1.bf16.msra.mxu0 %v3307
    %4494 = vmatprep.subr.bf16.mxu0 %v3304
    %4495 = vmatpush1.bf16.msra.mxu0 %v3303
    %4496 = vmatprep.subr.bf16.mxu0 %v3300
    %4497 = vmatpush1.bf16.msra.mxu0 %v3299
    %4498 = vmatprep.subr.bf16.mxu0 %v3296
    %4499 = vmatpush1.bf16.msra.mxu0 %v3295
    %4500 = vmatprep.subr.bf16.mxu0 %v3356
    %4501 = vmatpush2.bf16.msra.mxu0 %v3355
    %4502 = vmatprep.subr.bf16.mxu0 %v3352
    %4503 = vmatpush2.bf16.msra.mxu0 %v3351
    %4504 = vmatprep.subr.bf16.mxu0 %v3348
    %4505 = vmatpush2.bf16.msra.mxu0 %v3347
    %4506 = vmatprep.subr.bf16.mxu0 %v3344
    %4507 = vmatpush2.bf16.msra.mxu0 %v3343
    %4508 = vmatprep.subr.bf16.mxu0 %v3340
    %4509 = vmatpush2.bf16.msra.mxu0 %v3339
    %4510 = vmatprep.subr.bf16.mxu0 %v3336
    %4511 = vmatpush2.bf16.msra.mxu0 %v3335
    %4512 = vmatprep.subr.bf16.mxu0 %v3332
    %4513 = vmatpush2.bf16.msra.mxu0 %v3331
    %4514 = vmatprep.subr.bf16.mxu0 %v3328
    %4515 = vmatpush2.bf16.msra.mxu0 %v3327
    %4516 = vmatprep.mubr.bf16.mxu0 %v774
    %4517 = vmatmul.mubr.bf16.gmra.mxu0 %v773
    %v4518 = vpop.f32.mrf.mxu0
    %v4519 = vadd.f32 %v4478, %v4518
    %v4520 = vpop.f32.mrf.mxu0
    %v4521 = vadd.f32 %v4480, %v4520
    %v4522 = vpop.f32.mrf.mxu0
    %v4523 = vpop.f32.mrf.mxu0
    %4524 = vdwg.mxu0
    %v4525 = vmax.f32 %v4191, 0.0
    %v4526 = vmax.f32 %v4193, 0.0
    %v4527 = vmax.f32 %v4519, 0.0
    %v4528 = vmax.f32 %v4521, 0.0
    %v4529 = vpack.c.bf16 %v4525, %v4525
    %v4530 = vpack.c.bf16 %v4526, %v4526
    %v4531 = vpack.c.bf16 %v4527, %v4527
    %v4532 = vpack.c.bf16 %v4528, %v4528
    %v4533 = vld [vmem:[#allocation11] sm:$0xff]
    %v4534 = vld [vmem:[#allocation11 + $0x8] sm:$0xff]
    %v4535 = vld [vmem:[#allocation11 + $0x10] sm:$0xff]
    %v4536 = vld [vmem:[#allocation11 + $0x18] sm:$0xff]
    %v4537 = vld [vmem:[#allocation11 + $0x20] sm:$0xff]
    %v4538 = vld [vmem:[#allocation11 + $0x28] sm:$0xff]
    %v4539 = vld [vmem:[#allocation11 + $0x30] sm:$0xff]
    %v4540 = vld [vmem:[#allocation11 + $0x38] sm:$0xff]
    %v4541 = vld [vmem:[#allocation11 + $0x40] sm:$0xff]
    %v4542 = vld [vmem:[#allocation11 + $0x48] sm:$0xff]
    %v4543 = vld [vmem:[#allocation11 + $0x50] sm:$0xff]
    %v4544 = vld [vmem:[#allocation11 + $0x58] sm:$0xff]
    %v4545 = vld [vmem:[#allocation11 + $0x60] sm:$0xff]
    %v4546 = vld [vmem:[#allocation11 + $0x68] sm:$0xff]
    %v4547 = vld [vmem:[#allocation11 + $0x70] sm:$0xff]
    %v4548 = vld [vmem:[#allocation11 + $0x78] sm:$0xff]
    %v4549 = vld [vmem:[#allocation11 + $0x80] sm:$0xff]
    %v4550 = vld [vmem:[#allocation11 + $0x88] sm:$0xff]
    %v4551 = vld [vmem:[#allocation11 + $0x90] sm:$0xff]
    %v4552 = vld [vmem:[#allocation11 + $0x98] sm:$0xff]
    %v4553 = vld [vmem:[#allocation11 + $0xa0] sm:$0xff]
    %v4554 = vld [vmem:[#allocation11 + $0xa8] sm:$0xff]
    %v4555 = vld [vmem:[#allocation11 + $0xb0] sm:$0xff]
    %v4556 = vld [vmem:[#allocation11 + $0xb8] sm:$0xff]
    %v4557 = vld [vmem:[#allocation11 + $0xc0] sm:$0xff]
    %v4558 = vld [vmem:[#allocation11 + $0xc8] sm:$0xff]
    %v4559 = vld [vmem:[#allocation11 + $0xd0] sm:$0xff]
    %v4560 = vld [vmem:[#allocation11 + $0xd8] sm:$0xff]
    %v4561 = vld [vmem:[#allocation11 + $0xe0] sm:$0xff]
    %v4562 = vld [vmem:[#allocation11 + $0xe8] sm:$0xff]
    %v4563 = vld [vmem:[#allocation11 + $0xf0] sm:$0xff]
    %v4564 = vld [vmem:[#allocation11 + $0xf8] sm:$0xff]
    %v4565 = vld [vmem:[#allocation11 + $0x100] sm:$0xff]
    %v4566 = vld [vmem:[#allocation11 + $0x108] sm:$0xff]
    %v4567 = vld [vmem:[#allocation11 + $0x110] sm:$0xff]
    %v4568 = vld [vmem:[#allocation11 + $0x118] sm:$0xff]
    %v4569 = vld [vmem:[#allocation11 + $0x120] sm:$0xff]
    %v4570 = vld [vmem:[#allocation11 + $0x128] sm:$0xff]
    %v4571 = vld [vmem:[#allocation11 + $0x130] sm:$0xff]
    %v4572 = vld [vmem:[#allocation11 + $0x138] sm:$0xff]
    %v4573 = vld [vmem:[#allocation11 + $0x140] sm:$0xff]
    %v4574 = vld [vmem:[#allocation11 + $0x148] sm:$0xff]
    %v4575 = vld [vmem:[#allocation11 + $0x150] sm:$0xff]
    %v4576 = vld [vmem:[#allocation11 + $0x158] sm:$0xff]
    %v4577 = vld [vmem:[#allocation11 + $0x160] sm:$0xff]
    %v4578 = vld [vmem:[#allocation11 + $0x168] sm:$0xff]
    %v4579 = vld [vmem:[#allocation11 + $0x170] sm:$0xff]
    %v4580 = vld [vmem:[#allocation11 + $0x178] sm:$0xff]
    %v4581 = vld [vmem:[#allocation11 + $0x180] sm:$0xff]
    %v4582 = vld [vmem:[#allocation11 + $0x188] sm:$0xff]
    %v4583 = vld [vmem:[#allocation11 + $0x190] sm:$0xff]
    %v4584 = vld [vmem:[#allocation11 + $0x198] sm:$0xff]
    %v4585 = vld [vmem:[#allocation11 + $0x1a0] sm:$0xff]
    %v4586 = vld [vmem:[#allocation11 + $0x1a8] sm:$0xff]
    %v4587 = vld [vmem:[#allocation11 + $0x1b0] sm:$0xff]
    %v4588 = vld [vmem:[#allocation11 + $0x1b8] sm:$0xff]
    %v4589 = vld [vmem:[#allocation11 + $0x1c0] sm:$0xff]
    %v4590 = vld [vmem:[#allocation11 + $0x1c8] sm:$0xff]
    %v4591 = vld [vmem:[#allocation11 + $0x1d0] sm:$0xff]
    %v4592 = vld [vmem:[#allocation11 + $0x1d8] sm:$0xff]
    %v4593 = vld [vmem:[#allocation11 + $0x1e0] sm:$0xff]
    %v4594 = vld [vmem:[#allocation11 + $0x1e8] sm:$0xff]
    %v4595 = vld [vmem:[#allocation11 + $0x1f0] sm:$0xff]
    %v4596 = vld [vmem:[#allocation11 + $0x1f8] sm:$0xff]
    %v4597 = vld [vmem:[#allocation11 + $0x200] sm:$0xff]
    %v4598 = vld [vmem:[#allocation11 + $0x208] sm:$0xff]
    %v4599 = vld [vmem:[#allocation11 + $0x210] sm:$0xff]
    %v4600 = vld [vmem:[#allocation11 + $0x218] sm:$0xff]
    %v4601 = vld [vmem:[#allocation11 + $0x220] sm:$0xff]
    %v4602 = vld [vmem:[#allocation11 + $0x228] sm:$0xff]
    %v4603 = vld [vmem:[#allocation11 + $0x230] sm:$0xff]
    %v4604 = vld [vmem:[#allocation11 + $0x238] sm:$0xff]
    %v4605 = vld [vmem:[#allocation11 + $0x240] sm:$0xff]
    %v4606 = vld [vmem:[#allocation11 + $0x248] sm:$0xff]
    %v4607 = vld [vmem:[#allocation11 + $0x250] sm:$0xff]
    %v4608 = vld [vmem:[#allocation11 + $0x258] sm:$0xff]
    %v4609 = vld [vmem:[#allocation11 + $0x260] sm:$0xff]
    %v4610 = vld [vmem:[#allocation11 + $0x268] sm:$0xff]
    %v4611 = vld [vmem:[#allocation11 + $0x270] sm:$0xff]
    %v4612 = vld [vmem:[#allocation11 + $0x278] sm:$0xff]
    %v4613 = vld [vmem:[#allocation11 + $0x280] sm:$0xff]
    %v4614 = vld [vmem:[#allocation11 + $0x288] sm:$0xff]
    %v4615 = vld [vmem:[#allocation11 + $0x290] sm:$0xff]
    %v4616 = vld [vmem:[#allocation11 + $0x298] sm:$0xff]
    %v4617 = vld [vmem:[#allocation11 + $0x2a0] sm:$0xff]
    %v4618 = vld [vmem:[#allocation11 + $0x2a8] sm:$0xff]
    %v4619 = vld [vmem:[#allocation11 + $0x2b0] sm:$0xff]
    %v4620 = vld [vmem:[#allocation11 + $0x2b8] sm:$0xff]
    %v4621 = vld [vmem:[#allocation11 + $0x2c0] sm:$0xff]
    %v4622 = vld [vmem:[#allocation11 + $0x2c8] sm:$0xff]
    %v4623 = vld [vmem:[#allocation11 + $0x2d0] sm:$0xff]
    %v4624 = vld [vmem:[#allocation11 + $0x2d8] sm:$0xff]
    %v4625 = vld [vmem:[#allocation11 + $0x2e0] sm:$0xff]
    %v4626 = vld [vmem:[#allocation11 + $0x2e8] sm:$0xff]
    %v4627 = vld [vmem:[#allocation11 + $0x2f0] sm:$0xff]
    %v4628 = vld [vmem:[#allocation11 + $0x2f8] sm:$0xff]
    %v4629 = vld [vmem:[#allocation11 + $0x300] sm:$0xff]
    %v4630 = vld [vmem:[#allocation11 + $0x308] sm:$0xff]
    %v4631 = vld [vmem:[#allocation11 + $0x310] sm:$0xff]
    %v4632 = vld [vmem:[#allocation11 + $0x318] sm:$0xff]
    %v4633 = vld [vmem:[#allocation11 + $0x320] sm:$0xff]
    %v4634 = vld [vmem:[#allocation11 + $0x328] sm:$0xff]
    %v4635 = vld [vmem:[#allocation11 + $0x330] sm:$0xff]
    %v4636 = vld [vmem:[#allocation11 + $0x338] sm:$0xff]
    %v4637 = vld [vmem:[#allocation11 + $0x340] sm:$0xff]
    %v4638 = vld [vmem:[#allocation11 + $0x348] sm:$0xff]
    %v4639 = vld [vmem:[#allocation11 + $0x350] sm:$0xff]
    %v4640 = vld [vmem:[#allocation11 + $0x358] sm:$0xff]
    %v4641 = vld [vmem:[#allocation11 + $0x360] sm:$0xff]
    %v4642 = vld [vmem:[#allocation11 + $0x368] sm:$0xff]
    %v4643 = vld [vmem:[#allocation11 + $0x370] sm:$0xff]
    %v4644 = vld [vmem:[#allocation11 + $0x378] sm:$0xff]
    %v4645 = vld [vmem:[#allocation11 + $0x380] sm:$0xff]
    %v4646 = vld [vmem:[#allocation11 + $0x388] sm:$0xff]
    %v4647 = vld [vmem:[#allocation11 + $0x390] sm:$0xff]
    %v4648 = vld [vmem:[#allocation11 + $0x398] sm:$0xff]
    %v4649 = vld [vmem:[#allocation11 + $0x3a0] sm:$0xff]
    %v4650 = vld [vmem:[#allocation11 + $0x3a8] sm:$0xff]
    %v4651 = vld [vmem:[#allocation11 + $0x3b0] sm:$0xff]
    %v4652 = vld [vmem:[#allocation11 + $0x3b8] sm:$0xff]
    %v4653 = vld [vmem:[#allocation11 + $0x3c0] sm:$0xff]
    %v4654 = vld [vmem:[#allocation11 + $0x3c8] sm:$0xff]
    %v4655 = vld [vmem:[#allocation11 + $0x3d0] sm:$0xff]
    %v4656 = vld [vmem:[#allocation11 + $0x3d8] sm:$0xff]
    %v4657 = vld [vmem:[#allocation11 + $0x3e0] sm:$0xff]
    %v4658 = vld [vmem:[#allocation11 + $0x3e8] sm:$0xff]
    %v4659 = vld [vmem:[#allocation11 + $0x3f0] sm:$0xff]
    %v4660 = vld [vmem:[#allocation11 + $0x3f8] sm:$0xff]
    %v4661 = vld [vmem:[#allocation13] sm:$0xf]
    %v4663 = vlaneseq
    %v4664 = vshrl.u32 %v4663, 7
    %v4665 = vsub.s32 0, %v4664
    %v4666 = vrot.slane %v4661, %v4665
    %v4667 = vlaneseq
    %v4668 = vshrl.u32 %v4667, 7
    %v4669 = vsub.s32 1, %v4668
    %v4670 = vrot.slane %v4661, %v4669
    %v4671 = vlaneseq
    %v4672 = vshrl.u32 %v4671, 7
    %v4673 = vsub.s32 2, %v4672
    %v4674 = vrot.slane %v4661, %v4673
    %v4675 = vlaneseq
    %v4676 = vshrl.u32 %v4675, 7
    %v4677 = vsub.s32 3, %v4676
    %v4678 = vrot.slane %v4661, %v4677
    %v4811 = vunpack.c.l.b16 %v4533
    %v4812 = vunpack.c.h.b16 %v4533
    %v4813 = vunpack.c.l.b16 %v4534
    %v4814 = vunpack.c.h.b16 %v4534
    %v4815 = vunpack.c.l.b16 %v4535
    %v4816 = vunpack.c.h.b16 %v4535
    %v4817 = vunpack.c.l.b16 %v4536
    %v4818 = vunpack.c.h.b16 %v4536
    %v4819 = vunpack.c.l.b16 %v4537
    %v4820 = vunpack.c.h.b16 %v4537
    %v4821 = vunpack.c.l.b16 %v4538
    %v4822 = vunpack.c.h.b16 %v4538
    %v4823 = vunpack.c.l.b16 %v4539
    %v4824 = vunpack.c.h.b16 %v4539
    %v4825 = vunpack.c.l.b16 %v4540
    %v4826 = vunpack.c.h.b16 %v4540
    %v4827 = vunpack.c.l.b16 %v4541
    %v4828 = vunpack.c.h.b16 %v4541
    %v4829 = vunpack.c.l.b16 %v4542
    %v4830 = vunpack.c.h.b16 %v4542
    %v4831 = vunpack.c.l.b16 %v4543
    %v4832 = vunpack.c.h.b16 %v4543
    %v4833 = vunpack.c.l.b16 %v4544
    %v4834 = vunpack.c.h.b16 %v4544
    %v4835 = vunpack.c.l.b16 %v4545
    %v4836 = vunpack.c.h.b16 %v4545
    %v4837 = vunpack.c.l.b16 %v4546
    %v4838 = vunpack.c.h.b16 %v4546
    %v4839 = vunpack.c.l.b16 %v4547
    %v4840 = vunpack.c.h.b16 %v4547
    %v4841 = vunpack.c.l.b16 %v4548
    %v4842 = vunpack.c.h.b16 %v4548
    %v4843 = vunpack.c.l.b16 %v4549
    %v4844 = vunpack.c.h.b16 %v4549
    %v4845 = vunpack.c.l.b16 %v4550
    %v4846 = vunpack.c.h.b16 %v4550
    %v4847 = vunpack.c.l.b16 %v4551
    %v4848 = vunpack.c.h.b16 %v4551
    %v4849 = vunpack.c.l.b16 %v4552
    %v4850 = vunpack.c.h.b16 %v4552
    %v4851 = vunpack.c.l.b16 %v4553
    %v4852 = vunpack.c.h.b16 %v4553
    %v4853 = vunpack.c.l.b16 %v4554
    %v4854 = vunpack.c.h.b16 %v4554
    %v4855 = vunpack.c.l.b16 %v4555
    %v4856 = vunpack.c.h.b16 %v4555
    %v4857 = vunpack.c.l.b16 %v4556
    %v4858 = vunpack.c.h.b16 %v4556
    %v4859 = vunpack.c.l.b16 %v4557
    %v4860 = vunpack.c.h.b16 %v4557
    %v4861 = vunpack.c.l.b16 %v4558
    %v4862 = vunpack.c.h.b16 %v4558
    %v4863 = vunpack.c.l.b16 %v4559
    %v4864 = vunpack.c.h.b16 %v4559
    %v4865 = vunpack.c.l.b16 %v4560
    %v4866 = vunpack.c.h.b16 %v4560
    %v4867 = vunpack.c.l.b16 %v4561
    %v4868 = vunpack.c.h.b16 %v4561
    %v4869 = vunpack.c.l.b16 %v4562
    %v4870 = vunpack.c.h.b16 %v4562
    %v4871 = vunpack.c.l.b16 %v4563
    %v4872 = vunpack.c.h.b16 %v4563
    %v4873 = vunpack.c.l.b16 %v4564
    %v4874 = vunpack.c.h.b16 %v4564
    %v4875 = vunpack.c.l.b16 %v4565
    %v4876 = vunpack.c.h.b16 %v4565
    %v4877 = vunpack.c.l.b16 %v4566
    %v4878 = vunpack.c.h.b16 %v4566
    %v4879 = vunpack.c.l.b16 %v4567
    %v4880 = vunpack.c.h.b16 %v4567
    %v4881 = vunpack.c.l.b16 %v4568
    %v4882 = vunpack.c.h.b16 %v4568
    %v4883 = vunpack.c.l.b16 %v4569
    %v4884 = vunpack.c.h.b16 %v4569
    %v4885 = vunpack.c.l.b16 %v4570
    %v4886 = vunpack.c.h.b16 %v4570
    %v4887 = vunpack.c.l.b16 %v4571
    %v4888 = vunpack.c.h.b16 %v4571
    %v4889 = vunpack.c.l.b16 %v4572
    %v4890 = vunpack.c.h.b16 %v4572
    %v4891 = vunpack.c.l.b16 %v4573
    %v4892 = vunpack.c.h.b16 %v4573
    %v4893 = vunpack.c.l.b16 %v4574
    %v4894 = vunpack.c.h.b16 %v4574
    %v4895 = vunpack.c.l.b16 %v4575
    %v4896 = vunpack.c.h.b16 %v4575
    %v4897 = vunpack.c.l.b16 %v4576
    %v4898 = vunpack.c.h.b16 %v4576
    %v4899 = vunpack.c.l.b16 %v4577
    %v4900 = vunpack.c.h.b16 %v4577
    %v4901 = vunpack.c.l.b16 %v4578
    %v4902 = vunpack.c.h.b16 %v4578
    %v4903 = vunpack.c.l.b16 %v4579
    %v4904 = vunpack.c.h.b16 %v4579
    %v4905 = vunpack.c.l.b16 %v4580
    %v4906 = vunpack.c.h.b16 %v4580
    %v4907 = vunpack.c.l.b16 %v4581
    %v4908 = vunpack.c.h.b16 %v4581
    %v4909 = vunpack.c.l.b16 %v4582
    %v4910 = vunpack.c.h.b16 %v4582
    %v4911 = vunpack.c.l.b16 %v4583
    %v4912 = vunpack.c.h.b16 %v4583
    %v4913 = vunpack.c.l.b16 %v4584
    %v4914 = vunpack.c.h.b16 %v4584
    %v4915 = vunpack.c.l.b16 %v4585
    %v4916 = vunpack.c.h.b16 %v4585
    %v4917 = vunpack.c.l.b16 %v4586
    %v4918 = vunpack.c.h.b16 %v4586
    %v4919 = vunpack.c.l.b16 %v4587
    %v4920 = vunpack.c.h.b16 %v4587
    %v4921 = vunpack.c.l.b16 %v4588
    %v4922 = vunpack.c.h.b16 %v4588
    %v4923 = vunpack.c.l.b16 %v4589
    %v4924 = vunpack.c.h.b16 %v4589
    %v4925 = vunpack.c.l.b16 %v4590
    %v4926 = vunpack.c.h.b16 %v4590
    %v4927 = vunpack.c.l.b16 %v4591
    %v4928 = vunpack.c.h.b16 %v4591
    %v4929 = vunpack.c.l.b16 %v4592
    %v4930 = vunpack.c.h.b16 %v4592
    %v4931 = vunpack.c.l.b16 %v4593
    %v4932 = vunpack.c.h.b16 %v4593
    %v4933 = vunpack.c.l.b16 %v4594
    %v4934 = vunpack.c.h.b16 %v4594
    %v4935 = vunpack.c.l.b16 %v4595
    %v4936 = vunpack.c.h.b16 %v4595
    %v4937 = vunpack.c.l.b16 %v4596
    %v4938 = vunpack.c.h.b16 %v4596
    %v4939 = vunpack.c.l.b16 %v4597
    %v4940 = vunpack.c.h.b16 %v4597
    %v4941 = vunpack.c.l.b16 %v4598
    %v4942 = vunpack.c.h.b16 %v4598
    %v4943 = vunpack.c.l.b16 %v4599
    %v4944 = vunpack.c.h.b16 %v4599
    %v4945 = vunpack.c.l.b16 %v4600
    %v4946 = vunpack.c.h.b16 %v4600
    %v4947 = vunpack.c.l.b16 %v4601
    %v4948 = vunpack.c.h.b16 %v4601
    %v4949 = vunpack.c.l.b16 %v4602
    %v4950 = vunpack.c.h.b16 %v4602
    %v4951 = vunpack.c.l.b16 %v4603
    %v4952 = vunpack.c.h.b16 %v4603
    %v4953 = vunpack.c.l.b16 %v4604
    %v4954 = vunpack.c.h.b16 %v4604
    %v4955 = vunpack.c.l.b16 %v4605
    %v4956 = vunpack.c.h.b16 %v4605
    %v4957 = vunpack.c.l.b16 %v4606
    %v4958 = vunpack.c.h.b16 %v4606
    %v4959 = vunpack.c.l.b16 %v4607
    %v4960 = vunpack.c.h.b16 %v4607
    %v4961 = vunpack.c.l.b16 %v4608
    %v4962 = vunpack.c.h.b16 %v4608
    %v4963 = vunpack.c.l.b16 %v4609
    %v4964 = vunpack.c.h.b16 %v4609
    %v4965 = vunpack.c.l.b16 %v4610
    %v4966 = vunpack.c.h.b16 %v4610
    %v4967 = vunpack.c.l.b16 %v4611
    %v4968 = vunpack.c.h.b16 %v4611
    %v4969 = vunpack.c.l.b16 %v4612
    %v4970 = vunpack.c.h.b16 %v4612
    %v4971 = vunpack.c.l.b16 %v4613
    %v4972 = vunpack.c.h.b16 %v4613
    %v4973 = vunpack.c.l.b16 %v4614
    %v4974 = vunpack.c.h.b16 %v4614
    %v4975 = vunpack.c.l.b16 %v4615
    %v4976 = vunpack.c.h.b16 %v4615
    %v4977 = vunpack.c.l.b16 %v4616
    %v4978 = vunpack.c.h.b16 %v4616
    %v4979 = vunpack.c.l.b16 %v4617
    %v4980 = vunpack.c.h.b16 %v4617
    %v4981 = vunpack.c.l.b16 %v4618
    %v4982 = vunpack.c.h.b16 %v4618
    %v4983 = vunpack.c.l.b16 %v4619
    %v4984 = vunpack.c.h.b16 %v4619
    %v4985 = vunpack.c.l.b16 %v4620
    %v4986 = vunpack.c.h.b16 %v4620
    %v4987 = vunpack.c.l.b16 %v4621
    %v4988 = vunpack.c.h.b16 %v4621
    %v4989 = vunpack.c.l.b16 %v4622
    %v4990 = vunpack.c.h.b16 %v4622
    %v4991 = vunpack.c.l.b16 %v4623
    %v4992 = vunpack.c.h.b16 %v4623
    %v4993 = vunpack.c.l.b16 %v4624
    %v4994 = vunpack.c.h.b16 %v4624
    %v4995 = vunpack.c.l.b16 %v4625
    %v4996 = vunpack.c.h.b16 %v4625
    %v4997 = vunpack.c.l.b16 %v4626
    %v4998 = vunpack.c.h.b16 %v4626
    %v4999 = vunpack.c.l.b16 %v4627
    %v5000 = vunpack.c.h.b16 %v4627
    %v5001 = vunpack.c.l.b16 %v4628
    %v5002 = vunpack.c.h.b16 %v4628
    %v5003 = vunpack.c.l.b16 %v4629
    %v5004 = vunpack.c.h.b16 %v4629
    %v5005 = vunpack.c.l.b16 %v4630
    %v5006 = vunpack.c.h.b16 %v4630
    %v5007 = vunpack.c.l.b16 %v4631
    %v5008 = vunpack.c.h.b16 %v4631
    %v5009 = vunpack.c.l.b16 %v4632
    %v5010 = vunpack.c.h.b16 %v4632
    %v5011 = vunpack.c.l.b16 %v4633
    %v5012 = vunpack.c.h.b16 %v4633
    %v5013 = vunpack.c.l.b16 %v4634
    %v5014 = vunpack.c.h.b16 %v4634
    %v5015 = vunpack.c.l.b16 %v4635
    %v5016 = vunpack.c.h.b16 %v4635
    %v5017 = vunpack.c.l.b16 %v4636
    %v5018 = vunpack.c.h.b16 %v4636
    %v5019 = vunpack.c.l.b16 %v4637
    %v5020 = vunpack.c.h.b16 %v4637
    %v5021 = vunpack.c.l.b16 %v4638
    %v5022 = vunpack.c.h.b16 %v4638
    %v5023 = vunpack.c.l.b16 %v4639
    %v5024 = vunpack.c.h.b16 %v4639
    %v5025 = vunpack.c.l.b16 %v4640
    %v5026 = vunpack.c.h.b16 %v4640
    %v5027 = vunpack.c.l.b16 %v4641
    %v5028 = vunpack.c.h.b16 %v4641
    %v5029 = vunpack.c.l.b16 %v4642
    %v5030 = vunpack.c.h.b16 %v4642
    %v5031 = vunpack.c.l.b16 %v4643
    %v5032 = vunpack.c.h.b16 %v4643
    %v5033 = vunpack.c.l.b16 %v4644
    %v5034 = vunpack.c.h.b16 %v4644
    %v5035 = vunpack.c.l.b16 %v4645
    %v5036 = vunpack.c.h.b16 %v4645
    %v5037 = vunpack.c.l.b16 %v4646
    %v5038 = vunpack.c.h.b16 %v4646
    %v5039 = vunpack.c.l.b16 %v4647
    %v5040 = vunpack.c.h.b16 %v4647
    %v5041 = vunpack.c.l.b16 %v4648
    %v5042 = vunpack.c.h.b16 %v4648
    %v5043 = vunpack.c.l.b16 %v4649
    %v5044 = vunpack.c.h.b16 %v4649
    %v5045 = vunpack.c.l.b16 %v4650
    %v5046 = vunpack.c.h.b16 %v4650
    %v5047 = vunpack.c.l.b16 %v4651
    %v5048 = vunpack.c.h.b16 %v4651
    %v5049 = vunpack.c.l.b16 %v4652
    %v5050 = vunpack.c.h.b16 %v4652
    %v5051 = vunpack.c.l.b16 %v4653
    %v5052 = vunpack.c.h.b16 %v4653
    %v5053 = vunpack.c.l.b16 %v4654
    %v5054 = vunpack.c.h.b16 %v4654
    %v5055 = vunpack.c.l.b16 %v4655
    %v5056 = vunpack.c.h.b16 %v4655
    %v5057 = vunpack.c.l.b16 %v4656
    %v5058 = vunpack.c.h.b16 %v4656
    %v5059 = vunpack.c.l.b16 %v4657
    %v5060 = vunpack.c.h.b16 %v4657
    %v5061 = vunpack.c.l.b16 %v4658
    %v5062 = vunpack.c.h.b16 %v4658
    %v5063 = vunpack.c.l.b16 %v4659
    %v5064 = vunpack.c.h.b16 %v4659
    %v5065 = vunpack.c.l.b16 %v4660
    %v5066 = vunpack.c.h.b16 %v4660
    %v5067 = vpack.c.b16 %v4815, %v4811
    %v5068 = vpack.c.b16 %v4816, %v4812
    %v5069 = vpack.c.b16 %v4817, %v4813
    %v5070 = vpack.c.b16 %v4818, %v4814
    %v5071 = vpack.c.b16 %v4823, %v4819
    %v5072 = vpack.c.b16 %v4824, %v4820
    %v5073 = vpack.c.b16 %v4825, %v4821
    %v5074 = vpack.c.b16 %v4826, %v4822
    %v5075 = vpack.c.b16 %v4831, %v4827
    %v5076 = vpack.c.b16 %v4832, %v4828
    %v5077 = vpack.c.b16 %v4833, %v4829
    %v5078 = vpack.c.b16 %v4834, %v4830
    %v5079 = vpack.c.b16 %v4839, %v4835
    %v5080 = vpack.c.b16 %v4840, %v4836
    %v5081 = vpack.c.b16 %v4841, %v4837
    %v5082 = vpack.c.b16 %v4842, %v4838
    %v5083 = vpack.c.b16 %v4847, %v4843
    %v5084 = vpack.c.b16 %v4848, %v4844
    %v5085 = vpack.c.b16 %v4849, %v4845
    %v5086 = vpack.c.b16 %v4850, %v4846
    %v5087 = vpack.c.b16 %v4855, %v4851
    %v5088 = vpack.c.b16 %v4856, %v4852
    %v5089 = vpack.c.b16 %v4857, %v4853
    %v5090 = vpack.c.b16 %v4858, %v4854
    %v5091 = vpack.c.b16 %v4863, %v4859
    %v5092 = vpack.c.b16 %v4864, %v4860
    %v5093 = vpack.c.b16 %v4865, %v4861
    %v5094 = vpack.c.b16 %v4866, %v4862
    %v5095 = vpack.c.b16 %v4871, %v4867
    %v5096 = vpack.c.b16 %v4872, %v4868
    %v5097 = vpack.c.b16 %v4873, %v4869
    %v5098 = vpack.c.b16 %v4874, %v4870
    %v5099 = vpack.c.b16 %v4879, %v4875
    %v5100 = vpack.c.b16 %v4880, %v4876
    %v5101 = vpack.c.b16 %v4881, %v4877
    %v5102 = vpack.c.b16 %v4882, %v4878
    %v5103 = vpack.c.b16 %v4887, %v4883
    %v5104 = vpack.c.b16 %v4888, %v4884
    %v5105 = vpack.c.b16 %v4889, %v4885
    %v5106 = vpack.c.b16 %v4890, %v4886
    %v5107 = vpack.c.b16 %v4895, %v4891
    %v5108 = vpack.c.b16 %v4896, %v4892
    %v5109 = vpack.c.b16 %v4897, %v4893
    %v5110 = vpack.c.b16 %v4898, %v4894
    %v5111 = vpack.c.b16 %v4903, %v4899
    %v5112 = vpack.c.b16 %v4904, %v4900
    %v5113 = vpack.c.b16 %v4905, %v4901
    %v5114 = vpack.c.b16 %v4906, %v4902
    %v5115 = vpack.c.b16 %v4911, %v4907
    %v5116 = vpack.c.b16 %v4912, %v4908
    %v5117 = vpack.c.b16 %v4913, %v4909
    %v5118 = vpack.c.b16 %v4914, %v4910
    %v5119 = vpack.c.b16 %v4919, %v4915
    %v5120 = vpack.c.b16 %v4920, %v4916
    %v5121 = vpack.c.b16 %v4921, %v4917
    %v5122 = vpack.c.b16 %v4922, %v4918
    %v5123 = vpack.c.b16 %v4927, %v4923
    %v5124 = vpack.c.b16 %v4928, %v4924
    %v5125 = vpack.c.b16 %v4929, %v4925
    %v5126 = vpack.c.b16 %v4930, %v4926
    %v5127 = vpack.c.b16 %v4935, %v4931
    %v5128 = vpack.c.b16 %v4936, %v4932
    %v5129 = vpack.c.b16 %v4937, %v4933
    %v5130 = vpack.c.b16 %v4938, %v4934
    %v5131 = vpack.c.b16 %v4943, %v4939
    %v5132 = vpack.c.b16 %v4944, %v4940
    %v5133 = vpack.c.b16 %v4945, %v4941
    %v5134 = vpack.c.b16 %v4946, %v4942
    %v5135 = vpack.c.b16 %v4951, %v4947
    %v5136 = vpack.c.b16 %v4952, %v4948
    %v5137 = vpack.c.b16 %v4953, %v4949
    %v5138 = vpack.c.b16 %v4954, %v4950
    %v5139 = vpack.c.b16 %v4959, %v4955
    %v5140 = vpack.c.b16 %v4960, %v4956
    %v5141 = vpack.c.b16 %v4961, %v4957
    %v5142 = vpack.c.b16 %v4962, %v4958
    %v5143 = vpack.c.b16 %v4967, %v4963
    %v5144 = vpack.c.b16 %v4968, %v4964
    %v5145 = vpack.c.b16 %v4969, %v4965
    %v5146 = vpack.c.b16 %v4970, %v4966
    %v5147 = vpack.c.b16 %v4975, %v4971
    %v5148 = vpack.c.b16 %v4976, %v4972
    %v5149 = vpack.c.b16 %v4977, %v4973
    %v5150 = vpack.c.b16 %v4978, %v4974
    %v5151 = vpack.c.b16 %v4983, %v4979
    %v5152 = vpack.c.b16 %v4984, %v4980
    %v5153 = vpack.c.b16 %v4985, %v4981
    %v5154 = vpack.c.b16 %v4986, %v4982
    %v5155 = vpack.c.b16 %v4991, %v4987
    %v5156 = vpack.c.b16 %v4992, %v4988
    %v5157 = vpack.c.b16 %v4993, %v4989
    %v5158 = vpack.c.b16 %v4994, %v4990
    %v5159 = vpack.c.b16 %v4999, %v4995
    %v5160 = vpack.c.b16 %v5000, %v4996
    %v5161 = vpack.c.b16 %v5001, %v4997
    %v5162 = vpack.c.b16 %v5002, %v4998
    %v5163 = vpack.c.b16 %v5007, %v5003
    %v5164 = vpack.c.b16 %v5008, %v5004
    %v5165 = vpack.c.b16 %v5009, %v5005
    %v5166 = vpack.c.b16 %v5010, %v5006
    %v5167 = vpack.c.b16 %v5015, %v5011
    %v5168 = vpack.c.b16 %v5016, %v5012
    %v5169 = vpack.c.b16 %v5017, %v5013
    %v5170 = vpack.c.b16 %v5018, %v5014
    %v5171 = vpack.c.b16 %v5023, %v5019
    %v5172 = vpack.c.b16 %v5024, %v5020
    %v5173 = vpack.c.b16 %v5025, %v5021
    %v5174 = vpack.c.b16 %v5026, %v5022
    %v5175 = vpack.c.b16 %v5031, %v5027
    %v5176 = vpack.c.b16 %v5032, %v5028
    %v5177 = vpack.c.b16 %v5033, %v5029
    %v5178 = vpack.c.b16 %v5034, %v5030
    %v5179 = vpack.c.b16 %v5039, %v5035
    %v5180 = vpack.c.b16 %v5040, %v5036
    %v5181 = vpack.c.b16 %v5041, %v5037
    %v5182 = vpack.c.b16 %v5042, %v5038
    %v5183 = vpack.c.b16 %v5047, %v5043
    %v5184 = vpack.c.b16 %v5048, %v5044
    %v5185 = vpack.c.b16 %v5049, %v5045
    %v5186 = vpack.c.b16 %v5050, %v5046
    %v5187 = vpack.c.b16 %v5055, %v5051
    %v5188 = vpack.c.b16 %v5056, %v5052
    %v5189 = vpack.c.b16 %v5057, %v5053
    %v5190 = vpack.c.b16 %v5058, %v5054
    %v5191 = vpack.c.b16 %v5063, %v5059
    %v5192 = vpack.c.b16 %v5064, %v5060
    %v5193 = vpack.c.b16 %v5065, %v5061
    %v5194 = vpack.c.b16 %v5066, %v5062
    %5323 = vmatprep.subr.bf16.mxu0 %v5096
    %5324 = vmatpush1.bf16.msra.mxu0 %v5095
    %5325 = vmatprep.subr.bf16.mxu0 %v5092
    %5326 = vmatpush1.bf16.msra.mxu0 %v5091
    %5327 = vmatprep.subr.bf16.mxu0 %v5088
    %5328 = vmatpush1.bf16.msra.mxu0 %v5087
    %5329 = vmatprep.subr.bf16.mxu0 %v5084
    %5330 = vmatpush1.bf16.msra.mxu0 %v5083
    %5331 = vmatprep.subr.bf16.mxu0 %v5080
    %5332 = vmatpush1.bf16.msra.mxu0 %v5079
    %5333 = vmatprep.subr.bf16.mxu0 %v5076
    %5334 = vmatpush1.bf16.msra.mxu0 %v5075
    %5335 = vmatprep.subr.bf16.mxu0 %v5072
    %5336 = vmatpush1.bf16.msra.mxu0 %v5071
    %5337 = vmatprep.subr.bf16.mxu0 %v5068
    %5338 = vmatpush1.bf16.msra.mxu0 %v5067
    %5339 = vmatprep.subr.bf16.mxu0 %v5128
    %5340 = vmatpush2.bf16.msra.mxu0 %v5127
    %5341 = vmatprep.subr.bf16.mxu0 %v5124
    %5342 = vmatpush2.bf16.msra.mxu0 %v5123
    %5343 = vmatprep.subr.bf16.mxu0 %v5120
    %5344 = vmatpush2.bf16.msra.mxu0 %v5119
    %5345 = vmatprep.subr.bf16.mxu0 %v5116
    %5346 = vmatpush2.bf16.msra.mxu0 %v5115
    %5347 = vmatprep.subr.bf16.mxu0 %v5112
    %5348 = vmatpush2.bf16.msra.mxu0 %v5111
    %5349 = vmatprep.subr.bf16.mxu0 %v5108
    %5350 = vmatpush2.bf16.msra.mxu0 %v5107
    %5351 = vmatprep.subr.bf16.mxu0 %v5104
    %5352 = vmatpush2.bf16.msra.mxu0 %v5103
    %5353 = vmatprep.subr.bf16.mxu0 %v5100
    %5354 = vmatpush2.bf16.msra.mxu0 %v5099
    %5355 = vmatprep.mubr.bf16.mxu0 %v4530
    %5356 = vmatmul.mubr.bf16.gmra.mxu0 %v4529
    %v5357 = vpop.f32.mrf.mxu0
    %v5358 = vadd.f32 %v4666, %v5357
    %v5359 = vpop.f32.mrf.mxu0
    %v5360 = vadd.f32 %v4670, %v5359
    %v5361 = vpop.f32.mrf.mxu0
    %v5362 = vpop.f32.mrf.mxu0
    %5363 = vdwg.mxu0
    %5364 = vmatprep.subr.bf16.mxu0 %v5160
    %5365 = vmatpush1.bf16.msra.mxu0 %v5159
    %5366 = vmatprep.subr.bf16.mxu0 %v5156
    %5367 = vmatpush1.bf16.msra.mxu0 %v5155
    %5368 = vmatprep.subr.bf16.mxu0 %v5152
    %5369 = vmatpush1.bf16.msra.mxu0 %v5151
    %5370 = vmatprep.subr.bf16.mxu0 %v5148
    %5371 = vmatpush1.bf16.msra.mxu0 %v5147
    %5372 = vmatprep.subr.bf16.mxu0 %v5144
    %5373 = vmatpush1.bf16.msra.mxu0 %v5143
    %5374 = vmatprep.subr.bf16.mxu0 %v5140
    %5375 = vmatpush1.bf16.msra.mxu0 %v5139
    %5376 = vmatprep.subr.bf16.mxu0 %v5136
    %5377 = vmatpush1.bf16.msra.mxu0 %v5135
    %5378 = vmatprep.subr.bf16.mxu0 %v5132
    %5379 = vmatpush1.bf16.msra.mxu0 %v5131
    %5380 = vmatprep.subr.bf16.mxu0 %v5192
    %5381 = vmatpush2.bf16.msra.mxu0 %v5191
    %5382 = vmatprep.subr.bf16.mxu0 %v5188
    %5383 = vmatpush2.bf16.msra.mxu0 %v5187
    %5384 = vmatprep.subr.bf16.mxu0 %v5184
    %5385 = vmatpush2.bf16.msra.mxu0 %v5183
    %5386 = vmatprep.subr.bf16.mxu0 %v5180
    %5387 = vmatpush2.bf16.msra.mxu0 %v5179
    %5388 = vmatprep.subr.bf16.mxu0 %v5176
    %5389 = vmatpush2.bf16.msra.mxu0 %v5175
    %5390 = vmatprep.subr.bf16.mxu0 %v5172
    %5391 = vmatpush2.bf16.msra.mxu0 %v5171
    %5392 = vmatprep.subr.bf16.mxu0 %v5168
    %5393 = vmatpush2.bf16.msra.mxu0 %v5167
    %5394 = vmatprep.subr.bf16.mxu0 %v5164
    %5395 = vmatpush2.bf16.msra.mxu0 %v5163
    %5396 = vmatprep.mubr.bf16.mxu0 %v4532
    %5397 = vmatmul.mubr.bf16.gmra.mxu0 %v4531
    %v5398 = vpop.f32.mrf.mxu0
    %v5399 = vadd.f32 %v5358, %v5398
    %v5400 = vpop.f32.mrf.mxu0
    %v5401 = vadd.f32 %v5360, %v5400
    %v5402 = vpop.f32.mrf.mxu0
    %v5403 = vpop.f32.mrf.mxu0
    %5404 = vdwg.mxu0
    %5405 = vmatprep.subr.bf16.mxu0 %v5098
    %5406 = vmatpush1.bf16.msra.mxu0 %v5097
    %5407 = vmatprep.subr.bf16.mxu0 %v5094
    %5408 = vmatpush1.bf16.msra.mxu0 %v5093
    %5409 = vmatprep.subr.bf16.mxu0 %v5090
    %5410 = vmatpush1.bf16.msra.mxu0 %v5089
    %5411 = vmatprep.subr.bf16.mxu0 %v5086
    %5412 = vmatpush1.bf16.msra.mxu0 %v5085
    %5413 = vmatprep.subr.bf16.mxu0 %v5082
    %5414 = vmatpush1.bf16.msra.mxu0 %v5081
    %5415 = vmatprep.subr.bf16.mxu0 %v5078
    %5416 = vmatpush1.bf16.msra.mxu0 %v5077
    %5417 = vmatprep.subr.bf16.mxu0 %v5074
    %5418 = vmatpush1.bf16.msra.mxu0 %v5073
    %5419 = vmatprep.subr.bf16.mxu0 %v5070
    %5420 = vmatpush1.bf16.msra.mxu0 %v5069
    %5421 = vmatprep.subr.bf16.mxu0 %v5130
    %5422 = vmatpush2.bf16.msra.mxu0 %v5129
    %5423 = vmatprep.subr.bf16.mxu0 %v5126
    %5424 = vmatpush2.bf16.msra.mxu0 %v5125
    %5425 = vmatprep.subr.bf16.mxu0 %v5122
    %5426 = vmatpush2.bf16.msra.mxu0 %v5121
    %5427 = vmatprep.subr.bf16.mxu0 %v5118
    %5428 = vmatpush2.bf16.msra.mxu0 %v5117
    %5429 = vmatprep.subr.bf16.mxu0 %v5114
    %5430 = vmatpush2.bf16.msra.mxu0 %v5113
    %5431 = vmatprep.subr.bf16.mxu0 %v5110
    %5432 = vmatpush2.bf16.msra.mxu0 %v5109
    %5433 = vmatprep.subr.bf16.mxu0 %v5106
    %5434 = vmatpush2.bf16.msra.mxu0 %v5105
    %5435 = vmatprep.subr.bf16.mxu0 %v5102
    %5436 = vmatpush2.bf16.msra.mxu0 %v5101
    %5437 = vmatprep.mubr.bf16.mxu0 %v4530
    %5438 = vmatmul.mubr.bf16.gmra.mxu0 %v4529
    %v5439 = vpop.f32.mrf.mxu0
    %v5440 = vadd.f32 %v4674, %v5439
    %v5441 = vpop.f32.mrf.mxu0
    %v5442 = vadd.f32 %v4678, %v5441
    %v5443 = vpop.f32.mrf.mxu0
    %v5444 = vpop.f32.mrf.mxu0
    %5445 = vdwg.mxu0
    %5446 = vmatprep.subr.bf16.mxu0 %v5162
    %5447 = vmatpush1.bf16.msra.mxu0 %v5161
    %5448 = vmatprep.subr.bf16.mxu0 %v5158
    %5449 = vmatpush1.bf16.msra.mxu0 %v5157
    %5450 = vmatprep.subr.bf16.mxu0 %v5154
    %5451 = vmatpush1.bf16.msra.mxu0 %v5153
    %5452 = vmatprep.subr.bf16.mxu0 %v5150
    %5453 = vmatpush1.bf16.msra.mxu0 %v5149
    %5454 = vmatprep.subr.bf16.mxu0 %v5146
    %5455 = vmatpush1.bf16.msra.mxu0 %v5145
    %5456 = vmatprep.subr.bf16.mxu0 %v5142
    %5457 = vmatpush1.bf16.msra.mxu0 %v5141
    %5458 = vmatprep.subr.bf16.mxu0 %v5138
    %5459 = vmatpush1.bf16.msra.mxu0 %v5137
    %5460 = vmatprep.subr.bf16.mxu0 %v5134
    %5461 = vmatpush1.bf16.msra.mxu0 %v5133
    %5462 = vmatprep.subr.bf16.mxu0 %v5194
    %5463 = vmatpush2.bf16.msra.mxu0 %v5193
    %5464 = vmatprep.subr.bf16.mxu0 %v5190
    %5465 = vmatpush2.bf16.msra.mxu0 %v5189
    %5466 = vmatprep.subr.bf16.mxu0 %v5186
    %5467 = vmatpush2.bf16.msra.mxu0 %v5185
    %5468 = vmatprep.subr.bf16.mxu0 %v5182
    %5469 = vmatpush2.bf16.msra.mxu0 %v5181
    %5470 = vmatprep.subr.bf16.mxu0 %v5178
    %5471 = vmatpush2.bf16.msra.mxu0 %v5177
    %5472 = vmatprep.subr.bf16.mxu0 %v5174
    %5473 = vmatpush2.bf16.msra.mxu0 %v5173
    %5474 = vmatprep.subr.bf16.mxu0 %v5170
    %5475 = vmatpush2.bf16.msra.mxu0 %v5169
    %5476 = vmatprep.subr.bf16.mxu0 %v5166
    %5477 = vmatpush2.bf16.msra.mxu0 %v5165
    %5478 = vmatprep.mubr.bf16.mxu0 %v4532
    %5479 = vmatmul.mubr.bf16.gmra.mxu0 %v4531
    %v5480 = vpop.f32.mrf.mxu0
    %v5481 = vadd.f32 %v5440, %v5480
    %v5482 = vpop.f32.mrf.mxu0
    %v5483 = vadd.f32 %v5442, %v5482
    %v5484 = vpop.f32.mrf.mxu0
    %v5485 = vpop.f32.mrf.mxu0
    %5486 = vdwg.mxu0
    %v5487 = vmax.f32 %v5399, 0.0
    %v5488 = vmax.f32 %v5401, 0.0
    %v5489 = vmax.f32 %v5481, 0.0
    %v5490 = vmax.f32 %v5483, 0.0
    %v5491 = vpack.c.bf16 %v5487, %v5487
    %v5492 = vpack.c.bf16 %v5488, %v5488
    %v5493 = vpack.c.bf16 %v5489, %v5489
    %v5494 = vpack.c.bf16 %v5490, %v5490
    %v5495 = vld [vmem:[%s7] sm:$0xf]
    %v5496 = vld [vmem:[%s7 + $0x4] sm:$0xf]
    %v5497 = vld [vmem:[%s7 + $0x8] sm:$0xf]
    %v5498 = vld [vmem:[%s7 + $0xc] sm:$0xf]
    %v5499 = vld [vmem:[%s7 + $0x10] sm:$0xf]
    %v5500 = vld [vmem:[%s7 + $0x14] sm:$0xf]
    %v5501 = vld [vmem:[%s7 + $0x18] sm:$0xf]
    %v5502 = vld [vmem:[%s7 + $0x1c] sm:$0xf]
    %v5503 = vld [vmem:[%s7 + $0x20] sm:$0xf]
    %v5504 = vld [vmem:[%s7 + $0x24] sm:$0xf]
    %v5505 = vld [vmem:[%s7 + $0x28] sm:$0xf]
    %v5506 = vld [vmem:[%s7 + $0x2c] sm:$0xf]
    %v5507 = vld [vmem:[%s7 + $0x30] sm:$0xf]
    %v5508 = vld [vmem:[%s7 + $0x34] sm:$0xf]
    %v5509 = vld [vmem:[%s7 + $0x38] sm:$0xf]
    %v5510 = vld [vmem:[%s7 + $0x3c] sm:$0xf]
    %v5511 = vld [vmem:[%s7 + $0x40] sm:$0xf]
    %v5512 = vld [vmem:[%s7 + $0x44] sm:$0xf]
    %v5513 = vld [vmem:[%s7 + $0x48] sm:$0xf]
    %v5514 = vld [vmem:[%s7 + $0x4c] sm:$0xf]
    %v5515 = vld [vmem:[%s7 + $0x50] sm:$0xf]
    %v5516 = vld [vmem:[%s7 + $0x54] sm:$0xf]
    %v5517 = vld [vmem:[%s7 + $0x58] sm:$0xf]
    %v5518 = vld [vmem:[%s7 + $0x5c] sm:$0xf]
    %v5519 = vld [vmem:[%s7 + $0x60] sm:$0xf]
    %v5520 = vld [vmem:[%s7 + $0x64] sm:$0xf]
    %v5521 = vld [vmem:[%s7 + $0x68] sm:$0xf]
    %v5522 = vld [vmem:[%s7 + $0x6c] sm:$0xf]
    %v5523 = vld [vmem:[%s7 + $0x70] sm:$0xf]
    %v5524 = vld [vmem:[%s7 + $0x74] sm:$0xf]
    %v5525 = vld [vmem:[%s7 + $0x78] sm:$0xf]
    %v5526 = vld [vmem:[%s7 + $0x7c] sm:$0xf]
    %v5527 = vld [vmem:[%s7 + $0x80] sm:$0xf]
    %v5528 = vld [vmem:[%s7 + $0x84] sm:$0xf]
    %v5529 = vld [vmem:[%s7 + $0x88] sm:$0xf]
    %v5530 = vld [vmem:[%s7 + $0x8c] sm:$0xf]
    %v5531 = vld [vmem:[%s7 + $0x90] sm:$0xf]
    %v5532 = vld [vmem:[%s7 + $0x94] sm:$0xf]
    %v5533 = vld [vmem:[%s7 + $0x98] sm:$0xf]
    %v5534 = vld [vmem:[%s7 + $0x9c] sm:$0xf]
    %v5535 = vld [vmem:[%s7 + $0xa0] sm:$0xf]
    %v5536 = vld [vmem:[%s7 + $0xa4] sm:$0xf]
    %v5537 = vld [vmem:[%s7 + $0xa8] sm:$0xf]
    %v5538 = vld [vmem:[%s7 + $0xac] sm:$0xf]
    %v5539 = vld [vmem:[%s7 + $0xb0] sm:$0xf]
    %v5540 = vld [vmem:[%s7 + $0xb4] sm:$0xf]
    %v5541 = vld [vmem:[%s7 + $0xb8] sm:$0xf]
    %v5542 = vld [vmem:[%s7 + $0xbc] sm:$0xf]
    %v5543 = vld [vmem:[%s7 + $0xc0] sm:$0xf]
    %v5544 = vld [vmem:[%s7 + $0xc4] sm:$0xf]
    %v5545 = vld [vmem:[%s7 + $0xc8] sm:$0xf]
    %v5546 = vld [vmem:[%s7 + $0xcc] sm:$0xf]
    %v5547 = vld [vmem:[%s7 + $0xd0] sm:$0xf]
    %v5548 = vld [vmem:[%s7 + $0xd4] sm:$0xf]
    %v5549 = vld [vmem:[%s7 + $0xd8] sm:$0xf]
    %v5550 = vld [vmem:[%s7 + $0xdc] sm:$0xf]
    %v5551 = vld [vmem:[%s7 + $0xe0] sm:$0xf]
    %v5552 = vld [vmem:[%s7 + $0xe4] sm:$0xf]
    %v5553 = vld [vmem:[%s7 + $0xe8] sm:$0xf]
    %v5554 = vld [vmem:[%s7 + $0xec] sm:$0xf]
    %v5555 = vld [vmem:[%s7 + $0xf0] sm:$0xf]
    %v5556 = vld [vmem:[%s7 + $0xf4] sm:$0xf]
    %v5557 = vld [vmem:[%s7 + $0xf8] sm:$0xf]
    %v5558 = vld [vmem:[%s7 + $0xfc] sm:$0xf]
    %v5559 = vld [vmem:[#allocation14] sm:$0x1]
    %v5561 = vlaneseq
    %v5562 = vshrl.u32 %v5561, 7
    %v5563 = vsub.s32 0, %v5562
    %v5564 = vrot.slane %v5559, %v5563
    %v5630 = vunpack.c.l.b16 %v5495
    %v5631 = vunpack.c.l.b16 %v5496
    %v5632 = vunpack.c.l.b16 %v5497
    %v5633 = vunpack.c.l.b16 %v5498
    %v5634 = vunpack.c.l.b16 %v5499
    %v5635 = vunpack.c.l.b16 %v5500
    %v5636 = vunpack.c.l.b16 %v5501
    %v5637 = vunpack.c.l.b16 %v5502
    %v5638 = vunpack.c.l.b16 %v5503
    %v5639 = vunpack.c.l.b16 %v5504
    %v5640 = vunpack.c.l.b16 %v5505
    %v5641 = vunpack.c.l.b16 %v5506
    %v5642 = vunpack.c.l.b16 %v5507
    %v5643 = vunpack.c.l.b16 %v5508
    %v5644 = vunpack.c.l.b16 %v5509
    %v5645 = vunpack.c.l.b16 %v5510
    %v5646 = vunpack.c.l.b16 %v5511
    %v5647 = vunpack.c.l.b16 %v5512
    %v5648 = vunpack.c.l.b16 %v5513
    %v5649 = vunpack.c.l.b16 %v5514
    %v5650 = vunpack.c.l.b16 %v5515
    %v5651 = vunpack.c.l.b16 %v5516
    %v5652 = vunpack.c.l.b16 %v5517
    %v5653 = vunpack.c.l.b16 %v5518
    %v5654 = vunpack.c.l.b16 %v5519
    %v5655 = vunpack.c.l.b16 %v5520
    %v5656 = vunpack.c.l.b16 %v5521
    %v5657 = vunpack.c.l.b16 %v5522
    %v5658 = vunpack.c.l.b16 %v5523
    %v5659 = vunpack.c.l.b16 %v5524
    %v5660 = vunpack.c.l.b16 %v5525
    %v5661 = vunpack.c.l.b16 %v5526
    %v5662 = vunpack.c.l.b16 %v5527
    %v5663 = vunpack.c.l.b16 %v5528
    %v5664 = vunpack.c.l.b16 %v5529
    %v5665 = vunpack.c.l.b16 %v5530
    %v5666 = vunpack.c.l.b16 %v5531
    %v5667 = vunpack.c.l.b16 %v5532
    %v5668 = vunpack.c.l.b16 %v5533
    %v5669 = vunpack.c.l.b16 %v5534
    %v5670 = vunpack.c.l.b16 %v5535
    %v5671 = vunpack.c.l.b16 %v5536
    %v5672 = vunpack.c.l.b16 %v5537
    %v5673 = vunpack.c.l.b16 %v5538
    %v5674 = vunpack.c.l.b16 %v5539
    %v5675 = vunpack.c.l.b16 %v5540
    %v5676 = vunpack.c.l.b16 %v5541
    %v5677 = vunpack.c.l.b16 %v5542
    %v5678 = vunpack.c.l.b16 %v5543
    %v5679 = vunpack.c.l.b16 %v5544
    %v5680 = vunpack.c.l.b16 %v5545
    %v5681 = vunpack.c.l.b16 %v5546
    %v5682 = vunpack.c.l.b16 %v5547
    %v5683 = vunpack.c.l.b16 %v5548
    %v5684 = vunpack.c.l.b16 %v5549
    %v5685 = vunpack.c.l.b16 %v5550
    %v5686 = vunpack.c.l.b16 %v5551
    %v5687 = vunpack.c.l.b16 %v5552
    %v5688 = vunpack.c.l.b16 %v5553
    %v5689 = vunpack.c.l.b16 %v5554
    %v5690 = vunpack.c.l.b16 %v5555
    %v5691 = vunpack.c.l.b16 %v5556
    %v5692 = vunpack.c.l.b16 %v5557
    %v5693 = vunpack.c.l.b16 %v5558
    %v5694 = vpack.c.b16 %v5631, %v5630
    %v5695 = vpack.c.b16 %v5633, %v5632
    %v5696 = vpack.c.b16 %v5635, %v5634
    %v5697 = vpack.c.b16 %v5637, %v5636
    %v5698 = vpack.c.b16 %v5639, %v5638
    %v5699 = vpack.c.b16 %v5641, %v5640
    %v5700 = vpack.c.b16 %v5643, %v5642
    %v5701 = vpack.c.b16 %v5645, %v5644
    %v5702 = vpack.c.b16 %v5647, %v5646
    %v5703 = vpack.c.b16 %v5649, %v5648
    %v5704 = vpack.c.b16 %v5651, %v5650
    %v5705 = vpack.c.b16 %v5653, %v5652
    %v5706 = vpack.c.b16 %v5655, %v5654
    %v5707 = vpack.c.b16 %v5657, %v5656
    %v5708 = vpack.c.b16 %v5659, %v5658
    %v5709 = vpack.c.b16 %v5661, %v5660
    %v5710 = vpack.c.b16 %v5663, %v5662
    %v5711 = vpack.c.b16 %v5665, %v5664
    %v5712 = vpack.c.b16 %v5667, %v5666
    %v5713 = vpack.c.b16 %v5669, %v5668
    %v5714 = vpack.c.b16 %v5671, %v5670
    %v5715 = vpack.c.b16 %v5673, %v5672
    %v5716 = vpack.c.b16 %v5675, %v5674
    %v5717 = vpack.c.b16 %v5677, %v5676
    %v5718 = vpack.c.b16 %v5679, %v5678
    %v5719 = vpack.c.b16 %v5681, %v5680
    %v5720 = vpack.c.b16 %v5683, %v5682
    %v5721 = vpack.c.b16 %v5685, %v5684
    %v5722 = vpack.c.b16 %v5687, %v5686
    %v5723 = vpack.c.b16 %v5689, %v5688
    %v5724 = vpack.c.b16 %v5691, %v5690
    %v5725 = vpack.c.b16 %v5693, %v5692
    %5758 = vmatprep.subr.bf16.mxu0 0
    %5759 = vmatpush1.bf16.msra.mxu0 %v5701
    %5760 = vmatprep.subr.bf16.mxu0 0
    %5761 = vmatpush1.bf16.msra.mxu0 %v5700
    %5762 = vmatprep.subr.bf16.mxu0 0
    %5763 = vmatpush1.bf16.msra.mxu0 %v5699
    %5764 = vmatprep.subr.bf16.mxu0 0
    %5765 = vmatpush1.bf16.msra.mxu0 %v5698
    %5766 = vmatprep.subr.bf16.mxu0 0
    %5767 = vmatpush1.bf16.msra.mxu0 %v5697
    %5768 = vmatprep.subr.bf16.mxu0 0
    %5769 = vmatpush1.bf16.msra.mxu0 %v5696
    %5770 = vmatprep.subr.bf16.mxu0 0
    %5771 = vmatpush1.bf16.msra.mxu0 %v5695
    %5772 = vmatprep.subr.bf16.mxu0 0
    %5773 = vmatpush1.bf16.msra.mxu0 %v5694
    %5774 = vmatprep.subr.bf16.mxu0 0
    %5775 = vmatpush2.bf16.msra.mxu0 %v5709
    %5776 = vmatprep.subr.bf16.mxu0 0
    %5777 = vmatpush2.bf16.msra.mxu0 %v5708
    %5778 = vmatprep.subr.bf16.mxu0 0
    %5779 = vmatpush2.bf16.msra.mxu0 %v5707
    %5780 = vmatprep.subr.bf16.mxu0 0
    %5781 = vmatpush2.bf16.msra.mxu0 %v5706
    %5782 = vmatprep.subr.bf16.mxu0 0
    %5783 = vmatpush2.bf16.msra.mxu0 %v5705
    %5784 = vmatprep.subr.bf16.mxu0 0
    %5785 = vmatpush2.bf16.msra.mxu0 %v5704
    %5786 = vmatprep.subr.bf16.mxu0 0
    %5787 = vmatpush2.bf16.msra.mxu0 %v5703
    %5788 = vmatprep.subr.bf16.mxu0 0
    %5789 = vmatpush2.bf16.msra.mxu0 %v5702
    %5790 = vmatprep.mubr.bf16.mxu0 %v5492
    %5791 = vmatmul.mubr.bf16.gmra.mxu0 %v5491
    %v5792 = vpop.f32.mrf.mxu0
    %v5793 = vadd.f32 %v5564, %v5792
    %v5794 = vpop.f32.mrf.mxu0
    %v5795 = vpop.f32.mrf.mxu0
    %v5796 = vpop.f32.mrf.mxu0
    %5797 = vdwg.mxu0
    %5798 = vmatprep.subr.bf16.mxu0 0
    %5799 = vmatpush1.bf16.msra.mxu0 %v5717
    %5800 = vmatprep.subr.bf16.mxu0 0
    %5801 = vmatpush1.bf16.msra.mxu0 %v5716
    %5802 = vmatprep.subr.bf16.mxu0 0
    %5803 = vmatpush1.bf16.msra.mxu0 %v5715
    %5804 = vmatprep.subr.bf16.mxu0 0
    %5805 = vmatpush1.bf16.msra.mxu0 %v5714
    %5806 = vmatprep.subr.bf16.mxu0 0
    %5807 = vmatpush1.bf16.msra.mxu0 %v5713
    %5808 = vmatprep.subr.bf16.mxu0 0
    %5809 = vmatpush1.bf16.msra.mxu0 %v5712
    %5810 = vmatprep.subr.bf16.mxu0 0
    %5811 = vmatpush1.bf16.msra.mxu0 %v5711
    %5812 = vmatprep.subr.bf16.mxu0 0
    %5813 = vmatpush1.bf16.msra.mxu0 %v5710
    %5814 = vmatprep.subr.bf16.mxu0 0
    %5815 = vmatpush2.bf16.msra.mxu0 %v5725
    %5816 = vmatprep.subr.bf16.mxu0 0
    %5817 = vmatpush2.bf16.msra.mxu0 %v5724
    %5818 = vmatprep.subr.bf16.mxu0 0
    %5819 = vmatpush2.bf16.msra.mxu0 %v5723
    %5820 = vmatprep.subr.bf16.mxu0 0
    %5821 = vmatpush2.bf16.msra.mxu0 %v5722
    %5822 = vmatprep.subr.bf16.mxu0 0
    %5823 = vmatpush2.bf16.msra.mxu0 %v5721
    %5824 = vmatprep.subr.bf16.mxu0 0
    %5825 = vmatpush2.bf16.msra.mxu0 %v5720
    %5826 = vmatprep.subr.bf16.mxu0 0
    %5827 = vmatpush2.bf16.msra.mxu0 %v5719
    %5828 = vmatprep.subr.bf16.mxu0 0
    %5829 = vmatpush2.bf16.msra.mxu0 %v5718
    %5830 = vmatprep.mubr.bf16.mxu0 %v5494
    %5831 = vmatmul.mubr.bf16.gmra.mxu0 %v5493
    %v5832 = vpop.f32.mrf.mxu0
    %v5833 = vadd.f32 %v5793, %v5832
    %v5834 = vpop.f32.mrf.mxu0
    %v5835 = vpop.f32.mrf.mxu0
    %v5836 = vpop.f32.mrf.mxu0
    %5837 = vdwg.mxu0
    %vm5838 = vcmask 130048
    %5839 = vst.msk [vmem:[#allocation16] sm:$0xff] %vm5838, %v5833
    // Predicated region
    $region70: #{tpu_custom_call.1} parent=1 // pred_check
      _
    $region71: #{tpu_custom_call.1} parent=1 // pred_check_branch
      %5841 = sbr.rel (0) target = $region73
    $region72: #{tpu_custom_call.1} parent=1 // pred_region
      %s5843 = ssub.s32 128, 128
      %5844 = vsyncadd [#allocation4], %s5843
      %s5846 = sshll.u32 [#allocation16], 4
      %s5847 = int_to_ptr.vmem [resolvable:$true] %s5846
      %5849 = dma.vmem_to_hbm [thread:$0]  %s5847, 128, %s9, [#allocation4]
    $region73: #{tpu_custom_call.1} parent=1 // pred_fallthru
      _
    // Predicated region
    $region74: #{tpu_custom_call.1} parent=1 // pred_check
      _
    $region75: #{tpu_custom_call.1} parent=1 // pred_check_branch
      %5851 = sbr.rel (0) target = $region77
    $region76: #{tpu_custom_call.1} parent=1 // pred_region
      %5852 = dma.done [#allocation4], 128
    $region77: #{tpu_custom_call.1} parent=1 // pred_fallthru
      _
    %5853 = vsyncpa [#allocation3], 1
    %5854 = vsyncpa [#allocation6], 1
    %5855 = vsyncpa [#allocation9], 1
    %5856 = vsyncpa [#allocation12], 1
    %5857 = vsyncpa [#allocation15], 1
    %5858 = vsyncpa [#allocation4], 1

</llo_original>
